<compile_context>
chip_gen: v7x
topology: tpu7x:2x2x1
jax: 0.10.0
libtpu: 0.0.40
codegen_flags: <defaults>
</compile_context>

<pallas_src>
import jax
import jax.numpy as jnp
from jax.experimental import pallas as pl
from jax.experimental.pallas import tpu as pltpu

PATCH = 16        # ViT-L/16 patch size
IN_CH = 3         # RGB
HIDDEN = 1024     # ViT-L hidden dim

_VMEM_LIMIT_BYTES = 48 * 1024 * 1024   # explicit scoped-VMEM limit (safe on 64 MiB v7x)
_VMEM_TILE_BUDGET = 28 * 1024 * 1024   # target for the double-buffered x/out tiles


def _largest_divisor_leq(n, cap):
    cap = max(1, min(n, cap))
    for d in range(cap, 0, -1):
        if n % d == 0:
            return d
    return 1


def _pick_tiles(B, K, N, P, x_itemsize, out_itemsize):
    """Choose (TB, TP) so double-buffered blocks fit the VMEM budget on all gens."""
    # P tile: full P when small; otherwise a multiple-of-128 divisor (BlockSpec
    # (8,128) rule requires the last block dim to be 128-divisible or full).
    if P <= 2048:
        tp = P
    else:
        tp = P  # fallback: full extent (still legal, just bigger tiles)
        for cand in range(2048, 127, -128):
            if P % cand == 0:
                tp = cand
                break
    # TB: images per grid step, bounded by the double-buffered tile budget.
    per_image = 2 * tp * (K * x_itemsize + N * out_itemsize)   # x2: double buffering
    tb_cap = max(1, _VMEM_TILE_BUDGET // per_image)
    tb_cap = min(tb_cap, 8)
    if B >= 2:
        # Keep >= 2 programs on the parallel axis so both v7x TensorCores get work.
        tb_cap = min(tb_cap, B // 2) if B // 2 >= 1 else tb_cap
        tb_cap = max(1, tb_cap)
    tb = _largest_divisor_leq(B, tb_cap)
    return tb, tp


def _patch_embed_kernel(x_ref, w_ref, b_ref, o_ref):
    # x_ref: (TB, K, TP) bf16  patch matrices for TB images
    # w_ref: (N, K)      bf16  resident flattened conv weight
    # b_ref: (N, 1)      f32   resident bias (lane-padded; ~0.5 MB, acceptable)
    # o_ref: (TB, N, TP)       channel-major output block
    w = w_ref[...]
    b = b_ref[...]
    for t in range(x_ref.shape[0]):          # TB is small & static -> unrolled dots
        acc = jnp.dot(w, x_ref[t], preferred_element_type=jnp.float32)   # (N, TP) f32
        o_ref[t] = (acc + b).astype(o_ref.dtype)


def patch_embed_t(x_t, w, bias, *, out_dtype=jnp.float32):
    """x_t: (B, K, P) bf16, w: (N, K) bf16, bias: (N, 1) f32 -> (B, N, P) out_dtype."""
    B, K, P = x_t.shape
    N, K2 = w.shape
    assert K == K2, (K, K2)
    # bf16 sublane tiling wants multiples of 16; blocks cover full K/N so this is
    # a guard for any future K/N tiling (review correctness note).
    assert K % 16 == 0 and N % 16 == 0, (K, N)

    out_itemsize = jnp.dtype(out_dtype).itemsize
    tb, tp = _pick_tiles(B, K, N, P, x_itemsize=2, out_itemsize=out_itemsize)
    assert B % tb == 0 and P % tp == 0, (B, tb, P, tp)

    cost = pl.CostEstimate(
        flops=2 * B * N * K * P,
        transcendentals=0,
        bytes_accessed=(x_t.size * 2) + (w.size * 2) + (bias.size * 4)
        + (B * N * P * out_itemsize),
    )

    return pl.pallas_call(
        _patch_embed_kernel,
        out_shape=jax.ShapeDtypeStruct((B, N, P), out_dtype),
        grid_spec=pltpu.PrefetchScalarGridSpec(
            num_scalar_prefetch=0,
            grid=(B // tb, P // tp),
            in_specs=[
                pl.BlockSpec((tb, K, tp), lambda b, p: (b, 0, p)),   # patches (TB imgs)
                pl.BlockSpec((N, K), lambda b, p: (0, 0)),           # weight (resident)
                pl.BlockSpec((N, 1), lambda b, p: (0, 0)),           # bias   (resident)
            ],
            out_specs=pl.BlockSpec((tb, N, tp), lambda b, p: (b, 0, p)),
        ),
        compiler_params=pltpu.CompilerParams(
            dimension_semantics=("parallel", "parallel"),
            vmem_limit_bytes=_VMEM_LIMIT_BYTES,
        ),
        cost_estimate=cost,
    )(x_t, w, bias)


def vit_l16_encoder_forward(v, conv_w, conv_b, *, out_dtype=jnp.float32):
    """v: (B, 3, H, W) NCHW f32.  conv_w: (N, 3, 16, 16).  conv_b: (N,).
    Returns (B, 1, N * (H//16) * (W//16)), matching the PyTorch module."""
    B, C, H, W = v.shape
    assert H % PATCH == 0 and W % PATCH == 0, (
        f"spatial dims must be multiples of {PATCH}, got {(H, W)}")
    N = conv_w.shape[0]
    Hp, Wp = H // PATCH, W // PATCH
    P = Hp * Wp
    K = C * PATCH * PATCH

    # NCHW -> (B, K, P): feature order (c, kh, kw) matches the flattened conv
    # weight (out, in, kh, kw); patch order (hp, wp) matches conv output spatial.
    # The bf16 cast is fused into this XLA transpose (4B read + 2B write / elem).
    # See TODO(synk) at top of file about fusing this relayout into the kernel.
    x = v.reshape(B, C, Hp, PATCH, Wp, PATCH)
    x = x.transpose(0, 1, 3, 5, 2, 4).reshape(B, K, P).astype(jnp.bfloat16)

    w = conv_w.reshape(N, K).astype(jnp.bfloat16)          # (N, K)
    bias = conv_b.reshape(N, 1).astype(jnp.float32)        # (N, 1)

    out = patch_embed_t(x, w, bias, out_dtype=out_dtype)   # (B, N, P) channel-major

    # Already (B, N, Hp*Wp): flatten is a free reshape, then unsqueeze(1).
    return out.reshape(B, N * P)[:, None, :]


if __name__ == "__main__":
    key = jax.random.PRNGKey(0)
    k_x, k_w, k_b = jax.random.split(key, 3)

    # SMALL spatial size (32x32 -> 2x2 patches); channel/patch/hidden dims are
    # the real ViT-L/16 ones implied by the module (Conv2d(3, 1024, 16, 16)).
    B, H, W = 2, 32, 32
    v = jax.random.normal(k_x, (B, IN_CH, H, W), dtype=jnp.float32)

    # Deterministic synthetic parameters (no checkpoint load).
    conv_w = jax.random.normal(k_w, (HIDDEN, IN_CH, PATCH, PATCH),
                               dtype=jnp.float32) * 0.02
    conv_b = jax.random.normal(k_b, (HIDDEN,), dtype=jnp.float32) * 0.02

    fwd = jax.jit(vit_l16_encoder_forward)
    out = fwd(v, conv_w, conv_b)
    out = jax.block_until_ready(out)

    # Pure-JAX f32 reference (strided conv == patch matmul).  Kernel runs its
    # matmul with bf16 inputs / f32 accumulation, so tolerances are loosened.
    ref_conv = jax.lax.conv_general_dilated(
        v, conv_w, window_strides=(PATCH, PATCH), padding="VALID",
        dimension_numbers=("NCHW", "OIHW", "NCHW"),
        precision=jax.lax.Precision.HIGHEST) + conv_b[None, :, None, None]
    ref = ref_conv.reshape(B, -1)[:, None, :]

    assert out.shape == (B, 1, HIDDEN * (H // PATCH) * (W // PATCH)), out.shape
    assert jnp.allclose(out, ref, atol=2e-2, rtol=2e-2), "mismatch vs reference"
    print("KERNEL_OK")
</pallas_src>

<mosaic_0001>
module attributes {stable_mosaic.version = 11 : i64} {
  func.func @_patch_embed_kernel(%arg0: i32, %arg1: i32, %arg2: memref<1x768x4xbf16, #tpu.memory_space<vmem>>, %arg3: memref<1024x768xbf16, #tpu.memory_space<vmem>>, %arg4: memref<1024x1xf32, #tpu.memory_space<vmem>>, %arg5: memref<1x1024x4xf32, #tpu.memory_space<vmem>>) attributes {dimension_semantics = [#tpu.dimension_semantics<parallel>, #tpu.dimension_semantics<parallel>], iteration_bounds = array<i64: 2, 1>, scalar_prefetch = 0 : i64, scratch_operands = 0 : i64, tpu.core_type = #tpu.core_type<tc>, window_params = [{transform_indices = @transform_0, window_bounds = array<i64: 1, 768, 4>}, {pipeline_mode = #tpu.pipeline_mode<synchronous>, transform_indices = @transform_1, window_bounds = array<i64: 1024, 768>}, {pipeline_mode = #tpu.pipeline_mode<synchronous>, transform_indices = @transform_2, window_bounds = array<i64: 1024, 1>}, {transform_indices = @transform_3, window_bounds = array<i64: 1, 1024, 4>}]} {
    %c0 = arith.constant 0 : index
    %c0_0 = arith.constant 0 : index
    %0 = vector.load %arg3[%c0, %c0_0] : memref<1024x768xbf16, #tpu.memory_space<vmem>>, vector<1024x768xbf16>
    %c0_1 = arith.constant 0 : index
    %c0_2 = arith.constant 0 : index
    %1 = vector.load %arg4[%c0_1, %c0_2] : memref<1024x1xf32, #tpu.memory_space<vmem>>, vector<1024x1xf32>
    %c0_3 = arith.constant 0 : index
    %c0_4 = arith.constant 0 : index
    %c0_5 = arith.constant 0 : index
    %2 = vector.load %arg2[%c0_3, %c0_4, %c0_5] : memref<1x768x4xbf16, #tpu.memory_space<vmem>>, vector<1x768x4xbf16>
    %3 = vector.shape_cast %2 : vector<1x768x4xbf16> to vector<768x4xbf16>
    %cst = arith.constant dense<0.000000e+00> : vector<1024x4xf32>
    %4 = tpu.matmul %0, %3, %cst {dimension_numbers = #tpu.dot_dimension_numbers<[1], [0], [0], [1], [0, 0, 1, 1], [], []>} : vector<1024x768xbf16>, vector<768x4xbf16>, vector<1024x4xf32> -> vector<1024x4xf32>
    %5 = vector.broadcast %1 : vector<1024x1xf32> to vector<1024x4xf32>
    %6 = arith.addf %4, %5 : vector<1024x4xf32>
    %c0_6 = arith.constant 0 : index
    %c0_7 = arith.constant 0 : index
    %c0_8 = arith.constant 0 : index
    %7 = vector.load %arg5[%c0_6, %c0_7, %c0_8] : memref<1x1024x4xf32, #tpu.memory_space<vmem>>, vector<1x1024x4xf32>
    %8 = vector.shape_cast %7 : vector<1x1024x4xf32> to vector<1024x4xf32>
    %9 = vector.shape_cast %6 : vector<1024x4xf32> to vector<1x1024x4xf32>
    tpu.vector_store %arg5[%c0_6, %c0_7, %c0_8], %9 {strides = array<i32>} : memref<1x1024x4xf32, #tpu.memory_space<vmem>>, vector<1x1024x4xf32>,
    return
  }
  func.func @transform_0(%arg0: i32, %arg1: i32) -> (i32, i32, i32) {
    %c0_i32 = arith.constant 0 : i32
    %c0_i32_0 = arith.constant 0 : i32
    return %arg0, %c0_i32, %arg1 : i32, i32, i32
  }
  func.func @transform_1(%arg0: i32, %arg1: i32) -> (i32, i32) {
    %c0_i32 = arith.constant 0 : i32
    %c0_i32_0 = arith.constant 0 : i32
    %c0_i32_1 = arith.constant 0 : i32
    return %c0_i32, %c0_i32_0 : i32, i32
  }
  func.func @transform_2(%arg0: i32, %arg1: i32) -> (i32, i32) {
    %c0_i32 = arith.constant 0 : i32
    %c0_i32_0 = arith.constant 0 : i32
    %c0_i32_1 = arith.constant 0 : i32
    return %c0_i32, %c0_i32_0 : i32, i32
  }
  func.func @transform_3(%arg0: i32, %arg1: i32) -> (i32, i32, i32) {
    %c0_i32 = arith.constant 0 : i32
    %c0_i32_0 = arith.constant 0 : i32
    return %arg0, %c0_i32, %arg1 : i32, i32, i32
  }
}

</mosaic_0001>

<llo_original>
// kernel: vit_l16_encoder_forward.1
$region0: #{vit_l16_encoder_forward.1}
  #allocation0 [shape = 'u32[]', space=smem, size = 0x4, offset = 0x4, fixed_abs, tag = 'smem constant byte address 0x4 - core index']
  #allocation1 [shape = 'u32[144,128]{1,0:T(1,128)}', space=vmem, size = 0x12000, scoped, tag = 'internal scratch']
  %s0 = inlined_call_operand.vmem [shape: bf16[2,768,4], index: 0, kind: input, shape index: {}]
  %s1 = inlined_call_operand.vmem [shape: bf16[1024,768], index: 1, kind: input, shape index: {}]
  %s2 = inlined_call_operand.vmem [shape: f32[1024,1], index: 2, kind: input, shape index: {}]
  %s3 = inlined_call_operand.vmem [shape: f32[2,1024,4], index: 3, kind: output, shape index: {}]
  %s4 = sld [smem:[#allocation0]]
  $region45: #{vit_l16_encoder_forward.1} parent=0
    _
  %s6 = ssub.s32 1, %s4
  %s7 = scalar_select 0, %s6, %s4
  loop: start=0, step=1, limit=4
  $region2: #{vit_l16_encoder_forward.1} parent=0 // loop_pre_header
    _
  $region3: #{vit_l16_encoder_forward.1} parent=0 // loop_header
    %s9 = sphi 0, %s13
    %p10 = scmp.ge.s32.totalorder %s9, 4
    %s16 = sphi 0, %s28
    %s17 = sphi 0, %s24
    %s18 = sphi 0, %s16
    %s19 = sphi 0, %s17
    %s20 = sphi 0, %s18
    %s21 = sphi 0, %s19
    %s33 = sphi 0, %s35
    %s36 = sphi 0, %s33
    %s37 = sphi 0, %s36
    %s53 = sphi 0, %s37
    %s57 = sphi 0, %s57
    %s59 = sphi 0, %s57
    %s60 = sphi 0, %s59
    %s74 = sphi 0, %s60
    %s78 = sphi 0, %s78
    %s80 = sphi 0, %s78
    %s81 = sphi 0, %s80
    %s95 = sphi 0, %s81
    %s103 = sphi 0, %s105
    %s106 = sphi 0, %s103
    %s107 = sphi 0, %s106
    %s123 = sphi 0, %s107
  $region4: #{vit_l16_encoder_forward.1} parent=0 // loop_header_branch
    %12 = sbr.rel (%p10) target = $region8
  $region5: #{vit_l16_encoder_forward.1} parent=0 // loop_body
    %s14 = ssub.s32 %s9, 1
    %s15 = ssub.s32 %s9, 2
    %s22 = sadd.s32 1, %s17
    %p23 = scmp.ge.s32.totalorder %s22, 1
    %s24 = scalar_select %p23, 0, %s22
    %s25 = sadd.s32 1, %s16
    %s26 = scalar_select %p23, %s25, %s16
    %p27 = scmp.ge.s32.totalorder %s26, 2
    %s28 = scalar_select %p27, 0, %s26
    %s29 = ssub.s32 %s16, %s28
    %s30 = ssub.s32 %s17, %s24
    %s31 = sor.u32 %s29, %s30
    %p32 = scmp.eq.s32.totalorder %s31, 0
    %s34 = sadd.s32 %s33, 1
    %s35 = scalar_select %p32, %s33, %s34
    %p38 = pneg %p32
    %p39 = scmp.eq.s32.totalorder %s9, 1
    %p40 = por %p38, %p39
    %p41 = scmp.ne.s32.totalorder %s33, %s36
    %p42 = scmp.eq.s32.totalorder %s9, 0
    %p43 = por %p41, %p42
    %p44 = scmp.ne.s32.totalorder %s33, %s36
    %p45 = scmp.eq.s32.totalorder %s14, 1
    %p46 = por %p44, %p45
    %p47 = scmp.ne.s32.totalorder %s36, %s37
    %p48 = scmp.eq.s32.totalorder %s14, 0
    %p49 = por %p47, %p48
    %p50 = scmp.ne.s32.totalorder %s36, %s37
    %p51 = scmp.eq.s32.totalorder %s15, 1
    %p52 = por %p50, %p51
    %p54 = scmp.ne.s32.totalorder %s37, %s53
    %p55 = scmp.eq.s32.totalorder %s15, 0
    %p56 = por %p54, %p55
    %s58 = sadd.s32 %s57, 1
    %p61 = scmp.eq.s32.totalorder %s9, 1
    %p62 = scmp.ne.s32.totalorder %s57, %s59
    %p63 = scmp.eq.s32.totalorder %s9, 0
    %p64 = por %p62, %p63
    %p65 = scmp.ne.s32.totalorder %s57, %s59
    %p66 = scmp.eq.s32.totalorder %s14, 1
    %p67 = por %p65, %p66
    %p68 = scmp.ne.s32.totalorder %s59, %s60
    %p69 = scmp.eq.s32.totalorder %s14, 0
    %p70 = por %p68, %p69
    %p71 = scmp.ne.s32.totalorder %s59, %s60
    %p72 = scmp.eq.s32.totalorder %s15, 1
    %p73 = por %p71, %p72
    %p75 = scmp.ne.s32.totalorder %s60, %s74
    %p76 = scmp.eq.s32.totalorder %s15, 0
    %p77 = por %p75, %p76
    %s79 = sadd.s32 %s78, 1
    %p82 = scmp.eq.s32.totalorder %s9, 1
    %p83 = scmp.ne.s32.totalorder %s78, %s80
    %p84 = scmp.eq.s32.totalorder %s9, 0
    %p85 = por %p83, %p84
    %p86 = scmp.ne.s32.totalorder %s78, %s80
    %p87 = scmp.eq.s32.totalorder %s14, 1
    %p88 = por %p86, %p87
    %p89 = scmp.ne.s32.totalorder %s80, %s81
    %p90 = scmp.eq.s32.totalorder %s14, 0
    %p91 = por %p89, %p90
    %p92 = scmp.ne.s32.totalorder %s80, %s81
    %p93 = scmp.eq.s32.totalorder %s15, 1
    %p94 = por %p92, %p93
    %p96 = scmp.ne.s32.totalorder %s81, %s95
    %p97 = scmp.eq.s32.totalorder %s15, 0
    %p98 = por %p96, %p97
    %s99 = ssub.s32 %s16, %s28
    %s100 = ssub.s32 %s17, %s24
    %s101 = sor.u32 %s99, %s100
    %p102 = scmp.eq.s32.totalorder %s101, 0
    %s104 = sadd.s32 %s103, 1
    %s105 = scalar_select %p102, %s103, %s104
    %p108 = pneg %p102
    %p109 = scmp.eq.s32.totalorder %s9, 1
    %p110 = por %p108, %p109
    %p111 = scmp.ne.s32.totalorder %s103, %s106
    %p112 = scmp.eq.s32.totalorder %s9, 0
    %p113 = por %p111, %p112
    %p114 = scmp.ne.s32.totalorder %s103, %s106
    %p115 = scmp.eq.s32.totalorder %s14, 1
    %p116 = por %p114, %p115
    %p117 = scmp.ne.s32.totalorder %s106, %s107
    %p118 = scmp.eq.s32.totalorder %s14, 0
    %p119 = por %p117, %p118
    %p120 = scmp.ne.s32.totalorder %s106, %s107
    %p121 = scmp.eq.s32.totalorder %s15, 1
    %p122 = por %p120, %p121
    %p124 = scmp.ne.s32.totalorder %s107, %s123
    %p125 = scmp.eq.s32.totalorder %s15, 0
    %p126 = por %p124, %p125
    %p127 = scmp.le.s32.totalorder 1, %s9
    %p128 = scmp.lt.s32.totalorder %s9, 3
    %p129 = pnand %p127, %p128
    %p130 = pneg %p129
    // Predicated region
    $region9: #{vit_l16_encoder_forward.1} parent=5 // pred_check
      _
    $region10: #{vit_l16_encoder_forward.1} parent=5 // pred_check_branch
      %132 = sbr.rel (%p129) target = $region12
    $region11: #{vit_l16_encoder_forward.1} parent=5 // pred_region
      %s133 = ssub.s32 %s9, 1
      // Predicated region
      $region13: #{vit_l16_encoder_forward.1} parent=11 // pred_check
        %p134 = pneg %p70
      $region14: #{vit_l16_encoder_forward.1} parent=11 // pred_check_branch
        %136 = sbr.rel (%p134) target = $region16
      $region15: #{vit_l16_encoder_forward.1} parent=11 // pred_region
        _
      $region16: #{vit_l16_encoder_forward.1} parent=11 // pred_fallthru
        _
      // Predicated region
      $region17: #{vit_l16_encoder_forward.1} parent=11 // pred_check
        %p137 = pneg %p91
      $region18: #{vit_l16_encoder_forward.1} parent=11 // pred_check_branch
        %139 = sbr.rel (%p137) target = $region20
      $region19: #{vit_l16_encoder_forward.1} parent=11 // pred_region
        _
      $region20: #{vit_l16_encoder_forward.1} parent=11 // pred_fallthru
        _
    $region12: #{vit_l16_encoder_forward.1} parent=5 // pred_fallthru
      _
    %p140 = scmp.lt.s32.totalorder %s9, 2
    // Predicated region
    $region21: #{vit_l16_encoder_forward.1} parent=5 // pred_check
      %p141 = pneg %p140
    $region22: #{vit_l16_encoder_forward.1} parent=5 // pred_check_branch
      %143 = sbr.rel (%p141) target = $region24
    $region23: #{vit_l16_encoder_forward.1} parent=5 // pred_region
      // Predicated region
      $region25: #{vit_l16_encoder_forward.1} parent=23 // pred_check
        %p144 = pneg %p43
      $region26: #{vit_l16_encoder_forward.1} parent=23 // pred_check_branch
        %146 = sbr.rel (%p144) target = $region28
      $region27: #{vit_l16_encoder_forward.1} parent=23 // pred_region
        %p147 = scmp.lt.s32.totalorder %s16, 1
        %s148 = scalar_select %p147, %s16, 1
        %p149 = scmp.lt.s32.totalorder %s17, 0
        %s150 = scalar_select %p149, %s17, 0
        %s151 = smul.addr %s148, 96
        %s152 = sadd.s32 %s150, %s151
        %s153 = smul.addr %s152, 4
        %s154 = scalar_lea.vmem %s0, %s153
      $region28: #{vit_l16_encoder_forward.1} parent=23 // pred_fallthru
        _
    $region24: #{vit_l16_encoder_forward.1} parent=5 // pred_fallthru
      _
    %p155 = scmp.le.s32.totalorder 1, %s9
    %p156 = scmp.lt.s32.totalorder %s9, 3
    %p157 = pnand %p155, %p156
    %p158 = pneg %p157
    // Predicated region
    $region29: #{vit_l16_encoder_forward.1} parent=5 // pred_check
      _
    $region30: #{vit_l16_encoder_forward.1} parent=5 // pred_check_branch
      %160 = sbr.rel (%p157) target = $region32
    $region31: #{vit_l16_encoder_forward.1} parent=5 // pred_region
      %s161 = ssub.s32 %s9, 1
      %p162 = scmp.lt.s32.totalorder %s18, 1
      %s163 = scalar_select %p162, %s18, 1
      %p164 = scmp.lt.s32.totalorder %s19, 0
      %s165 = scalar_select %p164, %s19, 0
      %s166 = smul.addr %s163, 96
      %s167 = sadd.s32 %s165, %s166
      %s168 = smul.addr %s167, 4
      %s169 = scalar_lea.vmem %s0, %s168
      %p170 = pneg %p49
      %p171 = pneg %p46
      %p172 = pneg %p70
      %p173 = pneg %p67
      %p174 = pneg %p91
      %p175 = pneg %p88
      %p176 = pneg %p119
      %p177 = pneg %p116
      %p178 = scmp.lt.s32.totalorder %s18, 1
      %s179 = scalar_select %p178, %s18, 1
      %p180 = scmp.lt.s32.totalorder %s19, 0
      %s181 = scalar_select %p180, %s19, 0
      %s182 = smul.addr %s179, 128
      %s183 = sadd.s32 %s181, %s182
      %s184 = smul.addr %s183, 8
      %s185 = scalar_lea.vmem %s3, %s184
      %p186 = scmp.lt.s32.totalorder %s18, 1
      %s187 = scalar_select %p186, %s18, 1
      %p188 = scmp.lt.s32.totalorder %s19, 0
      %s189 = scalar_select %p188, %s19, 0
      %s190 = smul.addr %s187, 96
      %s191 = sadd.s32 %s189, %s190
      %s192 = smul.addr %s191, 4
      %s193 = scalar_lea.vmem %s0, %s192
      %p194 = scmp.lt.s32.totalorder %s18, 1
      %s195 = scalar_select %p194, %s18, 1
      %p196 = scmp.lt.s32.totalorder %s19, 0
      %s197 = scalar_select %p196, %s19, 0
      %s198 = smul.addr %s195, 128
      %s199 = sadd.s32 %s197, %s198
      %s200 = smul.addr %s199, 8
      %s201 = scalar_lea.vmem %s3, %s200
      %v203 = vld [vmem:[%s1] sm:$0xff]
      %v204 = vld [vmem:[%s1 + $0x8] sm:$0xff]
      %v205 = vld [vmem:[%s1 + $0x10] sm:$0xff]
      %v206 = vld [vmem:[%s1 + $0x18] sm:$0xff]
      %v207 = vld [vmem:[%s1 + $0x20] sm:$0xff]
      %v208 = vld [vmem:[%s1 + $0x28] sm:$0xff]
      %v209 = vld [vmem:[%s1 + $0x30] sm:$0xff]
      %v210 = vld [vmem:[%s1 + $0x38] sm:$0xff]
      %v211 = vld [vmem:[%s1 + $0x40] sm:$0xff]
      %v212 = vld [vmem:[%s1 + $0x48] sm:$0xff]
      %v213 = vld [vmem:[%s1 + $0x50] sm:$0xff]
      %v214 = vld [vmem:[%s1 + $0x58] sm:$0xff]
      %v215 = vld [vmem:[%s1 + $0x60] sm:$0xff]
      %v216 = vld [vmem:[%s1 + $0x68] sm:$0xff]
      %v217 = vld [vmem:[%s1 + $0x70] sm:$0xff]
      %v218 = vld [vmem:[%s1 + $0x78] sm:$0xff]
      %v219 = vld [vmem:[%s1 + $0x80] sm:$0xff]
      %v220 = vld [vmem:[%s1 + $0x88] sm:$0xff]
      %v221 = vld [vmem:[%s1 + $0x90] sm:$0xff]
      %v222 = vld [vmem:[%s1 + $0x98] sm:$0xff]
      %v223 = vld [vmem:[%s1 + $0xa0] sm:$0xff]
      %v224 = vld [vmem:[%s1 + $0xa8] sm:$0xff]
      %v225 = vld [vmem:[%s1 + $0xb0] sm:$0xff]
      %v226 = vld [vmem:[%s1 + $0xb8] sm:$0xff]
      %v227 = vld [vmem:[%s1 + $0xc0] sm:$0xff]
      %v228 = vld [vmem:[%s1 + $0xc8] sm:$0xff]
      %v229 = vld [vmem:[%s1 + $0xd0] sm:$0xff]
      %v230 = vld [vmem:[%s1 + $0xd8] sm:$0xff]
      %v231 = vld [vmem:[%s1 + $0xe0] sm:$0xff]
      %v232 = vld [vmem:[%s1 + $0xe8] sm:$0xff]
      %v233 = vld [vmem:[%s1 + $0xf0] sm:$0xff]
      %v234 = vld [vmem:[%s1 + $0xf8] sm:$0xff]
      %v235 = vld [vmem:[%s1 + $0x100] sm:$0xff]
      %v236 = vld [vmem:[%s1 + $0x108] sm:$0xff]
      %v237 = vld [vmem:[%s1 + $0x110] sm:$0xff]
      %v238 = vld [vmem:[%s1 + $0x118] sm:$0xff]
      %v239 = vld [vmem:[%s1 + $0x120] sm:$0xff]
      %v240 = vld [vmem:[%s1 + $0x128] sm:$0xff]
      %v241 = vld [vmem:[%s1 + $0x130] sm:$0xff]
      %v242 = vld [vmem:[%s1 + $0x138] sm:$0xff]
      %v243 = vld [vmem:[%s1 + $0x140] sm:$0xff]
      %v244 = vld [vmem:[%s1 + $0x148] sm:$0xff]
      %v245 = vld [vmem:[%s1 + $0x150] sm:$0xff]
      %v246 = vld [vmem:[%s1 + $0x158] sm:$0xff]
      %v247 = vld [vmem:[%s1 + $0x160] sm:$0xff]
      %v248 = vld [vmem:[%s1 + $0x168] sm:$0xff]
      %v249 = vld [vmem:[%s1 + $0x170] sm:$0xff]
      %v250 = vld [vmem:[%s1 + $0x178] sm:$0xff]
      %v251 = vld [vmem:[%s1 + $0x180] sm:$0xff]
      %v252 = vld [vmem:[%s1 + $0x188] sm:$0xff]
      %v253 = vld [vmem:[%s1 + $0x190] sm:$0xff]
      %v254 = vld [vmem:[%s1 + $0x198] sm:$0xff]
      %v255 = vld [vmem:[%s1 + $0x1a0] sm:$0xff]
      %v256 = vld [vmem:[%s1 + $0x1a8] sm:$0xff]
      %v257 = vld [vmem:[%s1 + $0x1b0] sm:$0xff]
      %v258 = vld [vmem:[%s1 + $0x1b8] sm:$0xff]
      %v259 = vld [vmem:[%s1 + $0x1c0] sm:$0xff]
      %v260 = vld [vmem:[%s1 + $0x1c8] sm:$0xff]
      %v261 = vld [vmem:[%s1 + $0x1d0] sm:$0xff]
      %v262 = vld [vmem:[%s1 + $0x1d8] sm:$0xff]
      %v263 = vld [vmem:[%s1 + $0x1e0] sm:$0xff]
      %v264 = vld [vmem:[%s1 + $0x1e8] sm:$0xff]
      %v265 = vld [vmem:[%s1 + $0x1f0] sm:$0xff]
      %v266 = vld [vmem:[%s1 + $0x1f8] sm:$0xff]
      %v267 = vld [vmem:[%s1 + $0x200] sm:$0xff]
      %v268 = vld [vmem:[%s1 + $0x208] sm:$0xff]
      %v269 = vld [vmem:[%s1 + $0x210] sm:$0xff]
      %v270 = vld [vmem:[%s1 + $0x218] sm:$0xff]
      %v271 = vld [vmem:[%s1 + $0x220] sm:$0xff]
      %v272 = vld [vmem:[%s1 + $0x228] sm:$0xff]
      %v273 = vld [vmem:[%s1 + $0x230] sm:$0xff]
      %v274 = vld [vmem:[%s1 + $0x238] sm:$0xff]
      %v275 = vld [vmem:[%s1 + $0x240] sm:$0xff]
      %v276 = vld [vmem:[%s1 + $0x248] sm:$0xff]
      %v277 = vld [vmem:[%s1 + $0x250] sm:$0xff]
      %v278 = vld [vmem:[%s1 + $0x258] sm:$0xff]
      %v279 = vld [vmem:[%s1 + $0x260] sm:$0xff]
      %v280 = vld [vmem:[%s1 + $0x268] sm:$0xff]
      %v281 = vld [vmem:[%s1 + $0x270] sm:$0xff]
      %v282 = vld [vmem:[%s1 + $0x278] sm:$0xff]
      %v283 = vld [vmem:[%s1 + $0x280] sm:$0xff]
      %v284 = vld [vmem:[%s1 + $0x288] sm:$0xff]
      %v285 = vld [vmem:[%s1 + $0x290] sm:$0xff]
      %v286 = vld [vmem:[%s1 + $0x298] sm:$0xff]
      %v287 = vld [vmem:[%s1 + $0x2a0] sm:$0xff]
      %v288 = vld [vmem:[%s1 + $0x2a8] sm:$0xff]
      %v289 = vld [vmem:[%s1 + $0x2b0] sm:$0xff]
      %v290 = vld [vmem:[%s1 + $0x2b8] sm:$0xff]
      %v291 = vld [vmem:[%s1 + $0x2c0] sm:$0xff]
      %v292 = vld [vmem:[%s1 + $0x2c8] sm:$0xff]
      %v293 = vld [vmem:[%s1 + $0x2d0] sm:$0xff]
      %v294 = vld [vmem:[%s1 + $0x2d8] sm:$0xff]
      %v295 = vld [vmem:[%s1 + $0x2e0] sm:$0xff]
      %v296 = vld [vmem:[%s1 + $0x2e8] sm:$0xff]
      %v297 = vld [vmem:[%s1 + $0x2f0] sm:$0xff]
      %v298 = vld [vmem:[%s1 + $0x2f8] sm:$0xff]
      %v299 = vld [vmem:[%s1 + $0x300] sm:$0xff]
      %v300 = vld [vmem:[%s1 + $0x308] sm:$0xff]
      %v301 = vld [vmem:[%s1 + $0x310] sm:$0xff]
      %v302 = vld [vmem:[%s1 + $0x318] sm:$0xff]
      %v303 = vld [vmem:[%s1 + $0x320] sm:$0xff]
      %v304 = vld [vmem:[%s1 + $0x328] sm:$0xff]
      %v305 = vld [vmem:[%s1 + $0x330] sm:$0xff]
      %v306 = vld [vmem:[%s1 + $0x338] sm:$0xff]
      %v307 = vld [vmem:[%s1 + $0x340] sm:$0xff]
      %v308 = vld [vmem:[%s1 + $0x348] sm:$0xff]
      %v309 = vld [vmem:[%s1 + $0x350] sm:$0xff]
      %v310 = vld [vmem:[%s1 + $0x358] sm:$0xff]
      %v311 = vld [vmem:[%s1 + $0x360] sm:$0xff]
      %v312 = vld [vmem:[%s1 + $0x368] sm:$0xff]
      %v313 = vld [vmem:[%s1 + $0x370] sm:$0xff]
      %v314 = vld [vmem:[%s1 + $0x378] sm:$0xff]
      %v315 = vld [vmem:[%s1 + $0x380] sm:$0xff]
      %v316 = vld [vmem:[%s1 + $0x388] sm:$0xff]
      %v317 = vld [vmem:[%s1 + $0x390] sm:$0xff]
      %v318 = vld [vmem:[%s1 + $0x398] sm:$0xff]
      %v319 = vld [vmem:[%s1 + $0x3a0] sm:$0xff]
      %v320 = vld [vmem:[%s1 + $0x3a8] sm:$0xff]
      %v321 = vld [vmem:[%s1 + $0x3b0] sm:$0xff]
      %v322 = vld [vmem:[%s1 + $0x3b8] sm:$0xff]
      %v323 = vld [vmem:[%s1 + $0x3c0] sm:$0xff]
      %v324 = vld [vmem:[%s1 + $0x3c8] sm:$0xff]
      %v325 = vld [vmem:[%s1 + $0x3d0] sm:$0xff]
      %v326 = vld [vmem:[%s1 + $0x3d8] sm:$0xff]
      %v327 = vld [vmem:[%s1 + $0x3e0] sm:$0xff]
      %v328 = vld [vmem:[%s1 + $0x3e8] sm:$0xff]
      %v329 = vld [vmem:[%s1 + $0x3f0] sm:$0xff]
      %v330 = vld [vmem:[%s1 + $0x3f8] sm:$0xff]
      %v331 = vld [vmem:[%s1 + $0x400] sm:$0xff]
      %v332 = vld [vmem:[%s1 + $0x408] sm:$0xff]
      %v333 = vld [vmem:[%s1 + $0x410] sm:$0xff]
      %v334 = vld [vmem:[%s1 + $0x418] sm:$0xff]
      %v335 = vld [vmem:[%s1 + $0x420] sm:$0xff]
      %v336 = vld [vmem:[%s1 + $0x428] sm:$0xff]
      %v337 = vld [vmem:[%s1 + $0x430] sm:$0xff]
      %v338 = vld [vmem:[%s1 + $0x438] sm:$0xff]
      %v339 = vld [vmem:[%s1 + $0x440] sm:$0xff]
      %v340 = vld [vmem:[%s1 + $0x448] sm:$0xff]
      %v341 = vld [vmem:[%s1 + $0x450] sm:$0xff]
      %v342 = vld [vmem:[%s1 + $0x458] sm:$0xff]
      %v343 = vld [vmem:[%s1 + $0x460] sm:$0xff]
      %v344 = vld [vmem:[%s1 + $0x468] sm:$0xff]
      %v345 = vld [vmem:[%s1 + $0x470] sm:$0xff]
      %v346 = vld [vmem:[%s1 + $0x478] sm:$0xff]
      %v347 = vld [vmem:[%s1 + $0x480] sm:$0xff]
      %v348 = vld [vmem:[%s1 + $0x488] sm:$0xff]
      %v349 = vld [vmem:[%s1 + $0x490] sm:$0xff]
      %v350 = vld [vmem:[%s1 + $0x498] sm:$0xff]
      %v351 = vld [vmem:[%s1 + $0x4a0] sm:$0xff]
      %v352 = vld [vmem:[%s1 + $0x4a8] sm:$0xff]
      %v353 = vld [vmem:[%s1 + $0x4b0] sm:$0xff]
      %v354 = vld [vmem:[%s1 + $0x4b8] sm:$0xff]
      %v355 = vld [vmem:[%s1 + $0x4c0] sm:$0xff]
      %v356 = vld [vmem:[%s1 + $0x4c8] sm:$0xff]
      %v357 = vld [vmem:[%s1 + $0x4d0] sm:$0xff]
      %v358 = vld [vmem:[%s1 + $0x4d8] sm:$0xff]
      %v359 = vld [vmem:[%s1 + $0x4e0] sm:$0xff]
      %v360 = vld [vmem:[%s1 + $0x4e8] sm:$0xff]
      %v361 = vld [vmem:[%s1 + $0x4f0] sm:$0xff]
      %v362 = vld [vmem:[%s1 + $0x4f8] sm:$0xff]
      %v363 = vld [vmem:[%s1 + $0x500] sm:$0xff]
      %v364 = vld [vmem:[%s1 + $0x508] sm:$0xff]
      %v365 = vld [vmem:[%s1 + $0x510] sm:$0xff]
      %v366 = vld [vmem:[%s1 + $0x518] sm:$0xff]
      %v367 = vld [vmem:[%s1 + $0x520] sm:$0xff]
      %v368 = vld [vmem:[%s1 + $0x528] sm:$0xff]
      %v369 = vld [vmem:[%s1 + $0x530] sm:$0xff]
      %v370 = vld [vmem:[%s1 + $0x538] sm:$0xff]
      %v371 = vld [vmem:[%s1 + $0x540] sm:$0xff]
      %v372 = vld [vmem:[%s1 + $0x548] sm:$0xff]
      %v373 = vld [vmem:[%s1 + $0x550] sm:$0xff]
      %v374 = vld [vmem:[%s1 + $0x558] sm:$0xff]
      %v375 = vld [vmem:[%s1 + $0x560] sm:$0xff]
      %v376 = vld [vmem:[%s1 + $0x568] sm:$0xff]
      %v377 = vld [vmem:[%s1 + $0x570] sm:$0xff]
      %v378 = vld [vmem:[%s1 + $0x578] sm:$0xff]
      %v379 = vld [vmem:[%s1 + $0x580] sm:$0xff]
      %v380 = vld [vmem:[%s1 + $0x588] sm:$0xff]
      %v381 = vld [vmem:[%s1 + $0x590] sm:$0xff]
      %v382 = vld [vmem:[%s1 + $0x598] sm:$0xff]
      %v383 = vld [vmem:[%s1 + $0x5a0] sm:$0xff]
      %v384 = vld [vmem:[%s1 + $0x5a8] sm:$0xff]
      %v385 = vld [vmem:[%s1 + $0x5b0] sm:$0xff]
      %v386 = vld [vmem:[%s1 + $0x5b8] sm:$0xff]
      %v387 = vld [vmem:[%s1 + $0x5c0] sm:$0xff]
      %v388 = vld [vmem:[%s1 + $0x5c8] sm:$0xff]
      %v389 = vld [vmem:[%s1 + $0x5d0] sm:$0xff]
      %v390 = vld [vmem:[%s1 + $0x5d8] sm:$0xff]
      %v391 = vld [vmem:[%s1 + $0x5e0] sm:$0xff]
      %v392 = vld [vmem:[%s1 + $0x5e8] sm:$0xff]
      %v393 = vld [vmem:[%s1 + $0x5f0] sm:$0xff]
      %v394 = vld [vmem:[%s1 + $0x5f8] sm:$0xff]
      %v395 = vld [vmem:[%s1 + $0x600] sm:$0xff]
      %v396 = vld [vmem:[%s1 + $0x608] sm:$0xff]
      %v397 = vld [vmem:[%s1 + $0x610] sm:$0xff]
      %v398 = vld [vmem:[%s1 + $0x618] sm:$0xff]
      %v399 = vld [vmem:[%s1 + $0x620] sm:$0xff]
      %v400 = vld [vmem:[%s1 + $0x628] sm:$0xff]
      %v401 = vld [vmem:[%s1 + $0x630] sm:$0xff]
      %v402 = vld [vmem:[%s1 + $0x638] sm:$0xff]
      %v403 = vld [vmem:[%s1 + $0x640] sm:$0xff]
      %v404 = vld [vmem:[%s1 + $0x648] sm:$0xff]
      %v405 = vld [vmem:[%s1 + $0x650] sm:$0xff]
      %v406 = vld [vmem:[%s1 + $0x658] sm:$0xff]
      %v407 = vld [vmem:[%s1 + $0x660] sm:$0xff]
      %v408 = vld [vmem:[%s1 + $0x668] sm:$0xff]
      %v409 = vld [vmem:[%s1 + $0x670] sm:$0xff]
      %v410 = vld [vmem:[%s1 + $0x678] sm:$0xff]
      %v411 = vld [vmem:[%s1 + $0x680] sm:$0xff]
      %v412 = vld [vmem:[%s1 + $0x688] sm:$0xff]
      %v413 = vld [vmem:[%s1 + $0x690] sm:$0xff]
      %v414 = vld [vmem:[%s1 + $0x698] sm:$0xff]
      %v415 = vld [vmem:[%s1 + $0x6a0] sm:$0xff]
      %v416 = vld [vmem:[%s1 + $0x6a8] sm:$0xff]
      %v417 = vld [vmem:[%s1 + $0x6b0] sm:$0xff]
      %v418 = vld [vmem:[%s1 + $0x6b8] sm:$0xff]
      %v419 = vld [vmem:[%s1 + $0x6c0] sm:$0xff]
      %v420 = vld [vmem:[%s1 + $0x6c8] sm:$0xff]
      %v421 = vld [vmem:[%s1 + $0x6d0] sm:$0xff]
      %v422 = vld [vmem:[%s1 + $0x6d8] sm:$0xff]
      %v423 = vld [vmem:[%s1 + $0x6e0] sm:$0xff]
      %v424 = vld [vmem:[%s1 + $0x6e8] sm:$0xff]
      %v425 = vld [vmem:[%s1 + $0x6f0] sm:$0xff]
      %v426 = vld [vmem:[%s1 + $0x6f8] sm:$0xff]
      %v427 = vld [vmem:[%s1 + $0x700] sm:$0xff]
      %v428 = vld [vmem:[%s1 + $0x708] sm:$0xff]
      %v429 = vld [vmem:[%s1 + $0x710] sm:$0xff]
      %v430 = vld [vmem:[%s1 + $0x718] sm:$0xff]
      %v431 = vld [vmem:[%s1 + $0x720] sm:$0xff]
      %v432 = vld [vmem:[%s1 + $0x728] sm:$0xff]
      %v433 = vld [vmem:[%s1 + $0x730] sm:$0xff]
      %v434 = vld [vmem:[%s1 + $0x738] sm:$0xff]
      %v435 = vld [vmem:[%s1 + $0x740] sm:$0xff]
      %v436 = vld [vmem:[%s1 + $0x748] sm:$0xff]
      %v437 = vld [vmem:[%s1 + $0x750] sm:$0xff]
      %v438 = vld [vmem:[%s1 + $0x758] sm:$0xff]
      %v439 = vld [vmem:[%s1 + $0x760] sm:$0xff]
      %v440 = vld [vmem:[%s1 + $0x768] sm:$0xff]
      %v441 = vld [vmem:[%s1 + $0x770] sm:$0xff]
      %v442 = vld [vmem:[%s1 + $0x778] sm:$0xff]
      %v443 = vld [vmem:[%s1 + $0x780] sm:$0xff]
      %v444 = vld [vmem:[%s1 + $0x788] sm:$0xff]
      %v445 = vld [vmem:[%s1 + $0x790] sm:$0xff]
      %v446 = vld [vmem:[%s1 + $0x798] sm:$0xff]
      %v447 = vld [vmem:[%s1 + $0x7a0] sm:$0xff]
      %v448 = vld [vmem:[%s1 + $0x7a8] sm:$0xff]
      %v449 = vld [vmem:[%s1 + $0x7b0] sm:$0xff]
      %v450 = vld [vmem:[%s1 + $0x7b8] sm:$0xff]
      %v451 = vld [vmem:[%s1 + $0x7c0] sm:$0xff]
      %v452 = vld [vmem:[%s1 + $0x7c8] sm:$0xff]
      %v453 = vld [vmem:[%s1 + $0x7d0] sm:$0xff]
      %v454 = vld [vmem:[%s1 + $0x7d8] sm:$0xff]
      %v455 = vld [vmem:[%s1 + $0x7e0] sm:$0xff]
      %v456 = vld [vmem:[%s1 + $0x7e8] sm:$0xff]
      %v457 = vld [vmem:[%s1 + $0x7f0] sm:$0xff]
      %v458 = vld [vmem:[%s1 + $0x7f8] sm:$0xff]
      %v459 = vld [vmem:[%s1 + $0x800] sm:$0xff]
      %v460 = vld [vmem:[%s1 + $0x808] sm:$0xff]
      %v461 = vld [vmem:[%s1 + $0x810] sm:$0xff]
      %v462 = vld [vmem:[%s1 + $0x818] sm:$0xff]
      %v463 = vld [vmem:[%s1 + $0x820] sm:$0xff]
      %v464 = vld [vmem:[%s1 + $0x828] sm:$0xff]
      %v465 = vld [vmem:[%s1 + $0x830] sm:$0xff]
      %v466 = vld [vmem:[%s1 + $0x838] sm:$0xff]
      %v467 = vld [vmem:[%s1 + $0x840] sm:$0xff]
      %v468 = vld [vmem:[%s1 + $0x848] sm:$0xff]
      %v469 = vld [vmem:[%s1 + $0x850] sm:$0xff]
      %v470 = vld [vmem:[%s1 + $0x858] sm:$0xff]
      %v471 = vld [vmem:[%s1 + $0x860] sm:$0xff]
      %v472 = vld [vmem:[%s1 + $0x868] sm:$0xff]
      %v473 = vld [vmem:[%s1 + $0x870] sm:$0xff]
      %v474 = vld [vmem:[%s1 + $0x878] sm:$0xff]
      %v475 = vld [vmem:[%s1 + $0x880] sm:$0xff]
      %v476 = vld [vmem:[%s1 + $0x888] sm:$0xff]
      %v477 = vld [vmem:[%s1 + $0x890] sm:$0xff]
      %v478 = vld [vmem:[%s1 + $0x898] sm:$0xff]
      %v479 = vld [vmem:[%s1 + $0x8a0] sm:$0xff]
      %v480 = vld [vmem:[%s1 + $0x8a8] sm:$0xff]
      %v481 = vld [vmem:[%s1 + $0x8b0] sm:$0xff]
      %v482 = vld [vmem:[%s1 + $0x8b8] sm:$0xff]
      %v483 = vld [vmem:[%s1 + $0x8c0] sm:$0xff]
      %v484 = vld [vmem:[%s1 + $0x8c8] sm:$0xff]
      %v485 = vld [vmem:[%s1 + $0x8d0] sm:$0xff]
      %v486 = vld [vmem:[%s1 + $0x8d8] sm:$0xff]
      %v487 = vld [vmem:[%s1 + $0x8e0] sm:$0xff]
      %v488 = vld [vmem:[%s1 + $0x8e8] sm:$0xff]
      %v489 = vld [vmem:[%s1 + $0x8f0] sm:$0xff]
      %v490 = vld [vmem:[%s1 + $0x8f8] sm:$0xff]
      %v491 = vld [vmem:[%s1 + $0x900] sm:$0xff]
      %v492 = vld [vmem:[%s1 + $0x908] sm:$0xff]
      %v493 = vld [vmem:[%s1 + $0x910] sm:$0xff]
      %v494 = vld [vmem:[%s1 + $0x918] sm:$0xff]
      %v495 = vld [vmem:[%s1 + $0x920] sm:$0xff]
      %v496 = vld [vmem:[%s1 + $0x928] sm:$0xff]
      %v497 = vld [vmem:[%s1 + $0x930] sm:$0xff]
      %v498 = vld [vmem:[%s1 + $0x938] sm:$0xff]
      %v499 = vld [vmem:[%s1 + $0x940] sm:$0xff]
      %v500 = vld [vmem:[%s1 + $0x948] sm:$0xff]
      %v501 = vld [vmem:[%s1 + $0x950] sm:$0xff]
      %v502 = vld [vmem:[%s1 + $0x958] sm:$0xff]
      %v503 = vld [vmem:[%s1 + $0x960] sm:$0xff]
      %v504 = vld [vmem:[%s1 + $0x968] sm:$0xff]
      %v505 = vld [vmem:[%s1 + $0x970] sm:$0xff]
      %v506 = vld [vmem:[%s1 + $0x978] sm:$0xff]
      %v507 = vld [vmem:[%s1 + $0x980] sm:$0xff]
      %v508 = vld [vmem:[%s1 + $0x988] sm:$0xff]
      %v509 = vld [vmem:[%s1 + $0x990] sm:$0xff]
      %v510 = vld [vmem:[%s1 + $0x998] sm:$0xff]
      %v511 = vld [vmem:[%s1 + $0x9a0] sm:$0xff]
      %v512 = vld [vmem:[%s1 + $0x9a8] sm:$0xff]
      %v513 = vld [vmem:[%s1 + $0x9b0] sm:$0xff]
      %v514 = vld [vmem:[%s1 + $0x9b8] sm:$0xff]
      %v515 = vld [vmem:[%s1 + $0x9c0] sm:$0xff]
      %v516 = vld [vmem:[%s1 + $0x9c8] sm:$0xff]
      %v517 = vld [vmem:[%s1 + $0x9d0] sm:$0xff]
      %v518 = vld [vmem:[%s1 + $0x9d8] sm:$0xff]
      %v519 = vld [vmem:[%s1 + $0x9e0] sm:$0xff]
      %v520 = vld [vmem:[%s1 + $0x9e8] sm:$0xff]
      %v521 = vld [vmem:[%s1 + $0x9f0] sm:$0xff]
      %v522 = vld [vmem:[%s1 + $0x9f8] sm:$0xff]
      %v523 = vld [vmem:[%s1 + $0xa00] sm:$0xff]
      %v524 = vld [vmem:[%s1 + $0xa08] sm:$0xff]
      %v525 = vld [vmem:[%s1 + $0xa10] sm:$0xff]
      %v526 = vld [vmem:[%s1 + $0xa18] sm:$0xff]
      %v527 = vld [vmem:[%s1 + $0xa20] sm:$0xff]
      %v528 = vld [vmem:[%s1 + $0xa28] sm:$0xff]
      %v529 = vld [vmem:[%s1 + $0xa30] sm:$0xff]
      %v530 = vld [vmem:[%s1 + $0xa38] sm:$0xff]
      %v531 = vld [vmem:[%s1 + $0xa40] sm:$0xff]
      %v532 = vld [vmem:[%s1 + $0xa48] sm:$0xff]
      %v533 = vld [vmem:[%s1 + $0xa50] sm:$0xff]
      %v534 = vld [vmem:[%s1 + $0xa58] sm:$0xff]
      %v535 = vld [vmem:[%s1 + $0xa60] sm:$0xff]
      %v536 = vld [vmem:[%s1 + $0xa68] sm:$0xff]
      %v537 = vld [vmem:[%s1 + $0xa70] sm:$0xff]
      %v538 = vld [vmem:[%s1 + $0xa78] sm:$0xff]
      %v539 = vld [vmem:[%s1 + $0xa80] sm:$0xff]
      %v540 = vld [vmem:[%s1 + $0xa88] sm:$0xff]
      %v541 = vld [vmem:[%s1 + $0xa90] sm:$0xff]
      %v542 = vld [vmem:[%s1 + $0xa98] sm:$0xff]
      %v543 = vld [vmem:[%s1 + $0xaa0] sm:$0xff]
      %v544 = vld [vmem:[%s1 + $0xaa8] sm:$0xff]
      %v545 = vld [vmem:[%s1 + $0xab0] sm:$0xff]
      %v546 = vld [vmem:[%s1 + $0xab8] sm:$0xff]
      %v547 = vld [vmem:[%s1 + $0xac0] sm:$0xff]
      %v548 = vld [vmem:[%s1 + $0xac8] sm:$0xff]
      %v549 = vld [vmem:[%s1 + $0xad0] sm:$0xff]
      %v550 = vld [vmem:[%s1 + $0xad8] sm:$0xff]
      %v551 = vld [vmem:[%s1 + $0xae0] sm:$0xff]
      %v552 = vld [vmem:[%s1 + $0xae8] sm:$0xff]
      %v553 = vld [vmem:[%s1 + $0xaf0] sm:$0xff]
      %v554 = vld [vmem:[%s1 + $0xaf8] sm:$0xff]
      %v555 = vld [vmem:[%s1 + $0xb00] sm:$0xff]
      %v556 = vld [vmem:[%s1 + $0xb08] sm:$0xff]
      %v557 = vld [vmem:[%s1 + $0xb10] sm:$0xff]
      %v558 = vld [vmem:[%s1 + $0xb18] sm:$0xff]
      %v559 = vld [vmem:[%s1 + $0xb20] sm:$0xff]
      %v560 = vld [vmem:[%s1 + $0xb28] sm:$0xff]
      %v561 = vld [vmem:[%s1 + $0xb30] sm:$0xff]
      %v562 = vld [vmem:[%s1 + $0xb38] sm:$0xff]
      %v563 = vld [vmem:[%s1 + $0xb40] sm:$0xff]
      %v564 = vld [vmem:[%s1 + $0xb48] sm:$0xff]
      %v565 = vld [vmem:[%s1 + $0xb50] sm:$0xff]
      %v566 = vld [vmem:[%s1 + $0xb58] sm:$0xff]
      %v567 = vld [vmem:[%s1 + $0xb60] sm:$0xff]
      %v568 = vld [vmem:[%s1 + $0xb68] sm:$0xff]
      %v569 = vld [vmem:[%s1 + $0xb70] sm:$0xff]
      %v570 = vld [vmem:[%s1 + $0xb78] sm:$0xff]
      %v571 = vld [vmem:[%s1 + $0xb80] sm:$0xff]
      %v572 = vld [vmem:[%s1 + $0xb88] sm:$0xff]
      %v573 = vld [vmem:[%s1 + $0xb90] sm:$0xff]
      %v574 = vld [vmem:[%s1 + $0xb98] sm:$0xff]
      %v575 = vld [vmem:[%s1 + $0xba0] sm:$0xff]
      %v576 = vld [vmem:[%s1 + $0xba8] sm:$0xff]
      %v577 = vld [vmem:[%s1 + $0xbb0] sm:$0xff]
      %v578 = vld [vmem:[%s1 + $0xbb8] sm:$0xff]
      %v579 = vld [vmem:[%s1 + $0xbc0] sm:$0xff]
      %v580 = vld [vmem:[%s1 + $0xbc8] sm:$0xff]
      %v581 = vld [vmem:[%s1 + $0xbd0] sm:$0xff]
      %v582 = vld [vmem:[%s1 + $0xbd8] sm:$0xff]
      %v583 = vld [vmem:[%s1 + $0xbe0] sm:$0xff]
      %v584 = vld [vmem:[%s1 + $0xbe8] sm:$0xff]
      %v585 = vld [vmem:[%s1 + $0xbf0] sm:$0xff]
      %v586 = vld [vmem:[%s1 + $0xbf8] sm:$0xff]
      %v587 = vld [vmem:[%s2] sm:$0xff]
      %v588 = vld [vmem:[%s2 + $0x8] sm:$0xff]
      %v589 = vld [vmem:[%s2 + $0x10] sm:$0xff]
      %v590 = vld [vmem:[%s2 + $0x18] sm:$0xff]
      %v591 = vld [vmem:[%s2 + $0x20] sm:$0xff]
      %v592 = vld [vmem:[%s2 + $0x28] sm:$0xff]
      %v593 = vld [vmem:[%s2 + $0x30] sm:$0xff]
      %v594 = vld [vmem:[%s2 + $0x38] sm:$0xff]
      %v595 = vld [vmem:[%s2 + $0x40] sm:$0xff]
      %v596 = vld [vmem:[%s2 + $0x48] sm:$0xff]
      %v597 = vld [vmem:[%s2 + $0x50] sm:$0xff]
      %v598 = vld [vmem:[%s2 + $0x58] sm:$0xff]
      %v599 = vld [vmem:[%s2 + $0x60] sm:$0xff]
      %v600 = vld [vmem:[%s2 + $0x68] sm:$0xff]
      %v601 = vld [vmem:[%s2 + $0x70] sm:$0xff]
      %v602 = vld [vmem:[%s2 + $0x78] sm:$0xff]
      %v603 = vld [vmem:[%s2 + $0x80] sm:$0xff]
      %v604 = vld [vmem:[%s2 + $0x88] sm:$0xff]
      %v605 = vld [vmem:[%s2 + $0x90] sm:$0xff]
      %v606 = vld [vmem:[%s2 + $0x98] sm:$0xff]
      %v607 = vld [vmem:[%s2 + $0xa0] sm:$0xff]
      %v608 = vld [vmem:[%s2 + $0xa8] sm:$0xff]
      %v609 = vld [vmem:[%s2 + $0xb0] sm:$0xff]
      %v610 = vld [vmem:[%s2 + $0xb8] sm:$0xff]
      %v611 = vld [vmem:[%s2 + $0xc0] sm:$0xff]
      %v612 = vld [vmem:[%s2 + $0xc8] sm:$0xff]
      %v613 = vld [vmem:[%s2 + $0xd0] sm:$0xff]
      %v614 = vld [vmem:[%s2 + $0xd8] sm:$0xff]
      %v615 = vld [vmem:[%s2 + $0xe0] sm:$0xff]
      %v616 = vld [vmem:[%s2 + $0xe8] sm:$0xff]
      %v617 = vld [vmem:[%s2 + $0xf0] sm:$0xff]
      %v618 = vld [vmem:[%s2 + $0xf8] sm:$0xff]
      %v619 = vld [vmem:[%s2 + $0x100] sm:$0xff]
      %v620 = vld [vmem:[%s2 + $0x108] sm:$0xff]
      %v621 = vld [vmem:[%s2 + $0x110] sm:$0xff]
      %v622 = vld [vmem:[%s2 + $0x118] sm:$0xff]
      %v623 = vld [vmem:[%s2 + $0x120] sm:$0xff]
      %v624 = vld [vmem:[%s2 + $0x128] sm:$0xff]
      %v625 = vld [vmem:[%s2 + $0x130] sm:$0xff]
      %v626 = vld [vmem:[%s2 + $0x138] sm:$0xff]
      %v627 = vld [vmem:[%s2 + $0x140] sm:$0xff]
      %v628 = vld [vmem:[%s2 + $0x148] sm:$0xff]
      %v629 = vld [vmem:[%s2 + $0x150] sm:$0xff]
      %v630 = vld [vmem:[%s2 + $0x158] sm:$0xff]
      %v631 = vld [vmem:[%s2 + $0x160] sm:$0xff]
      %v632 = vld [vmem:[%s2 + $0x168] sm:$0xff]
      %v633 = vld [vmem:[%s2 + $0x170] sm:$0xff]
      %v634 = vld [vmem:[%s2 + $0x178] sm:$0xff]
      %v635 = vld [vmem:[%s2 + $0x180] sm:$0xff]
      %v636 = vld [vmem:[%s2 + $0x188] sm:$0xff]
      %v637 = vld [vmem:[%s2 + $0x190] sm:$0xff]
      %v638 = vld [vmem:[%s2 + $0x198] sm:$0xff]
      %v639 = vld [vmem:[%s2 + $0x1a0] sm:$0xff]
      %v640 = vld [vmem:[%s2 + $0x1a8] sm:$0xff]
      %v641 = vld [vmem:[%s2 + $0x1b0] sm:$0xff]
      %v642 = vld [vmem:[%s2 + $0x1b8] sm:$0xff]
      %v643 = vld [vmem:[%s2 + $0x1c0] sm:$0xff]
      %v644 = vld [vmem:[%s2 + $0x1c8] sm:$0xff]
      %v645 = vld [vmem:[%s2 + $0x1d0] sm:$0xff]
      %v646 = vld [vmem:[%s2 + $0x1d8] sm:$0xff]
      %v647 = vld [vmem:[%s2 + $0x1e0] sm:$0xff]
      %v648 = vld [vmem:[%s2 + $0x1e8] sm:$0xff]
      %v649 = vld [vmem:[%s2 + $0x1f0] sm:$0xff]
      %v650 = vld [vmem:[%s2 + $0x1f8] sm:$0xff]
      %v651 = vld [vmem:[%s2 + $0x200] sm:$0xff]
      %v652 = vld [vmem:[%s2 + $0x208] sm:$0xff]
      %v653 = vld [vmem:[%s2 + $0x210] sm:$0xff]
      %v654 = vld [vmem:[%s2 + $0x218] sm:$0xff]
      %v655 = vld [vmem:[%s2 + $0x220] sm:$0xff]
      %v656 = vld [vmem:[%s2 + $0x228] sm:$0xff]
      %v657 = vld [vmem:[%s2 + $0x230] sm:$0xff]
      %v658 = vld [vmem:[%s2 + $0x238] sm:$0xff]
      %v659 = vld [vmem:[%s2 + $0x240] sm:$0xff]
      %v660 = vld [vmem:[%s2 + $0x248] sm:$0xff]
      %v661 = vld [vmem:[%s2 + $0x250] sm:$0xff]
      %v662 = vld [vmem:[%s2 + $0x258] sm:$0xff]
      %v663 = vld [vmem:[%s2 + $0x260] sm:$0xff]
      %v664 = vld [vmem:[%s2 + $0x268] sm:$0xff]
      %v665 = vld [vmem:[%s2 + $0x270] sm:$0xff]
      %v666 = vld [vmem:[%s2 + $0x278] sm:$0xff]
      %v667 = vld [vmem:[%s2 + $0x280] sm:$0xff]
      %v668 = vld [vmem:[%s2 + $0x288] sm:$0xff]
      %v669 = vld [vmem:[%s2 + $0x290] sm:$0xff]
      %v670 = vld [vmem:[%s2 + $0x298] sm:$0xff]
      %v671 = vld [vmem:[%s2 + $0x2a0] sm:$0xff]
      %v672 = vld [vmem:[%s2 + $0x2a8] sm:$0xff]
      %v673 = vld [vmem:[%s2 + $0x2b0] sm:$0xff]
      %v674 = vld [vmem:[%s2 + $0x2b8] sm:$0xff]
      %v675 = vld [vmem:[%s2 + $0x2c0] sm:$0xff]
      %v676 = vld [vmem:[%s2 + $0x2c8] sm:$0xff]
      %v677 = vld [vmem:[%s2 + $0x2d0] sm:$0xff]
      %v678 = vld [vmem:[%s2 + $0x2d8] sm:$0xff]
      %v679 = vld [vmem:[%s2 + $0x2e0] sm:$0xff]
      %v680 = vld [vmem:[%s2 + $0x2e8] sm:$0xff]
      %v681 = vld [vmem:[%s2 + $0x2f0] sm:$0xff]
      %v682 = vld [vmem:[%s2 + $0x2f8] sm:$0xff]
      %v683 = vld [vmem:[%s2 + $0x300] sm:$0xff]
      %v684 = vld [vmem:[%s2 + $0x308] sm:$0xff]
      %v685 = vld [vmem:[%s2 + $0x310] sm:$0xff]
      %v686 = vld [vmem:[%s2 + $0x318] sm:$0xff]
      %v687 = vld [vmem:[%s2 + $0x320] sm:$0xff]
      %v688 = vld [vmem:[%s2 + $0x328] sm:$0xff]
      %v689 = vld [vmem:[%s2 + $0x330] sm:$0xff]
      %v690 = vld [vmem:[%s2 + $0x338] sm:$0xff]
      %v691 = vld [vmem:[%s2 + $0x340] sm:$0xff]
      %v692 = vld [vmem:[%s2 + $0x348] sm:$0xff]
      %v693 = vld [vmem:[%s2 + $0x350] sm:$0xff]
      %v694 = vld [vmem:[%s2 + $0x358] sm:$0xff]
      %v695 = vld [vmem:[%s2 + $0x360] sm:$0xff]
      %v696 = vld [vmem:[%s2 + $0x368] sm:$0xff]
      %v697 = vld [vmem:[%s2 + $0x370] sm:$0xff]
      %v698 = vld [vmem:[%s2 + $0x378] sm:$0xff]
      %v699 = vld [vmem:[%s2 + $0x380] sm:$0xff]
      %v700 = vld [vmem:[%s2 + $0x388] sm:$0xff]
      %v701 = vld [vmem:[%s2 + $0x390] sm:$0xff]
      %v702 = vld [vmem:[%s2 + $0x398] sm:$0xff]
      %v703 = vld [vmem:[%s2 + $0x3a0] sm:$0xff]
      %v704 = vld [vmem:[%s2 + $0x3a8] sm:$0xff]
      %v705 = vld [vmem:[%s2 + $0x3b0] sm:$0xff]
      %v706 = vld [vmem:[%s2 + $0x3b8] sm:$0xff]
      %v707 = vld [vmem:[%s2 + $0x3c0] sm:$0xff]
      %v708 = vld [vmem:[%s2 + $0x3c8] sm:$0xff]
      %v709 = vld [vmem:[%s2 + $0x3d0] sm:$0xff]
      %v710 = vld [vmem:[%s2 + $0x3d8] sm:$0xff]
      %v711 = vld [vmem:[%s2 + $0x3e0] sm:$0xff]
      %v712 = vld [vmem:[%s2 + $0x3e8] sm:$0xff]
      %v713 = vld [vmem:[%s2 + $0x3f0] sm:$0xff]
      %v714 = vld [vmem:[%s2 + $0x3f8] sm:$0xff]
      %v715 = vld [vmem:[%s193] sm:$0xf]
      %v716 = vld [vmem:[%s193 + $0x4] sm:$0xf]
      %v717 = vld [vmem:[%s193 + $0x8] sm:$0xf]
      %v718 = vld [vmem:[%s193 + $0xc] sm:$0xf]
      %v719 = vld [vmem:[%s193 + $0x10] sm:$0xf]
      %v720 = vld [vmem:[%s193 + $0x14] sm:$0xf]
      %v721 = vld [vmem:[%s193 + $0x18] sm:$0xf]
      %v722 = vld [vmem:[%s193 + $0x1c] sm:$0xf]
      %v723 = vld [vmem:[%s193 + $0x20] sm:$0xf]
      %v724 = vld [vmem:[%s193 + $0x24] sm:$0xf]
      %v725 = vld [vmem:[%s193 + $0x28] sm:$0xf]
      %v726 = vld [vmem:[%s193 + $0x2c] sm:$0xf]
      %v727 = vld [vmem:[%s193 + $0x30] sm:$0xf]
      %v728 = vld [vmem:[%s193 + $0x34] sm:$0xf]
      %v729 = vld [vmem:[%s193 + $0x38] sm:$0xf]
      %v730 = vld [vmem:[%s193 + $0x3c] sm:$0xf]
      %v731 = vld [vmem:[%s193 + $0x40] sm:$0xf]
      %v732 = vld [vmem:[%s193 + $0x44] sm:$0xf]
      %v733 = vld [vmem:[%s193 + $0x48] sm:$0xf]
      %v734 = vld [vmem:[%s193 + $0x4c] sm:$0xf]
      %v735 = vld [vmem:[%s193 + $0x50] sm:$0xf]
      %v736 = vld [vmem:[%s193 + $0x54] sm:$0xf]
      %v737 = vld [vmem:[%s193 + $0x58] sm:$0xf]
      %v738 = vld [vmem:[%s193 + $0x5c] sm:$0xf]
      %v739 = vld [vmem:[%s193 + $0x60] sm:$0xf]
      %v740 = vld [vmem:[%s193 + $0x64] sm:$0xf]
      %v741 = vld [vmem:[%s193 + $0x68] sm:$0xf]
      %v742 = vld [vmem:[%s193 + $0x6c] sm:$0xf]
      %v743 = vld [vmem:[%s193 + $0x70] sm:$0xf]
      %v744 = vld [vmem:[%s193 + $0x74] sm:$0xf]
      %v745 = vld [vmem:[%s193 + $0x78] sm:$0xf]
      %v746 = vld [vmem:[%s193 + $0x7c] sm:$0xf]
      %v747 = vld [vmem:[%s193 + $0x80] sm:$0xf]
      %v748 = vld [vmem:[%s193 + $0x84] sm:$0xf]
      %v749 = vld [vmem:[%s193 + $0x88] sm:$0xf]
      %v750 = vld [vmem:[%s193 + $0x8c] sm:$0xf]
      %v751 = vld [vmem:[%s193 + $0x90] sm:$0xf]
      %v752 = vld [vmem:[%s193 + $0x94] sm:$0xf]
      %v753 = vld [vmem:[%s193 + $0x98] sm:$0xf]
      %v754 = vld [vmem:[%s193 + $0x9c] sm:$0xf]
      %v755 = vld [vmem:[%s193 + $0xa0] sm:$0xf]
      %v756 = vld [vmem:[%s193 + $0xa4] sm:$0xf]
      %v757 = vld [vmem:[%s193 + $0xa8] sm:$0xf]
      %v758 = vld [vmem:[%s193 + $0xac] sm:$0xf]
      %v759 = vld [vmem:[%s193 + $0xb0] sm:$0xf]
      %v760 = vld [vmem:[%s193 + $0xb4] sm:$0xf]
      %v761 = vld [vmem:[%s193 + $0xb8] sm:$0xf]
      %v762 = vld [vmem:[%s193 + $0xbc] sm:$0xf]
      %v763 = vld [vmem:[%s193 + $0xc0] sm:$0xf]
      %v764 = vld [vmem:[%s193 + $0xc4] sm:$0xf]
      %v765 = vld [vmem:[%s193 + $0xc8] sm:$0xf]
      %v766 = vld [vmem:[%s193 + $0xcc] sm:$0xf]
      %v767 = vld [vmem:[%s193 + $0xd0] sm:$0xf]
      %v768 = vld [vmem:[%s193 + $0xd4] sm:$0xf]
      %v769 = vld [vmem:[%s193 + $0xd8] sm:$0xf]
      %v770 = vld [vmem:[%s193 + $0xdc] sm:$0xf]
      %v771 = vld [vmem:[%s193 + $0xe0] sm:$0xf]
      %v772 = vld [vmem:[%s193 + $0xe4] sm:$0xf]
      %v773 = vld [vmem:[%s193 + $0xe8] sm:$0xf]
      %v774 = vld [vmem:[%s193 + $0xec] sm:$0xf]
      %v775 = vld [vmem:[%s193 + $0xf0] sm:$0xf]
      %v776 = vld [vmem:[%s193 + $0xf4] sm:$0xf]
      %v777 = vld [vmem:[%s193 + $0xf8] sm:$0xf]
      %v778 = vld [vmem:[%s193 + $0xfc] sm:$0xf]
      %v779 = vld [vmem:[%s193 + $0x100] sm:$0xf]
      %v780 = vld [vmem:[%s193 + $0x104] sm:$0xf]
      %v781 = vld [vmem:[%s193 + $0x108] sm:$0xf]
      %v782 = vld [vmem:[%s193 + $0x10c] sm:$0xf]
      %v783 = vld [vmem:[%s193 + $0x110] sm:$0xf]
      %v784 = vld [vmem:[%s193 + $0x114] sm:$0xf]
      %v785 = vld [vmem:[%s193 + $0x118] sm:$0xf]
      %v786 = vld [vmem:[%s193 + $0x11c] sm:$0xf]
      %v787 = vld [vmem:[%s193 + $0x120] sm:$0xf]
      %v788 = vld [vmem:[%s193 + $0x124] sm:$0xf]
      %v789 = vld [vmem:[%s193 + $0x128] sm:$0xf]
      %v790 = vld [vmem:[%s193 + $0x12c] sm:$0xf]
      %v791 = vld [vmem:[%s193 + $0x130] sm:$0xf]
      %v792 = vld [vmem:[%s193 + $0x134] sm:$0xf]
      %v793 = vld [vmem:[%s193 + $0x138] sm:$0xf]
      %v794 = vld [vmem:[%s193 + $0x13c] sm:$0xf]
      %v795 = vld [vmem:[%s193 + $0x140] sm:$0xf]
      %v796 = vld [vmem:[%s193 + $0x144] sm:$0xf]
      %v797 = vld [vmem:[%s193 + $0x148] sm:$0xf]
      %v798 = vld [vmem:[%s193 + $0x14c] sm:$0xf]
      %v799 = vld [vmem:[%s193 + $0x150] sm:$0xf]
      %v800 = vld [vmem:[%s193 + $0x154] sm:$0xf]
      %v801 = vld [vmem:[%s193 + $0x158] sm:$0xf]
      %v802 = vld [vmem:[%s193 + $0x15c] sm:$0xf]
      %v803 = vld [vmem:[%s193 + $0x160] sm:$0xf]
      %v804 = vld [vmem:[%s193 + $0x164] sm:$0xf]
      %v805 = vld [vmem:[%s193 + $0x168] sm:$0xf]
      %v806 = vld [vmem:[%s193 + $0x16c] sm:$0xf]
      %v807 = vld [vmem:[%s193 + $0x170] sm:$0xf]
      %v808 = vld [vmem:[%s193 + $0x174] sm:$0xf]
      %v809 = vld [vmem:[%s193 + $0x178] sm:$0xf]
      %v810 = vld [vmem:[%s193 + $0x17c] sm:$0xf]
      %812 = vset.pattern.permute.xlu0 0
      %813 = vperm.xlu0 %812, %v587
      %v814 = vpop.permute.xlu0 %813
      %817 = vset.pattern.permute.xlu0 0
      %818 = vperm.xlu0 %817, %v588
      %v819 = vpop.permute.xlu0 %818
      %822 = vset.pattern.permute.xlu0 0
      %823 = vperm.xlu0 %822, %v589
      %v824 = vpop.permute.xlu0 %823
      %827 = vset.pattern.permute.xlu0 0
      %828 = vperm.xlu0 %827, %v590
      %v829 = vpop.permute.xlu0 %828
      %832 = vset.pattern.permute.xlu0 0
      %833 = vperm.xlu0 %832, %v591
      %v834 = vpop.permute.xlu0 %833
      %837 = vset.pattern.permute.xlu0 0
      %838 = vperm.xlu0 %837, %v592
      %v839 = vpop.permute.xlu0 %838
      %842 = vset.pattern.permute.xlu0 0
      %843 = vperm.xlu0 %842, %v593
      %v844 = vpop.permute.xlu0 %843
      %847 = vset.pattern.permute.xlu0 0
      %848 = vperm.xlu0 %847, %v594
      %v849 = vpop.permute.xlu0 %848
      %852 = vset.pattern.permute.xlu0 0
      %853 = vperm.xlu0 %852, %v595
      %v854 = vpop.permute.xlu0 %853
      %857 = vset.pattern.permute.xlu0 0
      %858 = vperm.xlu0 %857, %v596
      %v859 = vpop.permute.xlu0 %858
      %862 = vset.pattern.permute.xlu0 0
      %863 = vperm.xlu0 %862, %v597
      %v864 = vpop.permute.xlu0 %863
      %867 = vset.pattern.permute.xlu0 0
      %868 = vperm.xlu0 %867, %v598
      %v869 = vpop.permute.xlu0 %868
      %872 = vset.pattern.permute.xlu0 0
      %873 = vperm.xlu0 %872, %v599
      %v874 = vpop.permute.xlu0 %873
      %877 = vset.pattern.permute.xlu0 0
      %878 = vperm.xlu0 %877, %v600
      %v879 = vpop.permute.xlu0 %878
      %882 = vset.pattern.permute.xlu0 0
      %883 = vperm.xlu0 %882, %v601
      %v884 = vpop.permute.xlu0 %883
      %887 = vset.pattern.permute.xlu0 0
      %888 = vperm.xlu0 %887, %v602
      %v889 = vpop.permute.xlu0 %888
      %892 = vset.pattern.permute.xlu0 0
      %893 = vperm.xlu0 %892, %v603
      %v894 = vpop.permute.xlu0 %893
      %897 = vset.pattern.permute.xlu0 0
      %898 = vperm.xlu0 %897, %v604
      %v899 = vpop.permute.xlu0 %898
      %902 = vset.pattern.permute.xlu0 0
      %903 = vperm.xlu0 %902, %v605
      %v904 = vpop.permute.xlu0 %903
      %907 = vset.pattern.permute.xlu0 0
      %908 = vperm.xlu0 %907, %v606
      %v909 = vpop.permute.xlu0 %908
      %912 = vset.pattern.permute.xlu0 0
      %913 = vperm.xlu0 %912, %v607
      %v914 = vpop.permute.xlu0 %913
      %917 = vset.pattern.permute.xlu0 0
      %918 = vperm.xlu0 %917, %v608
      %v919 = vpop.permute.xlu0 %918
      %922 = vset.pattern.permute.xlu0 0
      %923 = vperm.xlu0 %922, %v609
      %v924 = vpop.permute.xlu0 %923
      %927 = vset.pattern.permute.xlu0 0
      %928 = vperm.xlu0 %927, %v610
      %v929 = vpop.permute.xlu0 %928
      %932 = vset.pattern.permute.xlu0 0
      %933 = vperm.xlu0 %932, %v611
      %v934 = vpop.permute.xlu0 %933
      %937 = vset.pattern.permute.xlu0 0
      %938 = vperm.xlu0 %937, %v612
      %v939 = vpop.permute.xlu0 %938
      %942 = vset.pattern.permute.xlu0 0
      %943 = vperm.xlu0 %942, %v613
      %v944 = vpop.permute.xlu0 %943
      %947 = vset.pattern.permute.xlu0 0
      %948 = vperm.xlu0 %947, %v614
      %v949 = vpop.permute.xlu0 %948
      %952 = vset.pattern.permute.xlu0 0
      %953 = vperm.xlu0 %952, %v615
      %v954 = vpop.permute.xlu0 %953
      %957 = vset.pattern.permute.xlu0 0
      %958 = vperm.xlu0 %957, %v616
      %v959 = vpop.permute.xlu0 %958
      %962 = vset.pattern.permute.xlu0 0
      %963 = vperm.xlu0 %962, %v617
      %v964 = vpop.permute.xlu0 %963
      %967 = vset.pattern.permute.xlu0 0
      %968 = vperm.xlu0 %967, %v618
      %v969 = vpop.permute.xlu0 %968
      %972 = vset.pattern.permute.xlu0 0
      %973 = vperm.xlu0 %972, %v619
      %v974 = vpop.permute.xlu0 %973
      %977 = vset.pattern.permute.xlu0 0
      %978 = vperm.xlu0 %977, %v620
      %v979 = vpop.permute.xlu0 %978
      %982 = vset.pattern.permute.xlu0 0
      %983 = vperm.xlu0 %982, %v621
      %v984 = vpop.permute.xlu0 %983
      %987 = vset.pattern.permute.xlu0 0
      %988 = vperm.xlu0 %987, %v622
      %v989 = vpop.permute.xlu0 %988
      %992 = vset.pattern.permute.xlu0 0
      %993 = vperm.xlu0 %992, %v623
      %v994 = vpop.permute.xlu0 %993
      %997 = vset.pattern.permute.xlu0 0
      %998 = vperm.xlu0 %997, %v624
      %v999 = vpop.permute.xlu0 %998
      %1002 = vset.pattern.permute.xlu0 0
      %1003 = vperm.xlu0 %1002, %v625
      %v1004 = vpop.permute.xlu0 %1003
      %1007 = vset.pattern.permute.xlu0 0
      %1008 = vperm.xlu0 %1007, %v626
      %v1009 = vpop.permute.xlu0 %1008
      %1012 = vset.pattern.permute.xlu0 0
      %1013 = vperm.xlu0 %1012, %v627
      %v1014 = vpop.permute.xlu0 %1013
      %1017 = vset.pattern.permute.xlu0 0
      %1018 = vperm.xlu0 %1017, %v628
      %v1019 = vpop.permute.xlu0 %1018
      %1022 = vset.pattern.permute.xlu0 0
      %1023 = vperm.xlu0 %1022, %v629
      %v1024 = vpop.permute.xlu0 %1023
      %1027 = vset.pattern.permute.xlu0 0
      %1028 = vperm.xlu0 %1027, %v630
      %v1029 = vpop.permute.xlu0 %1028
      %1032 = vset.pattern.permute.xlu0 0
      %1033 = vperm.xlu0 %1032, %v631
      %v1034 = vpop.permute.xlu0 %1033
      %1037 = vset.pattern.permute.xlu0 0
      %1038 = vperm.xlu0 %1037, %v632
      %v1039 = vpop.permute.xlu0 %1038
      %1042 = vset.pattern.permute.xlu0 0
      %1043 = vperm.xlu0 %1042, %v633
      %v1044 = vpop.permute.xlu0 %1043
      %1047 = vset.pattern.permute.xlu0 0
      %1048 = vperm.xlu0 %1047, %v634
      %v1049 = vpop.permute.xlu0 %1048
      %1052 = vset.pattern.permute.xlu0 0
      %1053 = vperm.xlu0 %1052, %v635
      %v1054 = vpop.permute.xlu0 %1053
      %1057 = vset.pattern.permute.xlu0 0
      %1058 = vperm.xlu0 %1057, %v636
      %v1059 = vpop.permute.xlu0 %1058
      %1062 = vset.pattern.permute.xlu0 0
      %1063 = vperm.xlu0 %1062, %v637
      %v1064 = vpop.permute.xlu0 %1063
      %1067 = vset.pattern.permute.xlu0 0
      %1068 = vperm.xlu0 %1067, %v638
      %v1069 = vpop.permute.xlu0 %1068
      %1072 = vset.pattern.permute.xlu0 0
      %1073 = vperm.xlu0 %1072, %v639
      %v1074 = vpop.permute.xlu0 %1073
      %1077 = vset.pattern.permute.xlu0 0
      %1078 = vperm.xlu0 %1077, %v640
      %v1079 = vpop.permute.xlu0 %1078
      %1082 = vset.pattern.permute.xlu0 0
      %1083 = vperm.xlu0 %1082, %v641
      %v1084 = vpop.permute.xlu0 %1083
      %1087 = vset.pattern.permute.xlu0 0
      %1088 = vperm.xlu0 %1087, %v642
      %v1089 = vpop.permute.xlu0 %1088
      %1092 = vset.pattern.permute.xlu0 0
      %1093 = vperm.xlu0 %1092, %v643
      %v1094 = vpop.permute.xlu0 %1093
      %1097 = vset.pattern.permute.xlu0 0
      %1098 = vperm.xlu0 %1097, %v644
      %v1099 = vpop.permute.xlu0 %1098
      %1102 = vset.pattern.permute.xlu0 0
      %1103 = vperm.xlu0 %1102, %v645
      %v1104 = vpop.permute.xlu0 %1103
      %1107 = vset.pattern.permute.xlu0 0
      %1108 = vperm.xlu0 %1107, %v646
      %v1109 = vpop.permute.xlu0 %1108
      %1112 = vset.pattern.permute.xlu0 0
      %1113 = vperm.xlu0 %1112, %v647
      %v1114 = vpop.permute.xlu0 %1113
      %1117 = vset.pattern.permute.xlu0 0
      %1118 = vperm.xlu0 %1117, %v648
      %v1119 = vpop.permute.xlu0 %1118
      %1122 = vset.pattern.permute.xlu0 0
      %1123 = vperm.xlu0 %1122, %v649
      %v1124 = vpop.permute.xlu0 %1123
      %1127 = vset.pattern.permute.xlu0 0
      %1128 = vperm.xlu0 %1127, %v650
      %v1129 = vpop.permute.xlu0 %1128
      %1132 = vset.pattern.permute.xlu0 0
      %1133 = vperm.xlu0 %1132, %v651
      %v1134 = vpop.permute.xlu0 %1133
      %1137 = vset.pattern.permute.xlu0 0
      %1138 = vperm.xlu0 %1137, %v652
      %v1139 = vpop.permute.xlu0 %1138
      %1142 = vset.pattern.permute.xlu0 0
      %1143 = vperm.xlu0 %1142, %v653
      %v1144 = vpop.permute.xlu0 %1143
      %1147 = vset.pattern.permute.xlu0 0
      %1148 = vperm.xlu0 %1147, %v654
      %v1149 = vpop.permute.xlu0 %1148
      %1152 = vset.pattern.permute.xlu0 0
      %1153 = vperm.xlu0 %1152, %v655
      %v1154 = vpop.permute.xlu0 %1153
      %1157 = vset.pattern.permute.xlu0 0
      %1158 = vperm.xlu0 %1157, %v656
      %v1159 = vpop.permute.xlu0 %1158
      %1162 = vset.pattern.permute.xlu0 0
      %1163 = vperm.xlu0 %1162, %v657
      %v1164 = vpop.permute.xlu0 %1163
      %1167 = vset.pattern.permute.xlu0 0
      %1168 = vperm.xlu0 %1167, %v658
      %v1169 = vpop.permute.xlu0 %1168
      %1172 = vset.pattern.permute.xlu0 0
      %1173 = vperm.xlu0 %1172, %v659
      %v1174 = vpop.permute.xlu0 %1173
      %1177 = vset.pattern.permute.xlu0 0
      %1178 = vperm.xlu0 %1177, %v660
      %v1179 = vpop.permute.xlu0 %1178
      %1182 = vset.pattern.permute.xlu0 0
      %1183 = vperm.xlu0 %1182, %v661
      %v1184 = vpop.permute.xlu0 %1183
      %1187 = vset.pattern.permute.xlu0 0
      %1188 = vperm.xlu0 %1187, %v662
      %v1189 = vpop.permute.xlu0 %1188
      %1192 = vset.pattern.permute.xlu0 0
      %1193 = vperm.xlu0 %1192, %v663
      %v1194 = vpop.permute.xlu0 %1193
      %1197 = vset.pattern.permute.xlu0 0
      %1198 = vperm.xlu0 %1197, %v664
      %v1199 = vpop.permute.xlu0 %1198
      %1202 = vset.pattern.permute.xlu0 0
      %1203 = vperm.xlu0 %1202, %v665
      %v1204 = vpop.permute.xlu0 %1203
      %1207 = vset.pattern.permute.xlu0 0
      %1208 = vperm.xlu0 %1207, %v666
      %v1209 = vpop.permute.xlu0 %1208
      %1212 = vset.pattern.permute.xlu0 0
      %1213 = vperm.xlu0 %1212, %v667
      %v1214 = vpop.permute.xlu0 %1213
      %1217 = vset.pattern.permute.xlu0 0
      %1218 = vperm.xlu0 %1217, %v668
      %v1219 = vpop.permute.xlu0 %1218
      %1222 = vset.pattern.permute.xlu0 0
      %1223 = vperm.xlu0 %1222, %v669
      %v1224 = vpop.permute.xlu0 %1223
      %1227 = vset.pattern.permute.xlu0 0
      %1228 = vperm.xlu0 %1227, %v670
      %v1229 = vpop.permute.xlu0 %1228
      %1232 = vset.pattern.permute.xlu0 0
      %1233 = vperm.xlu0 %1232, %v671
      %v1234 = vpop.permute.xlu0 %1233
      %1237 = vset.pattern.permute.xlu0 0
      %1238 = vperm.xlu0 %1237, %v672
      %v1239 = vpop.permute.xlu0 %1238
      %1242 = vset.pattern.permute.xlu0 0
      %1243 = vperm.xlu0 %1242, %v673
      %v1244 = vpop.permute.xlu0 %1243
      %1247 = vset.pattern.permute.xlu0 0
      %1248 = vperm.xlu0 %1247, %v674
      %v1249 = vpop.permute.xlu0 %1248
      %1252 = vset.pattern.permute.xlu0 0
      %1253 = vperm.xlu0 %1252, %v675
      %v1254 = vpop.permute.xlu0 %1253
      %1257 = vset.pattern.permute.xlu0 0
      %1258 = vperm.xlu0 %1257, %v676
      %v1259 = vpop.permute.xlu0 %1258
      %1262 = vset.pattern.permute.xlu0 0
      %1263 = vperm.xlu0 %1262, %v677
      %v1264 = vpop.permute.xlu0 %1263
      %1267 = vset.pattern.permute.xlu0 0
      %1268 = vperm.xlu0 %1267, %v678
      %v1269 = vpop.permute.xlu0 %1268
      %1272 = vset.pattern.permute.xlu0 0
      %1273 = vperm.xlu0 %1272, %v679
      %v1274 = vpop.permute.xlu0 %1273
      %1277 = vset.pattern.permute.xlu0 0
      %1278 = vperm.xlu0 %1277, %v680
      %v1279 = vpop.permute.xlu0 %1278
      %1282 = vset.pattern.permute.xlu0 0
      %1283 = vperm.xlu0 %1282, %v681
      %v1284 = vpop.permute.xlu0 %1283
      %1287 = vset.pattern.permute.xlu0 0
      %1288 = vperm.xlu0 %1287, %v682
      %v1289 = vpop.permute.xlu0 %1288
      %1292 = vset.pattern.permute.xlu0 0
      %1293 = vperm.xlu0 %1292, %v683
      %v1294 = vpop.permute.xlu0 %1293
      %1297 = vset.pattern.permute.xlu0 0
      %1298 = vperm.xlu0 %1297, %v684
      %v1299 = vpop.permute.xlu0 %1298
      %1302 = vset.pattern.permute.xlu0 0
      %1303 = vperm.xlu0 %1302, %v685
      %v1304 = vpop.permute.xlu0 %1303
      %1307 = vset.pattern.permute.xlu0 0
      %1308 = vperm.xlu0 %1307, %v686
      %v1309 = vpop.permute.xlu0 %1308
      %1312 = vset.pattern.permute.xlu0 0
      %1313 = vperm.xlu0 %1312, %v687
      %v1314 = vpop.permute.xlu0 %1313
      %1317 = vset.pattern.permute.xlu0 0
      %1318 = vperm.xlu0 %1317, %v688
      %v1319 = vpop.permute.xlu0 %1318
      %1322 = vset.pattern.permute.xlu0 0
      %1323 = vperm.xlu0 %1322, %v689
      %v1324 = vpop.permute.xlu0 %1323
      %1327 = vset.pattern.permute.xlu0 0
      %1328 = vperm.xlu0 %1327, %v690
      %v1329 = vpop.permute.xlu0 %1328
      %1332 = vset.pattern.permute.xlu0 0
      %1333 = vperm.xlu0 %1332, %v691
      %v1334 = vpop.permute.xlu0 %1333
      %1337 = vset.pattern.permute.xlu0 0
      %1338 = vperm.xlu0 %1337, %v692
      %v1339 = vpop.permute.xlu0 %1338
      %1342 = vset.pattern.permute.xlu0 0
      %1343 = vperm.xlu0 %1342, %v693
      %v1344 = vpop.permute.xlu0 %1343
      %1347 = vset.pattern.permute.xlu0 0
      %1348 = vperm.xlu0 %1347, %v694
      %v1349 = vpop.permute.xlu0 %1348
      %1352 = vset.pattern.permute.xlu0 0
      %1353 = vperm.xlu0 %1352, %v695
      %v1354 = vpop.permute.xlu0 %1353
      %1357 = vset.pattern.permute.xlu0 0
      %1358 = vperm.xlu0 %1357, %v696
      %v1359 = vpop.permute.xlu0 %1358
      %1362 = vset.pattern.permute.xlu0 0
      %1363 = vperm.xlu0 %1362, %v697
      %v1364 = vpop.permute.xlu0 %1363
      %1367 = vset.pattern.permute.xlu0 0
      %1368 = vperm.xlu0 %1367, %v698
      %v1369 = vpop.permute.xlu0 %1368
      %1372 = vset.pattern.permute.xlu0 0
      %1373 = vperm.xlu0 %1372, %v699
      %v1374 = vpop.permute.xlu0 %1373
      %1377 = vset.pattern.permute.xlu0 0
      %1378 = vperm.xlu0 %1377, %v700
      %v1379 = vpop.permute.xlu0 %1378
      %1382 = vset.pattern.permute.xlu0 0
      %1383 = vperm.xlu0 %1382, %v701
      %v1384 = vpop.permute.xlu0 %1383
      %1387 = vset.pattern.permute.xlu0 0
      %1388 = vperm.xlu0 %1387, %v702
      %v1389 = vpop.permute.xlu0 %1388
      %1392 = vset.pattern.permute.xlu0 0
      %1393 = vperm.xlu0 %1392, %v703
      %v1394 = vpop.permute.xlu0 %1393
      %1397 = vset.pattern.permute.xlu0 0
      %1398 = vperm.xlu0 %1397, %v704
      %v1399 = vpop.permute.xlu0 %1398
      %1402 = vset.pattern.permute.xlu0 0
      %1403 = vperm.xlu0 %1402, %v705
      %v1404 = vpop.permute.xlu0 %1403
      %1407 = vset.pattern.permute.xlu0 0
      %1408 = vperm.xlu0 %1407, %v706
      %v1409 = vpop.permute.xlu0 %1408
      %1412 = vset.pattern.permute.xlu0 0
      %1413 = vperm.xlu0 %1412, %v707
      %v1414 = vpop.permute.xlu0 %1413
      %1417 = vset.pattern.permute.xlu0 0
      %1418 = vperm.xlu0 %1417, %v708
      %v1419 = vpop.permute.xlu0 %1418
      %1422 = vset.pattern.permute.xlu0 0
      %1423 = vperm.xlu0 %1422, %v709
      %v1424 = vpop.permute.xlu0 %1423
      %1427 = vset.pattern.permute.xlu0 0
      %1428 = vperm.xlu0 %1427, %v710
      %v1429 = vpop.permute.xlu0 %1428
      %1432 = vset.pattern.permute.xlu0 0
      %1433 = vperm.xlu0 %1432, %v711
      %v1434 = vpop.permute.xlu0 %1433
      %1437 = vset.pattern.permute.xlu0 0
      %1438 = vperm.xlu0 %1437, %v712
      %v1439 = vpop.permute.xlu0 %1438
      %1442 = vset.pattern.permute.xlu0 0
      %1443 = vperm.xlu0 %1442, %v713
      %v1444 = vpop.permute.xlu0 %1443
      %1447 = vset.pattern.permute.xlu0 0
      %1448 = vperm.xlu0 %1447, %v714
      %v1449 = vpop.permute.xlu0 %1448
      %v1835 = vunpack.c.l.b16 %v203
      %v1836 = vunpack.c.h.b16 %v203
      %v1837 = vunpack.c.l.b16 %v204
      %v1838 = vunpack.c.h.b16 %v204
      %v1839 = vunpack.c.l.b16 %v205
      %v1840 = vunpack.c.h.b16 %v205
      %v1841 = vunpack.c.l.b16 %v206
      %v1842 = vunpack.c.h.b16 %v206
      %v1843 = vunpack.c.l.b16 %v207
      %v1844 = vunpack.c.h.b16 %v207
      %v1845 = vunpack.c.l.b16 %v208
      %v1846 = vunpack.c.h.b16 %v208
      %v1847 = vunpack.c.l.b16 %v209
      %v1848 = vunpack.c.h.b16 %v209
      %v1849 = vunpack.c.l.b16 %v210
      %v1850 = vunpack.c.h.b16 %v210
      %v1851 = vunpack.c.l.b16 %v211
      %v1852 = vunpack.c.h.b16 %v211
      %v1853 = vunpack.c.l.b16 %v212
      %v1854 = vunpack.c.h.b16 %v212
      %v1855 = vunpack.c.l.b16 %v213
      %v1856 = vunpack.c.h.b16 %v213
      %v1857 = vunpack.c.l.b16 %v214
      %v1858 = vunpack.c.h.b16 %v214
      %v1859 = vunpack.c.l.b16 %v215
      %v1860 = vunpack.c.h.b16 %v215
      %v1861 = vunpack.c.l.b16 %v216
      %v1862 = vunpack.c.h.b16 %v216
      %v1863 = vunpack.c.l.b16 %v217
      %v1864 = vunpack.c.h.b16 %v217
      %v1865 = vunpack.c.l.b16 %v218
      %v1866 = vunpack.c.h.b16 %v218
      %v1867 = vunpack.c.l.b16 %v219
      %v1868 = vunpack.c.h.b16 %v219
      %v1869 = vunpack.c.l.b16 %v220
      %v1870 = vunpack.c.h.b16 %v220
      %v1871 = vunpack.c.l.b16 %v221
      %v1872 = vunpack.c.h.b16 %v221
      %v1873 = vunpack.c.l.b16 %v222
      %v1874 = vunpack.c.h.b16 %v222
      %v1875 = vunpack.c.l.b16 %v223
      %v1876 = vunpack.c.h.b16 %v223
      %v1877 = vunpack.c.l.b16 %v224
      %v1878 = vunpack.c.h.b16 %v224
      %v1879 = vunpack.c.l.b16 %v225
      %v1880 = vunpack.c.h.b16 %v225
      %v1881 = vunpack.c.l.b16 %v226
      %v1882 = vunpack.c.h.b16 %v226
      %v1883 = vunpack.c.l.b16 %v227
      %v1884 = vunpack.c.h.b16 %v227
      %v1885 = vunpack.c.l.b16 %v228
      %v1886 = vunpack.c.h.b16 %v228
      %v1887 = vunpack.c.l.b16 %v229
      %v1888 = vunpack.c.h.b16 %v229
      %v1889 = vunpack.c.l.b16 %v230
      %v1890 = vunpack.c.h.b16 %v230
      %v1891 = vunpack.c.l.b16 %v231
      %v1892 = vunpack.c.h.b16 %v231
      %v1893 = vunpack.c.l.b16 %v232
      %v1894 = vunpack.c.h.b16 %v232
      %v1895 = vunpack.c.l.b16 %v233
      %v1896 = vunpack.c.h.b16 %v233
      %v1897 = vunpack.c.l.b16 %v234
      %v1898 = vunpack.c.h.b16 %v234
      %v1899 = vunpack.c.l.b16 %v235
      %v1900 = vunpack.c.h.b16 %v235
      %v1901 = vunpack.c.l.b16 %v236
      %v1902 = vunpack.c.h.b16 %v236
      %v1903 = vunpack.c.l.b16 %v237
      %v1904 = vunpack.c.h.b16 %v237
      %v1905 = vunpack.c.l.b16 %v238
      %v1906 = vunpack.c.h.b16 %v238
      %v1907 = vunpack.c.l.b16 %v239
      %v1908 = vunpack.c.h.b16 %v239
      %v1909 = vunpack.c.l.b16 %v240
      %v1910 = vunpack.c.h.b16 %v240
      %v1911 = vunpack.c.l.b16 %v241
      %v1912 = vunpack.c.h.b16 %v241
      %v1913 = vunpack.c.l.b16 %v242
      %v1914 = vunpack.c.h.b16 %v242
      %v1915 = vunpack.c.l.b16 %v243
      %v1916 = vunpack.c.h.b16 %v243
      %v1917 = vunpack.c.l.b16 %v244
      %v1918 = vunpack.c.h.b16 %v244
      %v1919 = vunpack.c.l.b16 %v245
      %v1920 = vunpack.c.h.b16 %v245
      %v1921 = vunpack.c.l.b16 %v246
      %v1922 = vunpack.c.h.b16 %v246
      %v1923 = vunpack.c.l.b16 %v247
      %v1924 = vunpack.c.h.b16 %v247
      %v1925 = vunpack.c.l.b16 %v248
      %v1926 = vunpack.c.h.b16 %v248
      %v1927 = vunpack.c.l.b16 %v249
      %v1928 = vunpack.c.h.b16 %v249
      %v1929 = vunpack.c.l.b16 %v250
      %v1930 = vunpack.c.h.b16 %v250
      %v1931 = vunpack.c.l.b16 %v251
      %v1932 = vunpack.c.h.b16 %v251
      %v1933 = vunpack.c.l.b16 %v252
      %v1934 = vunpack.c.h.b16 %v252
      %v1935 = vunpack.c.l.b16 %v253
      %v1936 = vunpack.c.h.b16 %v253
      %v1937 = vunpack.c.l.b16 %v254
      %v1938 = vunpack.c.h.b16 %v254
      %v1939 = vunpack.c.l.b16 %v255
      %v1940 = vunpack.c.h.b16 %v255
      %v1941 = vunpack.c.l.b16 %v256
      %v1942 = vunpack.c.h.b16 %v256
      %v1943 = vunpack.c.l.b16 %v257
      %v1944 = vunpack.c.h.b16 %v257
      %v1945 = vunpack.c.l.b16 %v258
      %v1946 = vunpack.c.h.b16 %v258
      %v1947 = vunpack.c.l.b16 %v259
      %v1948 = vunpack.c.h.b16 %v259
      %v1949 = vunpack.c.l.b16 %v260
      %v1950 = vunpack.c.h.b16 %v260
      %v1951 = vunpack.c.l.b16 %v261
      %v1952 = vunpack.c.h.b16 %v261
      %v1953 = vunpack.c.l.b16 %v262
      %v1954 = vunpack.c.h.b16 %v262
      %v1955 = vunpack.c.l.b16 %v263
      %v1956 = vunpack.c.h.b16 %v263
      %v1957 = vunpack.c.l.b16 %v264
      %v1958 = vunpack.c.h.b16 %v264
      %v1959 = vunpack.c.l.b16 %v265
      %v1960 = vunpack.c.h.b16 %v265
      %v1961 = vunpack.c.l.b16 %v266
      %v1962 = vunpack.c.h.b16 %v266
      %v1963 = vunpack.c.l.b16 %v267
      %v1964 = vunpack.c.h.b16 %v267
      %v1965 = vunpack.c.l.b16 %v268
      %v1966 = vunpack.c.h.b16 %v268
      %v1967 = vunpack.c.l.b16 %v269
      %v1968 = vunpack.c.h.b16 %v269
      %v1969 = vunpack.c.l.b16 %v270
      %v1970 = vunpack.c.h.b16 %v270
      %v1971 = vunpack.c.l.b16 %v271
      %v1972 = vunpack.c.h.b16 %v271
      %v1973 = vunpack.c.l.b16 %v272
      %v1974 = vunpack.c.h.b16 %v272
      %v1975 = vunpack.c.l.b16 %v273
      %v1976 = vunpack.c.h.b16 %v273
      %v1977 = vunpack.c.l.b16 %v274
      %v1978 = vunpack.c.h.b16 %v274
      %v1979 = vunpack.c.l.b16 %v275
      %v1980 = vunpack.c.h.b16 %v275
      %v1981 = vunpack.c.l.b16 %v276
      %v1982 = vunpack.c.h.b16 %v276
      %v1983 = vunpack.c.l.b16 %v277
      %v1984 = vunpack.c.h.b16 %v277
      %v1985 = vunpack.c.l.b16 %v278
      %v1986 = vunpack.c.h.b16 %v278
      %v1987 = vunpack.c.l.b16 %v279
      %v1988 = vunpack.c.h.b16 %v279
      %v1989 = vunpack.c.l.b16 %v280
      %v1990 = vunpack.c.h.b16 %v280
      %v1991 = vunpack.c.l.b16 %v281
      %v1992 = vunpack.c.h.b16 %v281
      %v1993 = vunpack.c.l.b16 %v282
      %v1994 = vunpack.c.h.b16 %v282
      %v1995 = vunpack.c.l.b16 %v283
      %v1996 = vunpack.c.h.b16 %v283
      %v1997 = vunpack.c.l.b16 %v284
      %v1998 = vunpack.c.h.b16 %v284
      %v1999 = vunpack.c.l.b16 %v285
      %v2000 = vunpack.c.h.b16 %v285
      %v2001 = vunpack.c.l.b16 %v286
      %v2002 = vunpack.c.h.b16 %v286
      %v2003 = vunpack.c.l.b16 %v287
      %v2004 = vunpack.c.h.b16 %v287
      %v2005 = vunpack.c.l.b16 %v288
      %v2006 = vunpack.c.h.b16 %v288
      %v2007 = vunpack.c.l.b16 %v289
      %v2008 = vunpack.c.h.b16 %v289
      %v2009 = vunpack.c.l.b16 %v290
      %v2010 = vunpack.c.h.b16 %v290
      %v2011 = vunpack.c.l.b16 %v291
      %v2012 = vunpack.c.h.b16 %v291
      %v2013 = vunpack.c.l.b16 %v292
      %v2014 = vunpack.c.h.b16 %v292
      %v2015 = vunpack.c.l.b16 %v293
      %v2016 = vunpack.c.h.b16 %v293
      %v2017 = vunpack.c.l.b16 %v294
      %v2018 = vunpack.c.h.b16 %v294
      %v2019 = vunpack.c.l.b16 %v295
      %v2020 = vunpack.c.h.b16 %v295
      %v2021 = vunpack.c.l.b16 %v296
      %v2022 = vunpack.c.h.b16 %v296
      %v2023 = vunpack.c.l.b16 %v297
      %v2024 = vunpack.c.h.b16 %v297
      %v2025 = vunpack.c.l.b16 %v298
      %v2026 = vunpack.c.h.b16 %v298
      %v2027 = vunpack.c.l.b16 %v299
      %v2028 = vunpack.c.h.b16 %v299
      %v2029 = vunpack.c.l.b16 %v300
      %v2030 = vunpack.c.h.b16 %v300
      %v2031 = vunpack.c.l.b16 %v301
      %v2032 = vunpack.c.h.b16 %v301
      %v2033 = vunpack.c.l.b16 %v302
      %v2034 = vunpack.c.h.b16 %v302
      %v2035 = vunpack.c.l.b16 %v303
      %v2036 = vunpack.c.h.b16 %v303
      %v2037 = vunpack.c.l.b16 %v304
      %v2038 = vunpack.c.h.b16 %v304
      %v2039 = vunpack.c.l.b16 %v305
      %v2040 = vunpack.c.h.b16 %v305
      %v2041 = vunpack.c.l.b16 %v306
      %v2042 = vunpack.c.h.b16 %v306
      %v2043 = vunpack.c.l.b16 %v307
      %v2044 = vunpack.c.h.b16 %v307
      %v2045 = vunpack.c.l.b16 %v308
      %v2046 = vunpack.c.h.b16 %v308
      %v2047 = vunpack.c.l.b16 %v309
      %v2048 = vunpack.c.h.b16 %v309
      %v2049 = vunpack.c.l.b16 %v310
      %v2050 = vunpack.c.h.b16 %v310
      %v2051 = vunpack.c.l.b16 %v311
      %v2052 = vunpack.c.h.b16 %v311
      %v2053 = vunpack.c.l.b16 %v312
      %v2054 = vunpack.c.h.b16 %v312
      %v2055 = vunpack.c.l.b16 %v313
      %v2056 = vunpack.c.h.b16 %v313
      %v2057 = vunpack.c.l.b16 %v314
      %v2058 = vunpack.c.h.b16 %v314
      %v2059 = vunpack.c.l.b16 %v315
      %v2060 = vunpack.c.h.b16 %v315
      %v2061 = vunpack.c.l.b16 %v316
      %v2062 = vunpack.c.h.b16 %v316
      %v2063 = vunpack.c.l.b16 %v317
      %v2064 = vunpack.c.h.b16 %v317
      %v2065 = vunpack.c.l.b16 %v318
      %v2066 = vunpack.c.h.b16 %v318
      %v2067 = vunpack.c.l.b16 %v319
      %v2068 = vunpack.c.h.b16 %v319
      %v2069 = vunpack.c.l.b16 %v320
      %v2070 = vunpack.c.h.b16 %v320
      %v2071 = vunpack.c.l.b16 %v321
      %v2072 = vunpack.c.h.b16 %v321
      %v2073 = vunpack.c.l.b16 %v322
      %v2074 = vunpack.c.h.b16 %v322
      %v2075 = vunpack.c.l.b16 %v323
      %v2076 = vunpack.c.h.b16 %v323
      %v2077 = vunpack.c.l.b16 %v324
      %v2078 = vunpack.c.h.b16 %v324
      %v2079 = vunpack.c.l.b16 %v325
      %v2080 = vunpack.c.h.b16 %v325
      %v2081 = vunpack.c.l.b16 %v326
      %v2082 = vunpack.c.h.b16 %v326
      %v2083 = vunpack.c.l.b16 %v327
      %v2084 = vunpack.c.h.b16 %v327
      %v2085 = vunpack.c.l.b16 %v328
      %v2086 = vunpack.c.h.b16 %v328
      %v2087 = vunpack.c.l.b16 %v329
      %v2088 = vunpack.c.h.b16 %v329
      %v2089 = vunpack.c.l.b16 %v330
      %v2090 = vunpack.c.h.b16 %v330
      %v2091 = vunpack.c.l.b16 %v331
      %v2092 = vunpack.c.h.b16 %v331
      %v2093 = vunpack.c.l.b16 %v332
      %v2094 = vunpack.c.h.b16 %v332
      %v2095 = vunpack.c.l.b16 %v333
      %v2096 = vunpack.c.h.b16 %v333
      %v2097 = vunpack.c.l.b16 %v334
      %v2098 = vunpack.c.h.b16 %v334
      %v2099 = vunpack.c.l.b16 %v335
      %v2100 = vunpack.c.h.b16 %v335
      %v2101 = vunpack.c.l.b16 %v336
      %v2102 = vunpack.c.h.b16 %v336
      %v2103 = vunpack.c.l.b16 %v337
      %v2104 = vunpack.c.h.b16 %v337
      %v2105 = vunpack.c.l.b16 %v338
      %v2106 = vunpack.c.h.b16 %v338
      %v2107 = vunpack.c.l.b16 %v339
      %v2108 = vunpack.c.h.b16 %v339
      %v2109 = vunpack.c.l.b16 %v340
      %v2110 = vunpack.c.h.b16 %v340
      %v2111 = vunpack.c.l.b16 %v341
      %v2112 = vunpack.c.h.b16 %v341
      %v2113 = vunpack.c.l.b16 %v342
      %v2114 = vunpack.c.h.b16 %v342
      %v2115 = vunpack.c.l.b16 %v343
      %v2116 = vunpack.c.h.b16 %v343
      %v2117 = vunpack.c.l.b16 %v344
      %v2118 = vunpack.c.h.b16 %v344
      %v2119 = vunpack.c.l.b16 %v345
      %v2120 = vunpack.c.h.b16 %v345
      %v2121 = vunpack.c.l.b16 %v346
      %v2122 = vunpack.c.h.b16 %v346
      %v2123 = vunpack.c.l.b16 %v347
      %v2124 = vunpack.c.h.b16 %v347
      %v2125 = vunpack.c.l.b16 %v348
      %v2126 = vunpack.c.h.b16 %v348
      %v2127 = vunpack.c.l.b16 %v349
      %v2128 = vunpack.c.h.b16 %v349
      %v2129 = vunpack.c.l.b16 %v350
      %v2130 = vunpack.c.h.b16 %v350
      %v2131 = vunpack.c.l.b16 %v351
      %v2132 = vunpack.c.h.b16 %v351
      %v2133 = vunpack.c.l.b16 %v352
      %v2134 = vunpack.c.h.b16 %v352
      %v2135 = vunpack.c.l.b16 %v353
      %v2136 = vunpack.c.h.b16 %v353
      %v2137 = vunpack.c.l.b16 %v354
      %v2138 = vunpack.c.h.b16 %v354
      %v2139 = vunpack.c.l.b16 %v355
      %v2140 = vunpack.c.h.b16 %v355
      %v2141 = vunpack.c.l.b16 %v356
      %v2142 = vunpack.c.h.b16 %v356
      %v2143 = vunpack.c.l.b16 %v357
      %v2144 = vunpack.c.h.b16 %v357
      %v2145 = vunpack.c.l.b16 %v358
      %v2146 = vunpack.c.h.b16 %v358
      %v2147 = vunpack.c.l.b16 %v359
      %v2148 = vunpack.c.h.b16 %v359
      %v2149 = vunpack.c.l.b16 %v360
      %v2150 = vunpack.c.h.b16 %v360
      %v2151 = vunpack.c.l.b16 %v361
      %v2152 = vunpack.c.h.b16 %v361
      %v2153 = vunpack.c.l.b16 %v362
      %v2154 = vunpack.c.h.b16 %v362
      %v2155 = vunpack.c.l.b16 %v363
      %v2156 = vunpack.c.h.b16 %v363
      %v2157 = vunpack.c.l.b16 %v364
      %v2158 = vunpack.c.h.b16 %v364
      %v2159 = vunpack.c.l.b16 %v365
      %v2160 = vunpack.c.h.b16 %v365
      %v2161 = vunpack.c.l.b16 %v366
      %v2162 = vunpack.c.h.b16 %v366
      %v2163 = vunpack.c.l.b16 %v367
      %v2164 = vunpack.c.h.b16 %v367
      %v2165 = vunpack.c.l.b16 %v368
      %v2166 = vunpack.c.h.b16 %v368
      %v2167 = vunpack.c.l.b16 %v369
      %v2168 = vunpack.c.h.b16 %v369
      %v2169 = vunpack.c.l.b16 %v370
      %v2170 = vunpack.c.h.b16 %v370
      %v2171 = vunpack.c.l.b16 %v371
      %v2172 = vunpack.c.h.b16 %v371
      %v2173 = vunpack.c.l.b16 %v372
      %v2174 = vunpack.c.h.b16 %v372
      %v2175 = vunpack.c.l.b16 %v373
      %v2176 = vunpack.c.h.b16 %v373
      %v2177 = vunpack.c.l.b16 %v374
      %v2178 = vunpack.c.h.b16 %v374
      %v2179 = vunpack.c.l.b16 %v375
      %v2180 = vunpack.c.h.b16 %v375
      %v2181 = vunpack.c.l.b16 %v376
      %v2182 = vunpack.c.h.b16 %v376
      %v2183 = vunpack.c.l.b16 %v377
      %v2184 = vunpack.c.h.b16 %v377
      %v2185 = vunpack.c.l.b16 %v378
      %v2186 = vunpack.c.h.b16 %v378
      %v2187 = vunpack.c.l.b16 %v379
      %v2188 = vunpack.c.h.b16 %v379
      %v2189 = vunpack.c.l.b16 %v380
      %v2190 = vunpack.c.h.b16 %v380
      %v2191 = vunpack.c.l.b16 %v381
      %v2192 = vunpack.c.h.b16 %v381
      %v2193 = vunpack.c.l.b16 %v382
      %v2194 = vunpack.c.h.b16 %v382
      %v2195 = vunpack.c.l.b16 %v383
      %v2196 = vunpack.c.h.b16 %v383
      %v2197 = vunpack.c.l.b16 %v384
      %v2198 = vunpack.c.h.b16 %v384
      %v2199 = vunpack.c.l.b16 %v385
      %v2200 = vunpack.c.h.b16 %v385
      %v2201 = vunpack.c.l.b16 %v386
      %v2202 = vunpack.c.h.b16 %v386
      %v2203 = vunpack.c.l.b16 %v387
      %v2204 = vunpack.c.h.b16 %v387
      %v2205 = vunpack.c.l.b16 %v388
      %v2206 = vunpack.c.h.b16 %v388
      %v2207 = vunpack.c.l.b16 %v389
      %v2208 = vunpack.c.h.b16 %v389
      %v2209 = vunpack.c.l.b16 %v390
      %v2210 = vunpack.c.h.b16 %v390
      %v2211 = vunpack.c.l.b16 %v391
      %v2212 = vunpack.c.h.b16 %v391
      %v2213 = vunpack.c.l.b16 %v392
      %v2214 = vunpack.c.h.b16 %v392
      %v2215 = vunpack.c.l.b16 %v393
      %v2216 = vunpack.c.h.b16 %v393
      %v2217 = vunpack.c.l.b16 %v394
      %v2218 = vunpack.c.h.b16 %v394
      %v2219 = vunpack.c.l.b16 %v395
      %v2220 = vunpack.c.h.b16 %v395
      %v2221 = vunpack.c.l.b16 %v396
      %v2222 = vunpack.c.h.b16 %v396
      %v2223 = vunpack.c.l.b16 %v397
      %v2224 = vunpack.c.h.b16 %v397
      %v2225 = vunpack.c.l.b16 %v398
      %v2226 = vunpack.c.h.b16 %v398
      %v2227 = vunpack.c.l.b16 %v399
      %v2228 = vunpack.c.h.b16 %v399
      %v2229 = vunpack.c.l.b16 %v400
      %v2230 = vunpack.c.h.b16 %v400
      %v2231 = vunpack.c.l.b16 %v401
      %v2232 = vunpack.c.h.b16 %v401
      %v2233 = vunpack.c.l.b16 %v402
      %v2234 = vunpack.c.h.b16 %v402
      %v2235 = vunpack.c.l.b16 %v403
      %v2236 = vunpack.c.h.b16 %v403
      %v2237 = vunpack.c.l.b16 %v404
      %v2238 = vunpack.c.h.b16 %v404
      %v2239 = vunpack.c.l.b16 %v405
      %v2240 = vunpack.c.h.b16 %v405
      %v2241 = vunpack.c.l.b16 %v406
      %v2242 = vunpack.c.h.b16 %v406
      %v2243 = vunpack.c.l.b16 %v407
      %v2244 = vunpack.c.h.b16 %v407
      %v2245 = vunpack.c.l.b16 %v408
      %v2246 = vunpack.c.h.b16 %v408
      %v2247 = vunpack.c.l.b16 %v409
      %v2248 = vunpack.c.h.b16 %v409
      %v2249 = vunpack.c.l.b16 %v410
      %v2250 = vunpack.c.h.b16 %v410
      %v2251 = vunpack.c.l.b16 %v411
      %v2252 = vunpack.c.h.b16 %v411
      %v2253 = vunpack.c.l.b16 %v412
      %v2254 = vunpack.c.h.b16 %v412
      %v2255 = vunpack.c.l.b16 %v413
      %v2256 = vunpack.c.h.b16 %v413
      %v2257 = vunpack.c.l.b16 %v414
      %v2258 = vunpack.c.h.b16 %v414
      %v2259 = vunpack.c.l.b16 %v415
      %v2260 = vunpack.c.h.b16 %v415
      %v2261 = vunpack.c.l.b16 %v416
      %v2262 = vunpack.c.h.b16 %v416
      %v2263 = vunpack.c.l.b16 %v417
      %v2264 = vunpack.c.h.b16 %v417
      %v2265 = vunpack.c.l.b16 %v418
      %v2266 = vunpack.c.h.b16 %v418
      %v2267 = vunpack.c.l.b16 %v419
      %v2268 = vunpack.c.h.b16 %v419
      %v2269 = vunpack.c.l.b16 %v420
      %v2270 = vunpack.c.h.b16 %v420
      %v2271 = vunpack.c.l.b16 %v421
      %v2272 = vunpack.c.h.b16 %v421
      %v2273 = vunpack.c.l.b16 %v422
      %v2274 = vunpack.c.h.b16 %v422
      %v2275 = vunpack.c.l.b16 %v423
      %v2276 = vunpack.c.h.b16 %v423
      %v2277 = vunpack.c.l.b16 %v424
      %v2278 = vunpack.c.h.b16 %v424
      %v2279 = vunpack.c.l.b16 %v425
      %v2280 = vunpack.c.h.b16 %v425
      %v2281 = vunpack.c.l.b16 %v426
      %v2282 = vunpack.c.h.b16 %v426
      %v2283 = vunpack.c.l.b16 %v427
      %v2284 = vunpack.c.h.b16 %v427
      %v2285 = vunpack.c.l.b16 %v428
      %v2286 = vunpack.c.h.b16 %v428
      %v2287 = vunpack.c.l.b16 %v429
      %v2288 = vunpack.c.h.b16 %v429
      %v2289 = vunpack.c.l.b16 %v430
      %v2290 = vunpack.c.h.b16 %v430
      %v2291 = vunpack.c.l.b16 %v431
      %v2292 = vunpack.c.h.b16 %v431
      %v2293 = vunpack.c.l.b16 %v432
      %v2294 = vunpack.c.h.b16 %v432
      %v2295 = vunpack.c.l.b16 %v433
      %v2296 = vunpack.c.h.b16 %v433
      %v2297 = vunpack.c.l.b16 %v434
      %v2298 = vunpack.c.h.b16 %v434
      %v2299 = vunpack.c.l.b16 %v435
      %v2300 = vunpack.c.h.b16 %v435
      %v2301 = vunpack.c.l.b16 %v436
      %v2302 = vunpack.c.h.b16 %v436
      %v2303 = vunpack.c.l.b16 %v437
      %v2304 = vunpack.c.h.b16 %v437
      %v2305 = vunpack.c.l.b16 %v438
      %v2306 = vunpack.c.h.b16 %v438
      %v2307 = vunpack.c.l.b16 %v439
      %v2308 = vunpack.c.h.b16 %v439
      %v2309 = vunpack.c.l.b16 %v440
      %v2310 = vunpack.c.h.b16 %v440
      %v2311 = vunpack.c.l.b16 %v441
      %v2312 = vunpack.c.h.b16 %v441
      %v2313 = vunpack.c.l.b16 %v442
      %v2314 = vunpack.c.h.b16 %v442
      %v2315 = vunpack.c.l.b16 %v443
      %v2316 = vunpack.c.h.b16 %v443
      %v2317 = vunpack.c.l.b16 %v444
      %v2318 = vunpack.c.h.b16 %v444
      %v2319 = vunpack.c.l.b16 %v445
      %v2320 = vunpack.c.h.b16 %v445
      %v2321 = vunpack.c.l.b16 %v446
      %v2322 = vunpack.c.h.b16 %v446
      %v2323 = vunpack.c.l.b16 %v447
      %v2324 = vunpack.c.h.b16 %v447
      %v2325 = vunpack.c.l.b16 %v448
      %v2326 = vunpack.c.h.b16 %v448
      %v2327 = vunpack.c.l.b16 %v449
      %v2328 = vunpack.c.h.b16 %v449
      %v2329 = vunpack.c.l.b16 %v450
      %v2330 = vunpack.c.h.b16 %v450
      %v2331 = vunpack.c.l.b16 %v451
      %v2332 = vunpack.c.h.b16 %v451
      %v2333 = vunpack.c.l.b16 %v452
      %v2334 = vunpack.c.h.b16 %v452
      %v2335 = vunpack.c.l.b16 %v453
      %v2336 = vunpack.c.h.b16 %v453
      %v2337 = vunpack.c.l.b16 %v454
      %v2338 = vunpack.c.h.b16 %v454
      %v2339 = vunpack.c.l.b16 %v455
      %v2340 = vunpack.c.h.b16 %v455
      %v2341 = vunpack.c.l.b16 %v456
      %v2342 = vunpack.c.h.b16 %v456
      %v2343 = vunpack.c.l.b16 %v457
      %v2344 = vunpack.c.h.b16 %v457
      %v2345 = vunpack.c.l.b16 %v458
      %v2346 = vunpack.c.h.b16 %v458
      %v2347 = vunpack.c.l.b16 %v459
      %v2348 = vunpack.c.h.b16 %v459
      %v2349 = vunpack.c.l.b16 %v460
      %v2350 = vunpack.c.h.b16 %v460
      %v2351 = vunpack.c.l.b16 %v461
      %v2352 = vunpack.c.h.b16 %v461
      %v2353 = vunpack.c.l.b16 %v462
      %v2354 = vunpack.c.h.b16 %v462
      %v2355 = vunpack.c.l.b16 %v463
      %v2356 = vunpack.c.h.b16 %v463
      %v2357 = vunpack.c.l.b16 %v464
      %v2358 = vunpack.c.h.b16 %v464
      %v2359 = vunpack.c.l.b16 %v465
      %v2360 = vunpack.c.h.b16 %v465
      %v2361 = vunpack.c.l.b16 %v466
      %v2362 = vunpack.c.h.b16 %v466
      %v2363 = vunpack.c.l.b16 %v467
      %v2364 = vunpack.c.h.b16 %v467
      %v2365 = vunpack.c.l.b16 %v468
      %v2366 = vunpack.c.h.b16 %v468
      %v2367 = vunpack.c.l.b16 %v469
      %v2368 = vunpack.c.h.b16 %v469
      %v2369 = vunpack.c.l.b16 %v470
      %v2370 = vunpack.c.h.b16 %v470
      %v2371 = vunpack.c.l.b16 %v471
      %v2372 = vunpack.c.h.b16 %v471
      %v2373 = vunpack.c.l.b16 %v472
      %v2374 = vunpack.c.h.b16 %v472
      %v2375 = vunpack.c.l.b16 %v473
      %v2376 = vunpack.c.h.b16 %v473
      %v2377 = vunpack.c.l.b16 %v474
      %v2378 = vunpack.c.h.b16 %v474
      %v2379 = vunpack.c.l.b16 %v475
      %v2380 = vunpack.c.h.b16 %v475
      %v2381 = vunpack.c.l.b16 %v476
      %v2382 = vunpack.c.h.b16 %v476
      %v2383 = vunpack.c.l.b16 %v477
      %v2384 = vunpack.c.h.b16 %v477
      %v2385 = vunpack.c.l.b16 %v478
      %v2386 = vunpack.c.h.b16 %v478
      %v2387 = vunpack.c.l.b16 %v479
      %v2388 = vunpack.c.h.b16 %v479
      %v2389 = vunpack.c.l.b16 %v480
      %v2390 = vunpack.c.h.b16 %v480
      %v2391 = vunpack.c.l.b16 %v481
      %v2392 = vunpack.c.h.b16 %v481
      %v2393 = vunpack.c.l.b16 %v482
      %v2394 = vunpack.c.h.b16 %v482
      %v2395 = vunpack.c.l.b16 %v483
      %v2396 = vunpack.c.h.b16 %v483
      %v2397 = vunpack.c.l.b16 %v484
      %v2398 = vunpack.c.h.b16 %v484
      %v2399 = vunpack.c.l.b16 %v485
      %v2400 = vunpack.c.h.b16 %v485
      %v2401 = vunpack.c.l.b16 %v486
      %v2402 = vunpack.c.h.b16 %v486
      %v2403 = vunpack.c.l.b16 %v487
      %v2404 = vunpack.c.h.b16 %v487
      %v2405 = vunpack.c.l.b16 %v488
      %v2406 = vunpack.c.h.b16 %v488
      %v2407 = vunpack.c.l.b16 %v489
      %v2408 = vunpack.c.h.b16 %v489
      %v2409 = vunpack.c.l.b16 %v490
      %v2410 = vunpack.c.h.b16 %v490
      %v2411 = vunpack.c.l.b16 %v491
      %v2412 = vunpack.c.h.b16 %v491
      %v2413 = vunpack.c.l.b16 %v492
      %v2414 = vunpack.c.h.b16 %v492
      %v2415 = vunpack.c.l.b16 %v493
      %v2416 = vunpack.c.h.b16 %v493
      %v2417 = vunpack.c.l.b16 %v494
      %v2418 = vunpack.c.h.b16 %v494
      %v2419 = vunpack.c.l.b16 %v495
      %v2420 = vunpack.c.h.b16 %v495
      %v2421 = vunpack.c.l.b16 %v496
      %v2422 = vunpack.c.h.b16 %v496
      %v2423 = vunpack.c.l.b16 %v497
      %v2424 = vunpack.c.h.b16 %v497
      %v2425 = vunpack.c.l.b16 %v498
      %v2426 = vunpack.c.h.b16 %v498
      %v2427 = vunpack.c.l.b16 %v499
      %v2428 = vunpack.c.h.b16 %v499
      %v2429 = vunpack.c.l.b16 %v500
      %v2430 = vunpack.c.h.b16 %v500
      %v2431 = vunpack.c.l.b16 %v501
      %v2432 = vunpack.c.h.b16 %v501
      %v2433 = vunpack.c.l.b16 %v502
      %v2434 = vunpack.c.h.b16 %v502
      %v2435 = vunpack.c.l.b16 %v503
      %v2436 = vunpack.c.h.b16 %v503
      %v2437 = vunpack.c.l.b16 %v504
      %v2438 = vunpack.c.h.b16 %v504
      %v2439 = vunpack.c.l.b16 %v505
      %v2440 = vunpack.c.h.b16 %v505
      %v2441 = vunpack.c.l.b16 %v506
      %v2442 = vunpack.c.h.b16 %v506
      %v2443 = vunpack.c.l.b16 %v507
      %v2444 = vunpack.c.h.b16 %v507
      %v2445 = vunpack.c.l.b16 %v508
      %v2446 = vunpack.c.h.b16 %v508
      %v2447 = vunpack.c.l.b16 %v509
      %v2448 = vunpack.c.h.b16 %v509
      %v2449 = vunpack.c.l.b16 %v510
      %v2450 = vunpack.c.h.b16 %v510
      %v2451 = vunpack.c.l.b16 %v511
      %v2452 = vunpack.c.h.b16 %v511
      %v2453 = vunpack.c.l.b16 %v512
      %v2454 = vunpack.c.h.b16 %v512
      %v2455 = vunpack.c.l.b16 %v513
      %v2456 = vunpack.c.h.b16 %v513
      %v2457 = vunpack.c.l.b16 %v514
      %v2458 = vunpack.c.h.b16 %v514
      %v2459 = vunpack.c.l.b16 %v515
      %v2460 = vunpack.c.h.b16 %v515
      %v2461 = vunpack.c.l.b16 %v516
      %v2462 = vunpack.c.h.b16 %v516
      %v2463 = vunpack.c.l.b16 %v517
      %v2464 = vunpack.c.h.b16 %v517
      %v2465 = vunpack.c.l.b16 %v518
      %v2466 = vunpack.c.h.b16 %v518
      %v2467 = vunpack.c.l.b16 %v519
      %v2468 = vunpack.c.h.b16 %v519
      %v2469 = vunpack.c.l.b16 %v520
      %v2470 = vunpack.c.h.b16 %v520
      %v2471 = vunpack.c.l.b16 %v521
      %v2472 = vunpack.c.h.b16 %v521
      %v2473 = vunpack.c.l.b16 %v522
      %v2474 = vunpack.c.h.b16 %v522
      %v2475 = vunpack.c.l.b16 %v523
      %v2476 = vunpack.c.h.b16 %v523
      %v2477 = vunpack.c.l.b16 %v524
      %v2478 = vunpack.c.h.b16 %v524
      %v2479 = vunpack.c.l.b16 %v525
      %v2480 = vunpack.c.h.b16 %v525
      %v2481 = vunpack.c.l.b16 %v526
      %v2482 = vunpack.c.h.b16 %v526
      %v2483 = vunpack.c.l.b16 %v527
      %v2484 = vunpack.c.h.b16 %v527
      %v2485 = vunpack.c.l.b16 %v528
      %v2486 = vunpack.c.h.b16 %v528
      %v2487 = vunpack.c.l.b16 %v529
      %v2488 = vunpack.c.h.b16 %v529
      %v2489 = vunpack.c.l.b16 %v530
      %v2490 = vunpack.c.h.b16 %v530
      %v2491 = vunpack.c.l.b16 %v531
      %v2492 = vunpack.c.h.b16 %v531
      %v2493 = vunpack.c.l.b16 %v532
      %v2494 = vunpack.c.h.b16 %v532
      %v2495 = vunpack.c.l.b16 %v533
      %v2496 = vunpack.c.h.b16 %v533
      %v2497 = vunpack.c.l.b16 %v534
      %v2498 = vunpack.c.h.b16 %v534
      %v2499 = vunpack.c.l.b16 %v535
      %v2500 = vunpack.c.h.b16 %v535
      %v2501 = vunpack.c.l.b16 %v536
      %v2502 = vunpack.c.h.b16 %v536
      %v2503 = vunpack.c.l.b16 %v537
      %v2504 = vunpack.c.h.b16 %v537
      %v2505 = vunpack.c.l.b16 %v538
      %v2506 = vunpack.c.h.b16 %v538
      %v2507 = vunpack.c.l.b16 %v539
      %v2508 = vunpack.c.h.b16 %v539
      %v2509 = vunpack.c.l.b16 %v540
      %v2510 = vunpack.c.h.b16 %v540
      %v2511 = vunpack.c.l.b16 %v541
      %v2512 = vunpack.c.h.b16 %v541
      %v2513 = vunpack.c.l.b16 %v542
      %v2514 = vunpack.c.h.b16 %v542
      %v2515 = vunpack.c.l.b16 %v543
      %v2516 = vunpack.c.h.b16 %v543
      %v2517 = vunpack.c.l.b16 %v544
      %v2518 = vunpack.c.h.b16 %v544
      %v2519 = vunpack.c.l.b16 %v545
      %v2520 = vunpack.c.h.b16 %v545
      %v2521 = vunpack.c.l.b16 %v546
      %v2522 = vunpack.c.h.b16 %v546
      %v2523 = vunpack.c.l.b16 %v547
      %v2524 = vunpack.c.h.b16 %v547
      %v2525 = vunpack.c.l.b16 %v548
      %v2526 = vunpack.c.h.b16 %v548
      %v2527 = vunpack.c.l.b16 %v549
      %v2528 = vunpack.c.h.b16 %v549
      %v2529 = vunpack.c.l.b16 %v550
      %v2530 = vunpack.c.h.b16 %v550
      %v2531 = vunpack.c.l.b16 %v551
      %v2532 = vunpack.c.h.b16 %v551
      %v2533 = vunpack.c.l.b16 %v552
      %v2534 = vunpack.c.h.b16 %v552
      %v2535 = vunpack.c.l.b16 %v553
      %v2536 = vunpack.c.h.b16 %v553
      %v2537 = vunpack.c.l.b16 %v554
      %v2538 = vunpack.c.h.b16 %v554
      %v2539 = vunpack.c.l.b16 %v555
      %v2540 = vunpack.c.h.b16 %v555
      %v2541 = vunpack.c.l.b16 %v556
      %v2542 = vunpack.c.h.b16 %v556
      %v2543 = vunpack.c.l.b16 %v557
      %v2544 = vunpack.c.h.b16 %v557
      %v2545 = vunpack.c.l.b16 %v558
      %v2546 = vunpack.c.h.b16 %v558
      %v2547 = vunpack.c.l.b16 %v559
      %v2548 = vunpack.c.h.b16 %v559
      %v2549 = vunpack.c.l.b16 %v560
      %v2550 = vunpack.c.h.b16 %v560
      %v2551 = vunpack.c.l.b16 %v561
      %v2552 = vunpack.c.h.b16 %v561
      %v2553 = vunpack.c.l.b16 %v562
      %v2554 = vunpack.c.h.b16 %v562
      %v2555 = vunpack.c.l.b16 %v563
      %v2556 = vunpack.c.h.b16 %v563
      %v2557 = vunpack.c.l.b16 %v564
      %v2558 = vunpack.c.h.b16 %v564
      %v2559 = vunpack.c.l.b16 %v565
      %v2560 = vunpack.c.h.b16 %v565
      %v2561 = vunpack.c.l.b16 %v566
      %v2562 = vunpack.c.h.b16 %v566
      %v2563 = vunpack.c.l.b16 %v567
      %v2564 = vunpack.c.h.b16 %v567
      %v2565 = vunpack.c.l.b16 %v568
      %v2566 = vunpack.c.h.b16 %v568
      %v2567 = vunpack.c.l.b16 %v569
      %v2568 = vunpack.c.h.b16 %v569
      %v2569 = vunpack.c.l.b16 %v570
      %v2570 = vunpack.c.h.b16 %v570
      %v2571 = vunpack.c.l.b16 %v571
      %v2572 = vunpack.c.h.b16 %v571
      %v2573 = vunpack.c.l.b16 %v572
      %v2574 = vunpack.c.h.b16 %v572
      %v2575 = vunpack.c.l.b16 %v573
      %v2576 = vunpack.c.h.b16 %v573
      %v2577 = vunpack.c.l.b16 %v574
      %v2578 = vunpack.c.h.b16 %v574
      %v2579 = vunpack.c.l.b16 %v575
      %v2580 = vunpack.c.h.b16 %v575
      %v2581 = vunpack.c.l.b16 %v576
      %v2582 = vunpack.c.h.b16 %v576
      %v2583 = vunpack.c.l.b16 %v577
      %v2584 = vunpack.c.h.b16 %v577
      %v2585 = vunpack.c.l.b16 %v578
      %v2586 = vunpack.c.h.b16 %v578
      %v2587 = vunpack.c.l.b16 %v579
      %v2588 = vunpack.c.h.b16 %v579
      %v2589 = vunpack.c.l.b16 %v580
      %v2590 = vunpack.c.h.b16 %v580
      %v2591 = vunpack.c.l.b16 %v581
      %v2592 = vunpack.c.h.b16 %v581
      %v2593 = vunpack.c.l.b16 %v582
      %v2594 = vunpack.c.h.b16 %v582
      %v2595 = vunpack.c.l.b16 %v583
      %v2596 = vunpack.c.h.b16 %v583
      %v2597 = vunpack.c.l.b16 %v584
      %v2598 = vunpack.c.h.b16 %v584
      %v2599 = vunpack.c.l.b16 %v585
      %v2600 = vunpack.c.h.b16 %v585
      %v2601 = vunpack.c.l.b16 %v586
      %v2602 = vunpack.c.h.b16 %v586
      %v2603 = vpack.c.b16 %v1841, %v1835
      %v2604 = vpack.c.b16 %v1842, %v1836
      %v2605 = vpack.c.b16 %v1843, %v1837
      %v2606 = vpack.c.b16 %v1844, %v1838
      %v2607 = vpack.c.b16 %v1845, %v1839
      %v2608 = vpack.c.b16 %v1846, %v1840
      %v2609 = vpack.c.b16 %v1853, %v1847
      %v2610 = vpack.c.b16 %v1854, %v1848
      %v2611 = vpack.c.b16 %v1855, %v1849
      %v2612 = vpack.c.b16 %v1856, %v1850
      %v2613 = vpack.c.b16 %v1857, %v1851
      %v2614 = vpack.c.b16 %v1858, %v1852
      %v2615 = vpack.c.b16 %v1865, %v1859
      %v2616 = vpack.c.b16 %v1866, %v1860
      %v2617 = vpack.c.b16 %v1867, %v1861
      %v2618 = vpack.c.b16 %v1868, %v1862
      %v2619 = vpack.c.b16 %v1869, %v1863
      %v2620 = vpack.c.b16 %v1870, %v1864
      %v2621 = vpack.c.b16 %v1877, %v1871
      %v2622 = vpack.c.b16 %v1878, %v1872
      %v2623 = vpack.c.b16 %v1879, %v1873
      %v2624 = vpack.c.b16 %v1880, %v1874
      %v2625 = vpack.c.b16 %v1881, %v1875
      %v2626 = vpack.c.b16 %v1882, %v1876
      %v2627 = vpack.c.b16 %v1889, %v1883
      %v2628 = vpack.c.b16 %v1890, %v1884
      %v2629 = vpack.c.b16 %v1891, %v1885
      %v2630 = vpack.c.b16 %v1892, %v1886
      %v2631 = vpack.c.b16 %v1893, %v1887
      %v2632 = vpack.c.b16 %v1894, %v1888
      %v2633 = vpack.c.b16 %v1901, %v1895
      %v2634 = vpack.c.b16 %v1902, %v1896
      %v2635 = vpack.c.b16 %v1903, %v1897
      %v2636 = vpack.c.b16 %v1904, %v1898
      %v2637 = vpack.c.b16 %v1905, %v1899
      %v2638 = vpack.c.b16 %v1906, %v1900
      %v2639 = vpack.c.b16 %v1913, %v1907
      %v2640 = vpack.c.b16 %v1914, %v1908
      %v2641 = vpack.c.b16 %v1915, %v1909
      %v2642 = vpack.c.b16 %v1916, %v1910
      %v2643 = vpack.c.b16 %v1917, %v1911
      %v2644 = vpack.c.b16 %v1918, %v1912
      %v2645 = vpack.c.b16 %v1925, %v1919
      %v2646 = vpack.c.b16 %v1926, %v1920
      %v2647 = vpack.c.b16 %v1927, %v1921
      %v2648 = vpack.c.b16 %v1928, %v1922
      %v2649 = vpack.c.b16 %v1929, %v1923
      %v2650 = vpack.c.b16 %v1930, %v1924
      %v2651 = vpack.c.b16 %v1937, %v1931
      %v2652 = vpack.c.b16 %v1938, %v1932
      %v2653 = vpack.c.b16 %v1939, %v1933
      %v2654 = vpack.c.b16 %v1940, %v1934
      %v2655 = vpack.c.b16 %v1941, %v1935
      %v2656 = vpack.c.b16 %v1942, %v1936
      %v2657 = vpack.c.b16 %v1949, %v1943
      %v2658 = vpack.c.b16 %v1950, %v1944
      %v2659 = vpack.c.b16 %v1951, %v1945
      %v2660 = vpack.c.b16 %v1952, %v1946
      %v2661 = vpack.c.b16 %v1953, %v1947
      %v2662 = vpack.c.b16 %v1954, %v1948
      %v2663 = vpack.c.b16 %v1961, %v1955
      %v2664 = vpack.c.b16 %v1962, %v1956
      %v2665 = vpack.c.b16 %v1963, %v1957
      %v2666 = vpack.c.b16 %v1964, %v1958
      %v2667 = vpack.c.b16 %v1965, %v1959
      %v2668 = vpack.c.b16 %v1966, %v1960
      %v2669 = vpack.c.b16 %v1973, %v1967
      %v2670 = vpack.c.b16 %v1974, %v1968
      %v2671 = vpack.c.b16 %v1975, %v1969
      %v2672 = vpack.c.b16 %v1976, %v1970
      %v2673 = vpack.c.b16 %v1977, %v1971
      %v2674 = vpack.c.b16 %v1978, %v1972
      %v2675 = vpack.c.b16 %v1985, %v1979
      %v2676 = vpack.c.b16 %v1986, %v1980
      %v2677 = vpack.c.b16 %v1987, %v1981
      %v2678 = vpack.c.b16 %v1988, %v1982
      %v2679 = vpack.c.b16 %v1989, %v1983
      %v2680 = vpack.c.b16 %v1990, %v1984
      %v2681 = vpack.c.b16 %v1997, %v1991
      %v2682 = vpack.c.b16 %v1998, %v1992
      %v2683 = vpack.c.b16 %v1999, %v1993
      %v2684 = vpack.c.b16 %v2000, %v1994
      %v2685 = vpack.c.b16 %v2001, %v1995
      %v2686 = vpack.c.b16 %v2002, %v1996
      %v2687 = vpack.c.b16 %v2009, %v2003
      %v2688 = vpack.c.b16 %v2010, %v2004
      %v2689 = vpack.c.b16 %v2011, %v2005
      %v2690 = vpack.c.b16 %v2012, %v2006
      %v2691 = vpack.c.b16 %v2013, %v2007
      %v2692 = vpack.c.b16 %v2014, %v2008
      %v2693 = vpack.c.b16 %v2021, %v2015
      %v2694 = vpack.c.b16 %v2022, %v2016
      %v2695 = vpack.c.b16 %v2023, %v2017
      %v2696 = vpack.c.b16 %v2024, %v2018
      %v2697 = vpack.c.b16 %v2025, %v2019
      %v2698 = vpack.c.b16 %v2026, %v2020
      %v2699 = vpack.c.b16 %v2033, %v2027
      %v2700 = vpack.c.b16 %v2034, %v2028
      %v2701 = vpack.c.b16 %v2035, %v2029
      %v2702 = vpack.c.b16 %v2036, %v2030
      %v2703 = vpack.c.b16 %v2037, %v2031
      %v2704 = vpack.c.b16 %v2038, %v2032
      %v2705 = vpack.c.b16 %v2045, %v2039
      %v2706 = vpack.c.b16 %v2046, %v2040
      %v2707 = vpack.c.b16 %v2047, %v2041
      %v2708 = vpack.c.b16 %v2048, %v2042
      %v2709 = vpack.c.b16 %v2049, %v2043
      %v2710 = vpack.c.b16 %v2050, %v2044
      %v2711 = vpack.c.b16 %v2057, %v2051
      %v2712 = vpack.c.b16 %v2058, %v2052
      %v2713 = vpack.c.b16 %v2059, %v2053
      %v2714 = vpack.c.b16 %v2060, %v2054
      %v2715 = vpack.c.b16 %v2061, %v2055
      %v2716 = vpack.c.b16 %v2062, %v2056
      %v2717 = vpack.c.b16 %v2069, %v2063
      %v2718 = vpack.c.b16 %v2070, %v2064
      %v2719 = vpack.c.b16 %v2071, %v2065
      %v2720 = vpack.c.b16 %v2072, %v2066
      %v2721 = vpack.c.b16 %v2073, %v2067
      %v2722 = vpack.c.b16 %v2074, %v2068
      %v2723 = vpack.c.b16 %v2081, %v2075
      %v2724 = vpack.c.b16 %v2082, %v2076
      %v2725 = vpack.c.b16 %v2083, %v2077
      %v2726 = vpack.c.b16 %v2084, %v2078
      %v2727 = vpack.c.b16 %v2085, %v2079
      %v2728 = vpack.c.b16 %v2086, %v2080
      %v2729 = vpack.c.b16 %v2093, %v2087
      %v2730 = vpack.c.b16 %v2094, %v2088
      %v2731 = vpack.c.b16 %v2095, %v2089
      %v2732 = vpack.c.b16 %v2096, %v2090
      %v2733 = vpack.c.b16 %v2097, %v2091
      %v2734 = vpack.c.b16 %v2098, %v2092
      %v2735 = vpack.c.b16 %v2105, %v2099
      %v2736 = vpack.c.b16 %v2106, %v2100
      %v2737 = vpack.c.b16 %v2107, %v2101
      %v2738 = vpack.c.b16 %v2108, %v2102
      %v2739 = vpack.c.b16 %v2109, %v2103
      %v2740 = vpack.c.b16 %v2110, %v2104
      %v2741 = vpack.c.b16 %v2117, %v2111
      %v2742 = vpack.c.b16 %v2118, %v2112
      %v2743 = vpack.c.b16 %v2119, %v2113
      %v2744 = vpack.c.b16 %v2120, %v2114
      %v2745 = vpack.c.b16 %v2121, %v2115
      %v2746 = vpack.c.b16 %v2122, %v2116
      %v2747 = vpack.c.b16 %v2129, %v2123
      %v2748 = vpack.c.b16 %v2130, %v2124
      %v2749 = vpack.c.b16 %v2131, %v2125
      %v2750 = vpack.c.b16 %v2132, %v2126
      %v2751 = vpack.c.b16 %v2133, %v2127
      %v2752 = vpack.c.b16 %v2134, %v2128
      %v2753 = vpack.c.b16 %v2141, %v2135
      %v2754 = vpack.c.b16 %v2142, %v2136
      %v2755 = vpack.c.b16 %v2143, %v2137
      %v2756 = vpack.c.b16 %v2144, %v2138
      %v2757 = vpack.c.b16 %v2145, %v2139
      %v2758 = vpack.c.b16 %v2146, %v2140
      %v2759 = vpack.c.b16 %v2153, %v2147
      %v2760 = vpack.c.b16 %v2154, %v2148
      %v2761 = vpack.c.b16 %v2155, %v2149
      %v2762 = vpack.c.b16 %v2156, %v2150
      %v2763 = vpack.c.b16 %v2157, %v2151
      %v2764 = vpack.c.b16 %v2158, %v2152
      %v2765 = vpack.c.b16 %v2165, %v2159
      %v2766 = vpack.c.b16 %v2166, %v2160
      %v2767 = vpack.c.b16 %v2167, %v2161
      %v2768 = vpack.c.b16 %v2168, %v2162
      %v2769 = vpack.c.b16 %v2169, %v2163
      %v2770 = vpack.c.b16 %v2170, %v2164
      %v2771 = vpack.c.b16 %v2177, %v2171
      %v2772 = vpack.c.b16 %v2178, %v2172
      %v2773 = vpack.c.b16 %v2179, %v2173
      %v2774 = vpack.c.b16 %v2180, %v2174
      %v2775 = vpack.c.b16 %v2181, %v2175
      %v2776 = vpack.c.b16 %v2182, %v2176
      %v2777 = vpack.c.b16 %v2189, %v2183
      %v2778 = vpack.c.b16 %v2190, %v2184
      %v2779 = vpack.c.b16 %v2191, %v2185
      %v2780 = vpack.c.b16 %v2192, %v2186
      %v2781 = vpack.c.b16 %v2193, %v2187
      %v2782 = vpack.c.b16 %v2194, %v2188
      %v2783 = vpack.c.b16 %v2201, %v2195
      %v2784 = vpack.c.b16 %v2202, %v2196
      %v2785 = vpack.c.b16 %v2203, %v2197
      %v2786 = vpack.c.b16 %v2204, %v2198
      %v2787 = vpack.c.b16 %v2205, %v2199
      %v2788 = vpack.c.b16 %v2206, %v2200
      %v2789 = vpack.c.b16 %v2213, %v2207
      %v2790 = vpack.c.b16 %v2214, %v2208
      %v2791 = vpack.c.b16 %v2215, %v2209
      %v2792 = vpack.c.b16 %v2216, %v2210
      %v2793 = vpack.c.b16 %v2217, %v2211
      %v2794 = vpack.c.b16 %v2218, %v2212
      %v2795 = vpack.c.b16 %v2225, %v2219
      %v2796 = vpack.c.b16 %v2226, %v2220
      %v2797 = vpack.c.b16 %v2227, %v2221
      %v2798 = vpack.c.b16 %v2228, %v2222
      %v2799 = vpack.c.b16 %v2229, %v2223
      %v2800 = vpack.c.b16 %v2230, %v2224
      %v2801 = vpack.c.b16 %v2237, %v2231
      %v2802 = vpack.c.b16 %v2238, %v2232
      %v2803 = vpack.c.b16 %v2239, %v2233
      %v2804 = vpack.c.b16 %v2240, %v2234
      %v2805 = vpack.c.b16 %v2241, %v2235
      %v2806 = vpack.c.b16 %v2242, %v2236
      %v2807 = vpack.c.b16 %v2249, %v2243
      %v2808 = vpack.c.b16 %v2250, %v2244
      %v2809 = vpack.c.b16 %v2251, %v2245
      %v2810 = vpack.c.b16 %v2252, %v2246
      %v2811 = vpack.c.b16 %v2253, %v2247
      %v2812 = vpack.c.b16 %v2254, %v2248
      %v2813 = vpack.c.b16 %v2261, %v2255
      %v2814 = vpack.c.b16 %v2262, %v2256
      %v2815 = vpack.c.b16 %v2263, %v2257
      %v2816 = vpack.c.b16 %v2264, %v2258
      %v2817 = vpack.c.b16 %v2265, %v2259
      %v2818 = vpack.c.b16 %v2266, %v2260
      %v2819 = vpack.c.b16 %v2273, %v2267
      %v2820 = vpack.c.b16 %v2274, %v2268
      %v2821 = vpack.c.b16 %v2275, %v2269
      %v2822 = vpack.c.b16 %v2276, %v2270
      %v2823 = vpack.c.b16 %v2277, %v2271
      %v2824 = vpack.c.b16 %v2278, %v2272
      %v2825 = vpack.c.b16 %v2285, %v2279
      %v2826 = vpack.c.b16 %v2286, %v2280
      %v2827 = vpack.c.b16 %v2287, %v2281
      %v2828 = vpack.c.b16 %v2288, %v2282
      %v2829 = vpack.c.b16 %v2289, %v2283
      %v2830 = vpack.c.b16 %v2290, %v2284
      %v2831 = vpack.c.b16 %v2297, %v2291
      %v2832 = vpack.c.b16 %v2298, %v2292
      %v2833 = vpack.c.b16 %v2299, %v2293
      %v2834 = vpack.c.b16 %v2300, %v2294
      %v2835 = vpack.c.b16 %v2301, %v2295
      %v2836 = vpack.c.b16 %v2302, %v2296
      %v2837 = vpack.c.b16 %v2309, %v2303
      %v2838 = vpack.c.b16 %v2310, %v2304
      %v2839 = vpack.c.b16 %v2311, %v2305
      %v2840 = vpack.c.b16 %v2312, %v2306
      %v2841 = vpack.c.b16 %v2313, %v2307
      %v2842 = vpack.c.b16 %v2314, %v2308
      %v2843 = vpack.c.b16 %v2321, %v2315
      %v2844 = vpack.c.b16 %v2322, %v2316
      %v2845 = vpack.c.b16 %v2323, %v2317
      %v2846 = vpack.c.b16 %v2324, %v2318
      %v2847 = vpack.c.b16 %v2325, %v2319
      %v2848 = vpack.c.b16 %v2326, %v2320
      %v2849 = vpack.c.b16 %v2333, %v2327
      %v2850 = vpack.c.b16 %v2334, %v2328
      %v2851 = vpack.c.b16 %v2335, %v2329
      %v2852 = vpack.c.b16 %v2336, %v2330
      %v2853 = vpack.c.b16 %v2337, %v2331
      %v2854 = vpack.c.b16 %v2338, %v2332
      %v2855 = vpack.c.b16 %v2345, %v2339
      %v2856 = vpack.c.b16 %v2346, %v2340
      %v2857 = vpack.c.b16 %v2347, %v2341
      %v2858 = vpack.c.b16 %v2348, %v2342
      %v2859 = vpack.c.b16 %v2349, %v2343
      %v2860 = vpack.c.b16 %v2350, %v2344
      %v2861 = vpack.c.b16 %v2357, %v2351
      %v2862 = vpack.c.b16 %v2358, %v2352
      %v2863 = vpack.c.b16 %v2359, %v2353
      %v2864 = vpack.c.b16 %v2360, %v2354
      %v2865 = vpack.c.b16 %v2361, %v2355
      %v2866 = vpack.c.b16 %v2362, %v2356
      %v2867 = vpack.c.b16 %v2369, %v2363
      %v2868 = vpack.c.b16 %v2370, %v2364
      %v2869 = vpack.c.b16 %v2371, %v2365
      %v2870 = vpack.c.b16 %v2372, %v2366
      %v2871 = vpack.c.b16 %v2373, %v2367
      %v2872 = vpack.c.b16 %v2374, %v2368
      %v2873 = vpack.c.b16 %v2381, %v2375
      %v2874 = vpack.c.b16 %v2382, %v2376
      %v2875 = vpack.c.b16 %v2383, %v2377
      %v2876 = vpack.c.b16 %v2384, %v2378
      %v2877 = vpack.c.b16 %v2385, %v2379
      %v2878 = vpack.c.b16 %v2386, %v2380
      %v2879 = vpack.c.b16 %v2393, %v2387
      %v2880 = vpack.c.b16 %v2394, %v2388
      %v2881 = vpack.c.b16 %v2395, %v2389
      %v2882 = vpack.c.b16 %v2396, %v2390
      %v2883 = vpack.c.b16 %v2397, %v2391
      %v2884 = vpack.c.b16 %v2398, %v2392
      %v2885 = vpack.c.b16 %v2405, %v2399
      %v2886 = vpack.c.b16 %v2406, %v2400
      %v2887 = vpack.c.b16 %v2407, %v2401
      %v2888 = vpack.c.b16 %v2408, %v2402
      %v2889 = vpack.c.b16 %v2409, %v2403
      %v2890 = vpack.c.b16 %v2410, %v2404
      %v2891 = vpack.c.b16 %v2417, %v2411
      %v2892 = vpack.c.b16 %v2418, %v2412
      %v2893 = vpack.c.b16 %v2419, %v2413
      %v2894 = vpack.c.b16 %v2420, %v2414
      %v2895 = vpack.c.b16 %v2421, %v2415
      %v2896 = vpack.c.b16 %v2422, %v2416
      %v2897 = vpack.c.b16 %v2429, %v2423
      %v2898 = vpack.c.b16 %v2430, %v2424
      %v2899 = vpack.c.b16 %v2431, %v2425
      %v2900 = vpack.c.b16 %v2432, %v2426
      %v2901 = vpack.c.b16 %v2433, %v2427
      %v2902 = vpack.c.b16 %v2434, %v2428
      %v2903 = vpack.c.b16 %v2441, %v2435
      %v2904 = vpack.c.b16 %v2442, %v2436
      %v2905 = vpack.c.b16 %v2443, %v2437
      %v2906 = vpack.c.b16 %v2444, %v2438
      %v2907 = vpack.c.b16 %v2445, %v2439
      %v2908 = vpack.c.b16 %v2446, %v2440
      %v2909 = vpack.c.b16 %v2453, %v2447
      %v2910 = vpack.c.b16 %v2454, %v2448
      %v2911 = vpack.c.b16 %v2455, %v2449
      %v2912 = vpack.c.b16 %v2456, %v2450
      %v2913 = vpack.c.b16 %v2457, %v2451
      %v2914 = vpack.c.b16 %v2458, %v2452
      %v2915 = vpack.c.b16 %v2465, %v2459
      %v2916 = vpack.c.b16 %v2466, %v2460
      %v2917 = vpack.c.b16 %v2467, %v2461
      %v2918 = vpack.c.b16 %v2468, %v2462
      %v2919 = vpack.c.b16 %v2469, %v2463
      %v2920 = vpack.c.b16 %v2470, %v2464
      %v2921 = vpack.c.b16 %v2477, %v2471
      %v2922 = vpack.c.b16 %v2478, %v2472
      %v2923 = vpack.c.b16 %v2479, %v2473
      %v2924 = vpack.c.b16 %v2480, %v2474
      %v2925 = vpack.c.b16 %v2481, %v2475
      %v2926 = vpack.c.b16 %v2482, %v2476
      %v2927 = vpack.c.b16 %v2489, %v2483
      %v2928 = vpack.c.b16 %v2490, %v2484
      %v2929 = vpack.c.b16 %v2491, %v2485
      %v2930 = vpack.c.b16 %v2492, %v2486
      %v2931 = vpack.c.b16 %v2493, %v2487
      %v2932 = vpack.c.b16 %v2494, %v2488
      %v2933 = vpack.c.b16 %v2501, %v2495
      %v2934 = vpack.c.b16 %v2502, %v2496
      %v2935 = vpack.c.b16 %v2503, %v2497
      %v2936 = vpack.c.b16 %v2504, %v2498
      %v2937 = vpack.c.b16 %v2505, %v2499
      %v2938 = vpack.c.b16 %v2506, %v2500
      %v2939 = vpack.c.b16 %v2513, %v2507
      %v2940 = vpack.c.b16 %v2514, %v2508
      %v2941 = vpack.c.b16 %v2515, %v2509
      %v2942 = vpack.c.b16 %v2516, %v2510
      %v2943 = vpack.c.b16 %v2517, %v2511
      %v2944 = vpack.c.b16 %v2518, %v2512
      %v2945 = vpack.c.b16 %v2525, %v2519
      %v2946 = vpack.c.b16 %v2526, %v2520
      %v2947 = vpack.c.b16 %v2527, %v2521
      %v2948 = vpack.c.b16 %v2528, %v2522
      %v2949 = vpack.c.b16 %v2529, %v2523
      %v2950 = vpack.c.b16 %v2530, %v2524
      %v2951 = vpack.c.b16 %v2537, %v2531
      %v2952 = vpack.c.b16 %v2538, %v2532
      %v2953 = vpack.c.b16 %v2539, %v2533
      %v2954 = vpack.c.b16 %v2540, %v2534
      %v2955 = vpack.c.b16 %v2541, %v2535
      %v2956 = vpack.c.b16 %v2542, %v2536
      %v2957 = vpack.c.b16 %v2549, %v2543
      %v2958 = vpack.c.b16 %v2550, %v2544
      %v2959 = vpack.c.b16 %v2551, %v2545
      %v2960 = vpack.c.b16 %v2552, %v2546
      %v2961 = vpack.c.b16 %v2553, %v2547
      %v2962 = vpack.c.b16 %v2554, %v2548
      %v2963 = vpack.c.b16 %v2561, %v2555
      %v2964 = vpack.c.b16 %v2562, %v2556
      %v2965 = vpack.c.b16 %v2563, %v2557
      %v2966 = vpack.c.b16 %v2564, %v2558
      %v2967 = vpack.c.b16 %v2565, %v2559
      %v2968 = vpack.c.b16 %v2566, %v2560
      %v2969 = vpack.c.b16 %v2573, %v2567
      %v2970 = vpack.c.b16 %v2574, %v2568
      %v2971 = vpack.c.b16 %v2575, %v2569
      %v2972 = vpack.c.b16 %v2576, %v2570
      %v2973 = vpack.c.b16 %v2577, %v2571
      %v2974 = vpack.c.b16 %v2578, %v2572
      %v2975 = vpack.c.b16 %v2585, %v2579
      %v2976 = vpack.c.b16 %v2586, %v2580
      %v2977 = vpack.c.b16 %v2587, %v2581
      %v2978 = vpack.c.b16 %v2588, %v2582
      %v2979 = vpack.c.b16 %v2589, %v2583
      %v2980 = vpack.c.b16 %v2590, %v2584
      %v2981 = vpack.c.b16 %v2597, %v2591
      %v2982 = vpack.c.b16 %v2598, %v2592
      %v2983 = vpack.c.b16 %v2599, %v2593
      %v2984 = vpack.c.b16 %v2600, %v2594
      %v2985 = vpack.c.b16 %v2601, %v2595
      %v2986 = vpack.c.b16 %v2602, %v2596
      %v3467 = vunpack.c.l.b16 %v715
      %v3468 = vunpack.c.l.b16 %v716
      %v3469 = vunpack.c.l.b16 %v717
      %v3470 = vunpack.c.l.b16 %v718
      %v3471 = vunpack.c.l.b16 %v719
      %v3472 = vunpack.c.l.b16 %v720
      %v3473 = vunpack.c.l.b16 %v721
      %v3474 = vunpack.c.l.b16 %v722
      %v3475 = vunpack.c.l.b16 %v723
      %v3476 = vunpack.c.l.b16 %v724
      %v3477 = vunpack.c.l.b16 %v725
      %v3478 = vunpack.c.l.b16 %v726
      %v3479 = vunpack.c.l.b16 %v727
      %v3480 = vunpack.c.l.b16 %v728
      %v3481 = vunpack.c.l.b16 %v729
      %v3482 = vunpack.c.l.b16 %v730
      %v3483 = vunpack.c.l.b16 %v731
      %v3484 = vunpack.c.l.b16 %v732
      %v3485 = vunpack.c.l.b16 %v733
      %v3486 = vunpack.c.l.b16 %v734
      %v3487 = vunpack.c.l.b16 %v735
      %v3488 = vunpack.c.l.b16 %v736
      %v3489 = vunpack.c.l.b16 %v737
      %v3490 = vunpack.c.l.b16 %v738
      %v3491 = vunpack.c.l.b16 %v739
      %v3492 = vunpack.c.l.b16 %v740
      %v3493 = vunpack.c.l.b16 %v741
      %v3494 = vunpack.c.l.b16 %v742
      %v3495 = vunpack.c.l.b16 %v743
      %v3496 = vunpack.c.l.b16 %v744
      %v3497 = vunpack.c.l.b16 %v745
      %v3498 = vunpack.c.l.b16 %v746
      %v3499 = vunpack.c.l.b16 %v747
      %v3500 = vunpack.c.l.b16 %v748
      %v3501 = vunpack.c.l.b16 %v749
      %v3502 = vunpack.c.l.b16 %v750
      %v3503 = vunpack.c.l.b16 %v751
      %v3504 = vunpack.c.l.b16 %v752
      %v3505 = vunpack.c.l.b16 %v753
      %v3506 = vunpack.c.l.b16 %v754
      %v3507 = vunpack.c.l.b16 %v755
      %v3508 = vunpack.c.l.b16 %v756
      %v3509 = vunpack.c.l.b16 %v757
      %v3510 = vunpack.c.l.b16 %v758
      %v3511 = vunpack.c.l.b16 %v759
      %v3512 = vunpack.c.l.b16 %v760
      %v3513 = vunpack.c.l.b16 %v761
      %v3514 = vunpack.c.l.b16 %v762
      %v3515 = vunpack.c.l.b16 %v763
      %v3516 = vunpack.c.l.b16 %v764
      %v3517 = vunpack.c.l.b16 %v765
      %v3518 = vunpack.c.l.b16 %v766
      %v3519 = vunpack.c.l.b16 %v767
      %v3520 = vunpack.c.l.b16 %v768
      %v3521 = vunpack.c.l.b16 %v769
      %v3522 = vunpack.c.l.b16 %v770
      %v3523 = vunpack.c.l.b16 %v771
      %v3524 = vunpack.c.l.b16 %v772
      %v3525 = vunpack.c.l.b16 %v773
      %v3526 = vunpack.c.l.b16 %v774
      %v3527 = vunpack.c.l.b16 %v775
      %v3528 = vunpack.c.l.b16 %v776
      %v3529 = vunpack.c.l.b16 %v777
      %v3530 = vunpack.c.l.b16 %v778
      %v3531 = vunpack.c.l.b16 %v779
      %v3532 = vunpack.c.l.b16 %v780
      %v3533 = vunpack.c.l.b16 %v781
      %v3534 = vunpack.c.l.b16 %v782
      %v3535 = vunpack.c.l.b16 %v783
      %v3536 = vunpack.c.l.b16 %v784
      %v3537 = vunpack.c.l.b16 %v785
      %v3538 = vunpack.c.l.b16 %v786
      %v3539 = vunpack.c.l.b16 %v787
      %v3540 = vunpack.c.l.b16 %v788
      %v3541 = vunpack.c.l.b16 %v789
      %v3542 = vunpack.c.l.b16 %v790
      %v3543 = vunpack.c.l.b16 %v791
      %v3544 = vunpack.c.l.b16 %v792
      %v3545 = vunpack.c.l.b16 %v793
      %v3546 = vunpack.c.l.b16 %v794
      %v3547 = vunpack.c.l.b16 %v795
      %v3548 = vunpack.c.l.b16 %v796
      %v3549 = vunpack.c.l.b16 %v797
      %v3550 = vunpack.c.l.b16 %v798
      %v3551 = vunpack.c.l.b16 %v799
      %v3552 = vunpack.c.l.b16 %v800
      %v3553 = vunpack.c.l.b16 %v801
      %v3554 = vunpack.c.l.b16 %v802
      %v3555 = vunpack.c.l.b16 %v803
      %v3556 = vunpack.c.l.b16 %v804
      %v3557 = vunpack.c.l.b16 %v805
      %v3558 = vunpack.c.l.b16 %v806
      %v3559 = vunpack.c.l.b16 %v807
      %v3560 = vunpack.c.l.b16 %v808
      %v3561 = vunpack.c.l.b16 %v809
      %v3562 = vunpack.c.l.b16 %v810
      %v3563 = vpack.c.b16 %v3468, %v3467
      %v3564 = vpack.c.b16 %v3470, %v3469
      %v3565 = vpack.c.b16 %v3472, %v3471
      %v3566 = vpack.c.b16 %v3474, %v3473
      %v3567 = vpack.c.b16 %v3476, %v3475
      %v3568 = vpack.c.b16 %v3478, %v3477
      %v3569 = vpack.c.b16 %v3480, %v3479
      %v3570 = vpack.c.b16 %v3482, %v3481
      %v3571 = vpack.c.b16 %v3484, %v3483
      %v3572 = vpack.c.b16 %v3486, %v3485
      %v3573 = vpack.c.b16 %v3488, %v3487
      %v3574 = vpack.c.b16 %v3490, %v3489
      %v3575 = vpack.c.b16 %v3492, %v3491
      %v3576 = vpack.c.b16 %v3494, %v3493
      %v3577 = vpack.c.b16 %v3496, %v3495
      %v3578 = vpack.c.b16 %v3498, %v3497
      %v3579 = vpack.c.b16 %v3500, %v3499
      %v3580 = vpack.c.b16 %v3502, %v3501
      %v3581 = vpack.c.b16 %v3504, %v3503
      %v3582 = vpack.c.b16 %v3506, %v3505
      %v3583 = vpack.c.b16 %v3508, %v3507
      %v3584 = vpack.c.b16 %v3510, %v3509
      %v3585 = vpack.c.b16 %v3512, %v3511
      %v3586 = vpack.c.b16 %v3514, %v3513
      %v3587 = vpack.c.b16 %v3516, %v3515
      %v3588 = vpack.c.b16 %v3518, %v3517
      %v3589 = vpack.c.b16 %v3520, %v3519
      %v3590 = vpack.c.b16 %v3522, %v3521
      %v3591 = vpack.c.b16 %v3524, %v3523
      %v3592 = vpack.c.b16 %v3526, %v3525
      %v3593 = vpack.c.b16 %v3528, %v3527
      %v3594 = vpack.c.b16 %v3530, %v3529
      %v3595 = vpack.c.b16 %v3532, %v3531
      %v3596 = vpack.c.b16 %v3534, %v3533
      %v3597 = vpack.c.b16 %v3536, %v3535
      %v3598 = vpack.c.b16 %v3538, %v3537
      %v3599 = vpack.c.b16 %v3540, %v3539
      %v3600 = vpack.c.b16 %v3542, %v3541
      %v3601 = vpack.c.b16 %v3544, %v3543
      %v3602 = vpack.c.b16 %v3546, %v3545
      %v3603 = vpack.c.b16 %v3548, %v3547
      %v3604 = vpack.c.b16 %v3550, %v3549
      %v3605 = vpack.c.b16 %v3552, %v3551
      %v3606 = vpack.c.b16 %v3554, %v3553
      %v3607 = vpack.c.b16 %v3556, %v3555
      %v3608 = vpack.c.b16 %v3558, %v3557
      %v3609 = vpack.c.b16 %v3560, %v3559
      %v3610 = vpack.c.b16 %v3562, %v3561
      %3659 = vmatprep.subr.bf16.mxu0 0
      %3660 = vmatpush1.bf16.msra.mxu0 %v3563
      %3661 = vmatprep.subr.bf16.mxu0 0
      %3662 = vmatpush1.bf16.msra.mxu0 %v3564
      %3663 = vmatprep.subr.bf16.mxu0 0
      %3664 = vmatpush1.bf16.msra.mxu0 %v3565
      %3665 = vmatprep.subr.bf16.mxu0 0
      %3666 = vmatpush1.bf16.msra.mxu0 %v3566
      %3667 = vmatprep.subr.bf16.mxu0 0
      %3668 = vmatpush1.bf16.msra.mxu0 %v3567
      %3669 = vmatprep.subr.bf16.mxu0 0
      %3670 = vmatpush1.bf16.msra.mxu0 %v3568
      %3671 = vmatprep.subr.bf16.mxu0 0
      %3672 = vmatpush1.bf16.msra.mxu0 %v3569
      %3673 = vmatprep.subr.bf16.mxu0 0
      %3674 = vmatpush1.bf16.msra.mxu0 %v3570
      %3675 = vmatprep.subr.bf16.mxu0 0
      %3676 = vmatpush1.bf16.msra.mxu0 %v3571
      %3677 = vmatprep.subr.bf16.mxu0 0
      %3678 = vmatpush1.bf16.msra.mxu0 %v3572
      %3679 = vmatprep.subr.bf16.mxu0 0
      %3680 = vmatpush1.bf16.msra.mxu0 %v3573
      %3681 = vmatprep.subr.bf16.mxu0 0
      %3682 = vmatpush1.bf16.msra.mxu0 %v3574
      %3683 = vmatprep.subr.bf16.mxu0 0
      %3684 = vmatpush1.bf16.msra.mxu0 %v3575
      %3685 = vmatprep.subr.bf16.mxu0 0
      %3686 = vmatpush1.bf16.msra.mxu0 %v3576
      %3687 = vmatprep.subr.bf16.mxu0 0
      %3688 = vmatpush1.bf16.msra.mxu0 %v3577
      %3689 = vmatprep.subr.bf16.mxu0 0
      %3690 = vmatpush1.bf16.msra.mxu0 %v3578
      %3691 = vmatprep.mubr.bf16.mxu0 %v2604
      %3692 = vmatmul.mubr.bf16.gmra.mrb[0].mxu0 %v2603
      %v3693 = vpop.f32.mrb[0].mxu0
      %v3694 = vadd.f32 %v814, %v3693
      %v3695 = vpop.f32.mrb[0].mxu0
      %v3696 = vpop.f32.mrb[0].mxu0
      %v3697 = vadd.f32 %v819, %v3696
      %v3698 = vpop.f32.mrb[0].mxu0
      %3699 = vmatprep.mubr.bf16.mxu0 %v2610
      %3700 = vmatmul.mubr.bf16.gmra.mrb[0].mxu0 %v2609
      %v3701 = vpop.f32.mrb[0].mxu0
      %v3702 = vadd.f32 %v824, %v3701
      %v3703 = vpop.f32.mrb[0].mxu0
      %v3704 = vpop.f32.mrb[0].mxu0
      %v3705 = vadd.f32 %v829, %v3704
      %v3706 = vpop.f32.mrb[0].mxu0
      %3707 = vmatprep.mubr.bf16.mxu0 %v2616
      %3708 = vmatmul.mubr.bf16.gmra.mrb[0].mxu0 %v2615
      %v3709 = vpop.f32.mrb[0].mxu0
      %v3710 = vadd.f32 %v834, %v3709
      %v3711 = vpop.f32.mrb[0].mxu0
      %v3712 = vpop.f32.mrb[0].mxu0
      %v3713 = vadd.f32 %v839, %v3712
      %v3714 = vpop.f32.mrb[0].mxu0
      %3715 = vmatprep.mubr.bf16.mxu0 %v2622
      %3716 = vmatmul.mubr.bf16.gmra.mrb[0].mxu0 %v2621
      %v3717 = vpop.f32.mrb[0].mxu0
      %v3718 = vadd.f32 %v844, %v3717
      %v3719 = vpop.f32.mrb[0].mxu0
      %v3720 = vpop.f32.mrb[0].mxu0
      %v3721 = vadd.f32 %v849, %v3720
      %v3722 = vpop.f32.mrb[0].mxu0
      %3723 = vmatprep.mubr.bf16.mxu0 %v2628
      %3724 = vmatmul.mubr.bf16.gmra.mrb[0].mxu0 %v2627
      %v3725 = vpop.f32.mrb[0].mxu0
      %v3726 = vadd.f32 %v854, %v3725
      %v3727 = vpop.f32.mrb[0].mxu0
      %v3728 = vpop.f32.mrb[0].mxu0
      %v3729 = vadd.f32 %v859, %v3728
      %v3730 = vpop.f32.mrb[0].mxu0
      %3731 = vmatprep.mubr.bf16.mxu0 %v2634
      %3732 = vmatmul.mubr.bf16.gmra.mrb[0].mxu0 %v2633
      %v3733 = vpop.f32.mrb[0].mxu0
      %v3734 = vadd.f32 %v864, %v3733
      %v3735 = vpop.f32.mrb[0].mxu0
      %v3736 = vpop.f32.mrb[0].mxu0
      %v3737 = vadd.f32 %v869, %v3736
      %v3738 = vpop.f32.mrb[0].mxu0
      %3739 = vmatprep.mubr.bf16.mxu0 %v2640
      %3740 = vmatmul.mubr.bf16.gmra.mrb[0].mxu0 %v2639
      %v3741 = vpop.f32.mrb[0].mxu0
      %v3742 = vadd.f32 %v874, %v3741
      %v3743 = vpop.f32.mrb[0].mxu0
      %v3744 = vpop.f32.mrb[0].mxu0
      %v3745 = vadd.f32 %v879, %v3744
      %v3746 = vpop.f32.mrb[0].mxu0
      %3747 = vmatprep.mubr.bf16.mxu0 %v2646
      %3748 = vmatmul.mubr.bf16.gmra.mrb[0].mxu0 %v2645
      %v3749 = vpop.f32.mrb[0].mxu0
      %v3750 = vadd.f32 %v884, %v3749
      %v3751 = vpop.f32.mrb[0].mxu0
      %v3752 = vpop.f32.mrb[0].mxu0
      %v3753 = vadd.f32 %v889, %v3752
      %v3754 = vpop.f32.mrb[0].mxu0
      %3755 = vmatprep.mubr.bf16.mxu0 %v2652
      %3756 = vmatmul.mubr.bf16.gmra.mrb[0].mxu0 %v2651
      %v3757 = vpop.f32.mrb[0].mxu0
      %v3758 = vadd.f32 %v894, %v3757
      %v3759 = vpop.f32.mrb[0].mxu0
      %v3760 = vpop.f32.mrb[0].mxu0
      %v3761 = vadd.f32 %v899, %v3760
      %v3762 = vpop.f32.mrb[0].mxu0
      %3763 = vmatprep.mubr.bf16.mxu0 %v2658
      %3764 = vmatmul.mubr.bf16.gmra.mrb[0].mxu0 %v2657
      %v3765 = vpop.f32.mrb[0].mxu0
      %v3766 = vadd.f32 %v904, %v3765
      %v3767 = vpop.f32.mrb[0].mxu0
      %v3768 = vpop.f32.mrb[0].mxu0
      %v3769 = vadd.f32 %v909, %v3768
      %v3770 = vpop.f32.mrb[0].mxu0
      %3771 = vmatprep.mubr.bf16.mxu0 %v2664
      %3772 = vmatmul.mubr.bf16.gmra.mrb[0].mxu0 %v2663
      %v3773 = vpop.f32.mrb[0].mxu0
      %v3774 = vadd.f32 %v914, %v3773
      %v3775 = vpop.f32.mrb[0].mxu0
      %v3776 = vpop.f32.mrb[0].mxu0
      %v3777 = vadd.f32 %v919, %v3776
      %v3778 = vpop.f32.mrb[0].mxu0
      %3779 = vmatprep.mubr.bf16.mxu0 %v2670
      %3780 = vmatmul.mubr.bf16.gmra.mrb[0].mxu0 %v2669
      %v3781 = vpop.f32.mrb[0].mxu0
      %v3782 = vadd.f32 %v924, %v3781
      %v3783 = vpop.f32.mrb[0].mxu0
      %v3784 = vpop.f32.mrb[0].mxu0
      %v3785 = vadd.f32 %v929, %v3784
      %v3786 = vpop.f32.mrb[0].mxu0
      %3787 = vmatprep.mubr.bf16.mxu0 %v2676
      %3788 = vmatmul.mubr.bf16.gmra.mrb[0].mxu0 %v2675
      %v3789 = vpop.f32.mrb[0].mxu0
      %v3790 = vadd.f32 %v934, %v3789
      %v3791 = vpop.f32.mrb[0].mxu0
      %v3792 = vpop.f32.mrb[0].mxu0
      %v3793 = vadd.f32 %v939, %v3792
      %v3794 = vpop.f32.mrb[0].mxu0
      %3795 = vmatprep.mubr.bf16.mxu0 %v2682
      %3796 = vmatmul.mubr.bf16.gmra.mrb[0].mxu0 %v2681
      %v3797 = vpop.f32.mrb[0].mxu0
      %v3798 = vadd.f32 %v944, %v3797
      %v3799 = vpop.f32.mrb[0].mxu0
      %v3800 = vpop.f32.mrb[0].mxu0
      %v3801 = vadd.f32 %v949, %v3800
      %v3802 = vpop.f32.mrb[0].mxu0
      %3803 = vmatprep.mubr.bf16.mxu0 %v2688
      %3804 = vmatmul.mubr.bf16.gmra.mrb[0].mxu0 %v2687
      %v3805 = vpop.f32.mrb[0].mxu0
      %v3806 = vadd.f32 %v954, %v3805
      %v3807 = vpop.f32.mrb[0].mxu0
      %v3808 = vpop.f32.mrb[0].mxu0
      %v3809 = vadd.f32 %v959, %v3808
      %v3810 = vpop.f32.mrb[0].mxu0
      %3811 = vmatprep.mubr.bf16.mxu0 %v2694
      %3812 = vmatmul.mubr.bf16.gmra.mrb[0].mxu0 %v2693
      %v3813 = vpop.f32.mrb[0].mxu0
      %v3814 = vadd.f32 %v964, %v3813
      %v3815 = vpop.f32.mrb[0].mxu0
      %v3816 = vpop.f32.mrb[0].mxu0
      %v3817 = vadd.f32 %v969, %v3816
      %v3818 = vpop.f32.mrb[0].mxu0
      %3819 = vmatprep.mubr.bf16.mxu0 %v2700
      %3820 = vmatmul.mubr.bf16.gmra.mrb[0].mxu0 %v2699
      %v3821 = vpop.f32.mrb[0].mxu0
      %v3822 = vadd.f32 %v974, %v3821
      %v3823 = vpop.f32.mrb[0].mxu0
      %v3824 = vpop.f32.mrb[0].mxu0
      %v3825 = vadd.f32 %v979, %v3824
      %v3826 = vpop.f32.mrb[0].mxu0
      %3827 = vmatprep.mubr.bf16.mxu0 %v2706
      %3828 = vmatmul.mubr.bf16.gmra.mrb[0].mxu0 %v2705
      %v3829 = vpop.f32.mrb[0].mxu0
      %v3830 = vadd.f32 %v984, %v3829
      %v3831 = vpop.f32.mrb[0].mxu0
      %v3832 = vpop.f32.mrb[0].mxu0
      %v3833 = vadd.f32 %v989, %v3832
      %v3834 = vpop.f32.mrb[0].mxu0
      %3835 = vmatprep.mubr.bf16.mxu0 %v2712
      %3836 = vmatmul.mubr.bf16.gmra.mrb[0].mxu0 %v2711
      %v3837 = vpop.f32.mrb[0].mxu0
      %v3838 = vadd.f32 %v994, %v3837
      %v3839 = vpop.f32.mrb[0].mxu0
      %v3840 = vpop.f32.mrb[0].mxu0
      %v3841 = vadd.f32 %v999, %v3840
      %v3842 = vpop.f32.mrb[0].mxu0
      %3843 = vmatprep.mubr.bf16.mxu0 %v2718
      %3844 = vmatmul.mubr.bf16.gmra.mrb[0].mxu0 %v2717
      %v3845 = vpop.f32.mrb[0].mxu0
      %v3846 = vadd.f32 %v1004, %v3845
      %v3847 = vpop.f32.mrb[0].mxu0
      %v3848 = vpop.f32.mrb[0].mxu0
      %v3849 = vadd.f32 %v1009, %v3848
      %v3850 = vpop.f32.mrb[0].mxu0
      %3851 = vmatprep.mubr.bf16.mxu0 %v2724
      %3852 = vmatmul.mubr.bf16.gmra.mrb[0].mxu0 %v2723
      %v3853 = vpop.f32.mrb[0].mxu0
      %v3854 = vadd.f32 %v1014, %v3853
      %v3855 = vpop.f32.mrb[0].mxu0
      %v3856 = vpop.f32.mrb[0].mxu0
      %v3857 = vadd.f32 %v1019, %v3856
      %v3858 = vpop.f32.mrb[0].mxu0
      %3859 = vmatprep.mubr.bf16.mxu0 %v2730
      %3860 = vmatmul.mubr.bf16.gmra.mrb[0].mxu0 %v2729
      %v3861 = vpop.f32.mrb[0].mxu0
      %v3862 = vadd.f32 %v1024, %v3861
      %v3863 = vpop.f32.mrb[0].mxu0
      %v3864 = vpop.f32.mrb[0].mxu0
      %v3865 = vadd.f32 %v1029, %v3864
      %v3866 = vpop.f32.mrb[0].mxu0
      %3867 = vmatprep.mubr.bf16.mxu0 %v2736
      %3868 = vmatmul.mubr.bf16.gmra.mrb[0].mxu0 %v2735
      %v3869 = vpop.f32.mrb[0].mxu0
      %v3870 = vadd.f32 %v1034, %v3869
      %v3871 = vpop.f32.mrb[0].mxu0
      %v3872 = vpop.f32.mrb[0].mxu0
      %v3873 = vadd.f32 %v1039, %v3872
      %v3874 = vpop.f32.mrb[0].mxu0
      %3875 = vmatprep.mubr.bf16.mxu0 %v2742
      %3876 = vmatmul.mubr.bf16.gmra.mrb[0].mxu0 %v2741
      %v3877 = vpop.f32.mrb[0].mxu0
      %v3878 = vadd.f32 %v1044, %v3877
      %v3879 = vpop.f32.mrb[0].mxu0
      %v3880 = vpop.f32.mrb[0].mxu0
      %v3881 = vadd.f32 %v1049, %v3880
      %v3882 = vpop.f32.mrb[0].mxu0
      %3883 = vmatprep.mubr.bf16.mxu0 %v2748
      %3884 = vmatmul.mubr.bf16.gmra.mrb[0].mxu0 %v2747
      %v3885 = vpop.f32.mrb[0].mxu0
      %v3886 = vadd.f32 %v1054, %v3885
      %v3887 = vpop.f32.mrb[0].mxu0
      %v3888 = vpop.f32.mrb[0].mxu0
      %v3889 = vadd.f32 %v1059, %v3888
      %v3890 = vpop.f32.mrb[0].mxu0
      %3891 = vmatprep.mubr.bf16.mxu0 %v2754
      %3892 = vmatmul.mubr.bf16.gmra.mrb[0].mxu0 %v2753
      %v3893 = vpop.f32.mrb[0].mxu0
      %v3894 = vadd.f32 %v1064, %v3893
      %v3895 = vpop.f32.mrb[0].mxu0
      %v3896 = vpop.f32.mrb[0].mxu0
      %v3897 = vadd.f32 %v1069, %v3896
      %v3898 = vpop.f32.mrb[0].mxu0
      %3899 = vmatprep.mubr.bf16.mxu0 %v2760
      %3900 = vmatmul.mubr.bf16.gmra.mrb[0].mxu0 %v2759
      %v3901 = vpop.f32.mrb[0].mxu0
      %v3902 = vadd.f32 %v1074, %v3901
      %v3903 = vpop.f32.mrb[0].mxu0
      %v3904 = vpop.f32.mrb[0].mxu0
      %v3905 = vadd.f32 %v1079, %v3904
      %v3906 = vpop.f32.mrb[0].mxu0
      %3907 = vmatprep.mubr.bf16.mxu0 %v2766
      %3908 = vmatmul.mubr.bf16.gmra.mrb[0].mxu0 %v2765
      %v3909 = vpop.f32.mrb[0].mxu0
      %v3910 = vadd.f32 %v1084, %v3909
      %v3911 = vpop.f32.mrb[0].mxu0
      %v3912 = vpop.f32.mrb[0].mxu0
      %v3913 = vadd.f32 %v1089, %v3912
      %v3914 = vpop.f32.mrb[0].mxu0
      %3915 = vmatprep.mubr.bf16.mxu0 %v2772
      %3916 = vmatmul.mubr.bf16.gmra.mrb[0].mxu0 %v2771
      %v3917 = vpop.f32.mrb[0].mxu0
      %v3918 = vadd.f32 %v1094, %v3917
      %v3919 = vpop.f32.mrb[0].mxu0
      %v3920 = vpop.f32.mrb[0].mxu0
      %v3921 = vadd.f32 %v1099, %v3920
      %v3922 = vpop.f32.mrb[0].mxu0
      %3923 = vmatprep.mubr.bf16.mxu0 %v2778
      %3924 = vmatmul.mubr.bf16.gmra.mrb[0].mxu0 %v2777
      %v3925 = vpop.f32.mrb[0].mxu0
      %v3926 = vadd.f32 %v1104, %v3925
      %v3927 = vpop.f32.mrb[0].mxu0
      %v3928 = vpop.f32.mrb[0].mxu0
      %v3929 = vadd.f32 %v1109, %v3928
      %v3930 = vpop.f32.mrb[0].mxu0
      %3931 = vmatprep.mubr.bf16.mxu0 %v2784
      %3932 = vmatmul.mubr.bf16.gmra.mrb[0].mxu0 %v2783
      %v3933 = vpop.f32.mrb[0].mxu0
      %v3934 = vadd.f32 %v1114, %v3933
      %v3935 = vpop.f32.mrb[0].mxu0
      %v3936 = vpop.f32.mrb[0].mxu0
      %v3937 = vadd.f32 %v1119, %v3936
      %v3938 = vpop.f32.mrb[0].mxu0
      %3939 = vmatprep.mubr.bf16.mxu0 %v2790
      %3940 = vmatmul.mubr.bf16.gmra.mrb[0].mxu0 %v2789
      %v3941 = vpop.f32.mrb[0].mxu0
      %v3942 = vadd.f32 %v1124, %v3941
      %v3943 = vpop.f32.mrb[0].mxu0
      %v3944 = vpop.f32.mrb[0].mxu0
      %v3945 = vadd.f32 %v1129, %v3944
      %v3946 = vpop.f32.mrb[0].mxu0
      %3947 = vmatprep.mubr.bf16.mxu0 %v2796
      %3948 = vmatmul.mubr.bf16.gmra.mrb[0].mxu0 %v2795
      %v3949 = vpop.f32.mrb[0].mxu0
      %v3950 = vadd.f32 %v1134, %v3949
      %v3951 = vpop.f32.mrb[0].mxu0
      %v3952 = vpop.f32.mrb[0].mxu0
      %v3953 = vadd.f32 %v1139, %v3952
      %v3954 = vpop.f32.mrb[0].mxu0
      %3955 = vmatprep.mubr.bf16.mxu0 %v2802
      %3956 = vmatmul.mubr.bf16.gmra.mrb[0].mxu0 %v2801
      %v3957 = vpop.f32.mrb[0].mxu0
      %v3958 = vadd.f32 %v1144, %v3957
      %v3959 = vpop.f32.mrb[0].mxu0
      %v3960 = vpop.f32.mrb[0].mxu0
      %v3961 = vadd.f32 %v1149, %v3960
      %v3962 = vpop.f32.mrb[0].mxu0
      %3963 = vmatprep.mubr.bf16.mxu0 %v2808
      %3964 = vmatmul.mubr.bf16.gmra.mrb[0].mxu0 %v2807
      %v3965 = vpop.f32.mrb[0].mxu0
      %v3966 = vadd.f32 %v1154, %v3965
      %v3967 = vpop.f32.mrb[0].mxu0
      %v3968 = vpop.f32.mrb[0].mxu0
      %v3969 = vadd.f32 %v1159, %v3968
      %v3970 = vpop.f32.mrb[0].mxu0
      %3971 = vmatprep.mubr.bf16.mxu0 %v2814
      %3972 = vmatmul.mubr.bf16.gmra.mrb[0].mxu0 %v2813
      %v3973 = vpop.f32.mrb[0].mxu0
      %v3974 = vadd.f32 %v1164, %v3973
      %v3975 = vpop.f32.mrb[0].mxu0
      %v3976 = vpop.f32.mrb[0].mxu0
      %v3977 = vadd.f32 %v1169, %v3976
      %v3978 = vpop.f32.mrb[0].mxu0
      %3979 = vmatprep.mubr.bf16.mxu0 %v2820
      %3980 = vmatmul.mubr.bf16.gmra.mrb[0].mxu0 %v2819
      %v3981 = vpop.f32.mrb[0].mxu0
      %v3982 = vadd.f32 %v1174, %v3981
      %v3983 = vpop.f32.mrb[0].mxu0
      %v3984 = vpop.f32.mrb[0].mxu0
      %v3985 = vadd.f32 %v1179, %v3984
      %v3986 = vpop.f32.mrb[0].mxu0
      %3987 = vmatprep.mubr.bf16.mxu0 %v2826
      %3988 = vmatmul.mubr.bf16.gmra.mrb[0].mxu0 %v2825
      %v3989 = vpop.f32.mrb[0].mxu0
      %v3990 = vadd.f32 %v1184, %v3989
      %v3991 = vpop.f32.mrb[0].mxu0
      %v3992 = vpop.f32.mrb[0].mxu0
      %v3993 = vadd.f32 %v1189, %v3992
      %v3994 = vpop.f32.mrb[0].mxu0
      %3995 = vmatprep.mubr.bf16.mxu0 %v2832
      %3996 = vmatmul.mubr.bf16.gmra.mrb[0].mxu0 %v2831
      %v3997 = vpop.f32.mrb[0].mxu0
      %v3998 = vadd.f32 %v1194, %v3997
      %v3999 = vpop.f32.mrb[0].mxu0
      %v4000 = vpop.f32.mrb[0].mxu0
      %v4001 = vadd.f32 %v1199, %v4000
      %v4002 = vpop.f32.mrb[0].mxu0
      %4003 = vmatprep.mubr.bf16.mxu0 %v2838
      %4004 = vmatmul.mubr.bf16.gmra.mrb[0].mxu0 %v2837
      %v4005 = vpop.f32.mrb[0].mxu0
      %v4006 = vadd.f32 %v1204, %v4005
      %v4007 = vpop.f32.mrb[0].mxu0
      %v4008 = vpop.f32.mrb[0].mxu0
      %v4009 = vadd.f32 %v1209, %v4008
      %v4010 = vpop.f32.mrb[0].mxu0
      %4011 = vmatprep.mubr.bf16.mxu0 %v2844
      %4012 = vmatmul.mubr.bf16.gmra.mrb[0].mxu0 %v2843
      %v4013 = vpop.f32.mrb[0].mxu0
      %v4014 = vadd.f32 %v1214, %v4013
      %v4015 = vpop.f32.mrb[0].mxu0
      %v4016 = vpop.f32.mrb[0].mxu0
      %v4017 = vadd.f32 %v1219, %v4016
      %v4018 = vpop.f32.mrb[0].mxu0
      %4019 = vmatprep.mubr.bf16.mxu0 %v2850
      %4020 = vmatmul.mubr.bf16.gmra.mrb[0].mxu0 %v2849
      %v4021 = vpop.f32.mrb[0].mxu0
      %v4022 = vadd.f32 %v1224, %v4021
      %v4023 = vpop.f32.mrb[0].mxu0
      %v4024 = vpop.f32.mrb[0].mxu0
      %v4025 = vadd.f32 %v1229, %v4024
      %v4026 = vpop.f32.mrb[0].mxu0
      %4027 = vmatprep.mubr.bf16.mxu0 %v2856
      %4028 = vmatmul.mubr.bf16.gmra.mrb[0].mxu0 %v2855
      %v4029 = vpop.f32.mrb[0].mxu0
      %v4030 = vadd.f32 %v1234, %v4029
      %v4031 = vpop.f32.mrb[0].mxu0
      %v4032 = vpop.f32.mrb[0].mxu0
      %v4033 = vadd.f32 %v1239, %v4032
      %v4034 = vpop.f32.mrb[0].mxu0
      %4035 = vmatprep.mubr.bf16.mxu0 %v2862
      %4036 = vmatmul.mubr.bf16.gmra.mrb[0].mxu0 %v2861
      %v4037 = vpop.f32.mrb[0].mxu0
      %v4038 = vadd.f32 %v1244, %v4037
      %v4039 = vpop.f32.mrb[0].mxu0
      %v4040 = vpop.f32.mrb[0].mxu0
      %v4041 = vadd.f32 %v1249, %v4040
      %v4042 = vpop.f32.mrb[0].mxu0
      %4043 = vmatprep.mubr.bf16.mxu0 %v2868
      %4044 = vmatmul.mubr.bf16.gmra.mrb[0].mxu0 %v2867
      %v4045 = vpop.f32.mrb[0].mxu0
      %v4046 = vadd.f32 %v1254, %v4045
      %v4047 = vpop.f32.mrb[0].mxu0
      %v4048 = vpop.f32.mrb[0].mxu0
      %v4049 = vadd.f32 %v1259, %v4048
      %v4050 = vpop.f32.mrb[0].mxu0
      %4051 = vmatprep.mubr.bf16.mxu0 %v2874
      %4052 = vmatmul.mubr.bf16.gmra.mrb[0].mxu0 %v2873
      %v4053 = vpop.f32.mrb[0].mxu0
      %v4054 = vadd.f32 %v1264, %v4053
      %v4055 = vpop.f32.mrb[0].mxu0
      %v4056 = vpop.f32.mrb[0].mxu0
      %v4057 = vadd.f32 %v1269, %v4056
      %v4058 = vpop.f32.mrb[0].mxu0
      %4059 = vmatprep.mubr.bf16.mxu0 %v2880
      %4060 = vmatmul.mubr.bf16.gmra.mrb[0].mxu0 %v2879
      %v4061 = vpop.f32.mrb[0].mxu0
      %v4062 = vadd.f32 %v1274, %v4061
      %v4063 = vpop.f32.mrb[0].mxu0
      %v4064 = vpop.f32.mrb[0].mxu0
      %v4065 = vadd.f32 %v1279, %v4064
      %v4066 = vpop.f32.mrb[0].mxu0
      %4067 = vmatprep.mubr.bf16.mxu0 %v2886
      %4068 = vmatmul.mubr.bf16.gmra.mrb[0].mxu0 %v2885
      %v4069 = vpop.f32.mrb[0].mxu0
      %v4070 = vadd.f32 %v1284, %v4069
      %v4071 = vpop.f32.mrb[0].mxu0
      %v4072 = vpop.f32.mrb[0].mxu0
      %v4073 = vadd.f32 %v1289, %v4072
      %v4074 = vpop.f32.mrb[0].mxu0
      %4075 = vmatprep.mubr.bf16.mxu0 %v2892
      %4076 = vmatmul.mubr.bf16.gmra.mrb[0].mxu0 %v2891
      %v4077 = vpop.f32.mrb[0].mxu0
      %v4078 = vadd.f32 %v1294, %v4077
      %v4079 = vpop.f32.mrb[0].mxu0
      %v4080 = vpop.f32.mrb[0].mxu0
      %v4081 = vadd.f32 %v1299, %v4080
      %v4082 = vpop.f32.mrb[0].mxu0
      %4083 = vmatprep.mubr.bf16.mxu0 %v2898
      %4084 = vmatmul.mubr.bf16.gmra.mrb[0].mxu0 %v2897
      %v4085 = vpop.f32.mrb[0].mxu0
      %v4086 = vadd.f32 %v1304, %v4085
      %v4087 = vpop.f32.mrb[0].mxu0
      %v4088 = vpop.f32.mrb[0].mxu0
      %v4089 = vadd.f32 %v1309, %v4088
      %v4090 = vpop.f32.mrb[0].mxu0
      %4091 = vmatprep.mubr.bf16.mxu0 %v2904
      %4092 = vmatmul.mubr.bf16.gmra.mrb[0].mxu0 %v2903
      %v4093 = vpop.f32.mrb[0].mxu0
      %v4094 = vadd.f32 %v1314, %v4093
      %v4095 = vpop.f32.mrb[0].mxu0
      %v4096 = vpop.f32.mrb[0].mxu0
      %v4097 = vadd.f32 %v1319, %v4096
      %v4098 = vpop.f32.mrb[0].mxu0
      %4099 = vmatprep.mubr.bf16.mxu0 %v2910
      %4100 = vmatmul.mubr.bf16.gmra.mrb[0].mxu0 %v2909
      %v4101 = vpop.f32.mrb[0].mxu0
      %v4102 = vadd.f32 %v1324, %v4101
      %v4103 = vpop.f32.mrb[0].mxu0
      %v4104 = vpop.f32.mrb[0].mxu0
      %v4105 = vadd.f32 %v1329, %v4104
      %v4106 = vpop.f32.mrb[0].mxu0
      %4107 = vmatprep.mubr.bf16.mxu0 %v2916
      %4108 = vmatmul.mubr.bf16.gmra.mrb[0].mxu0 %v2915
      %v4109 = vpop.f32.mrb[0].mxu0
      %v4110 = vadd.f32 %v1334, %v4109
      %v4111 = vpop.f32.mrb[0].mxu0
      %v4112 = vpop.f32.mrb[0].mxu0
      %v4113 = vadd.f32 %v1339, %v4112
      %v4114 = vpop.f32.mrb[0].mxu0
      %4115 = vmatprep.mubr.bf16.mxu0 %v2922
      %4116 = vmatmul.mubr.bf16.gmra.mrb[0].mxu0 %v2921
      %v4117 = vpop.f32.mrb[0].mxu0
      %v4118 = vadd.f32 %v1344, %v4117
      %v4119 = vpop.f32.mrb[0].mxu0
      %v4120 = vpop.f32.mrb[0].mxu0
      %v4121 = vadd.f32 %v1349, %v4120
      %v4122 = vpop.f32.mrb[0].mxu0
      %4123 = vmatprep.mubr.bf16.mxu0 %v2928
      %4124 = vmatmul.mubr.bf16.gmra.mrb[0].mxu0 %v2927
      %v4125 = vpop.f32.mrb[0].mxu0
      %v4126 = vadd.f32 %v1354, %v4125
      %v4127 = vpop.f32.mrb[0].mxu0
      %v4128 = vpop.f32.mrb[0].mxu0
      %v4129 = vadd.f32 %v1359, %v4128
      %v4130 = vpop.f32.mrb[0].mxu0
      %4131 = vmatprep.mubr.bf16.mxu0 %v2934
      %4132 = vmatmul.mubr.bf16.gmra.mrb[0].mxu0 %v2933
      %v4133 = vpop.f32.mrb[0].mxu0
      %v4134 = vadd.f32 %v1364, %v4133
      %v4135 = vpop.f32.mrb[0].mxu0
      %v4136 = vpop.f32.mrb[0].mxu0
      %v4137 = vadd.f32 %v1369, %v4136
      %v4138 = vpop.f32.mrb[0].mxu0
      %4139 = vmatprep.mubr.bf16.mxu0 %v2940
      %4140 = vmatmul.mubr.bf16.gmra.mrb[0].mxu0 %v2939
      %v4141 = vpop.f32.mrb[0].mxu0
      %v4142 = vadd.f32 %v1374, %v4141
      %v4143 = vpop.f32.mrb[0].mxu0
      %v4144 = vpop.f32.mrb[0].mxu0
      %v4145 = vadd.f32 %v1379, %v4144
      %v4146 = vpop.f32.mrb[0].mxu0
      %4147 = vmatprep.mubr.bf16.mxu0 %v2946
      %4148 = vmatmul.mubr.bf16.gmra.mrb[0].mxu0 %v2945
      %v4149 = vpop.f32.mrb[0].mxu0
      %v4150 = vadd.f32 %v1384, %v4149
      %v4151 = vpop.f32.mrb[0].mxu0
      %v4152 = vpop.f32.mrb[0].mxu0
      %v4153 = vadd.f32 %v1389, %v4152
      %v4154 = vpop.f32.mrb[0].mxu0
      %4155 = vmatprep.mubr.bf16.mxu0 %v2952
      %4156 = vmatmul.mubr.bf16.gmra.mrb[0].mxu0 %v2951
      %v4157 = vpop.f32.mrb[0].mxu0
      %v4158 = vadd.f32 %v1394, %v4157
      %v4159 = vpop.f32.mrb[0].mxu0
      %v4160 = vpop.f32.mrb[0].mxu0
      %v4161 = vadd.f32 %v1399, %v4160
      %v4162 = vpop.f32.mrb[0].mxu0
      %4163 = vmatprep.mubr.bf16.mxu0 %v2958
      %4164 = vmatmul.mubr.bf16.gmra.mrb[0].mxu0 %v2957
      %v4165 = vpop.f32.mrb[0].mxu0
      %v4166 = vadd.f32 %v1404, %v4165
      %v4167 = vpop.f32.mrb[0].mxu0
      %v4168 = vpop.f32.mrb[0].mxu0
      %v4169 = vadd.f32 %v1409, %v4168
      %v4170 = vpop.f32.mrb[0].mxu0
      %4171 = vmatprep.mubr.bf16.mxu0 %v2964
      %4172 = vmatmul.mubr.bf16.gmra.mrb[0].mxu0 %v2963
      %v4173 = vpop.f32.mrb[0].mxu0
      %v4174 = vadd.f32 %v1414, %v4173
      %v4175 = vpop.f32.mrb[0].mxu0
      %v4176 = vpop.f32.mrb[0].mxu0
      %v4177 = vadd.f32 %v1419, %v4176
      %v4178 = vpop.f32.mrb[0].mxu0
      %4179 = vmatprep.mubr.bf16.mxu0 %v2970
      %4180 = vmatmul.mubr.bf16.gmra.mrb[0].mxu0 %v2969
      %v4181 = vpop.f32.mrb[0].mxu0
      %v4182 = vadd.f32 %v1424, %v4181
      %v4183 = vpop.f32.mrb[0].mxu0
      %v4184 = vpop.f32.mrb[0].mxu0
      %v4185 = vadd.f32 %v1429, %v4184
      %v4186 = vpop.f32.mrb[0].mxu0
      %4187 = vmatprep.mubr.bf16.mxu0 %v2976
      %4188 = vmatmul.mubr.bf16.gmra.mrb[0].mxu0 %v2975
      %v4189 = vpop.f32.mrb[0].mxu0
      %v4190 = vadd.f32 %v1434, %v4189
      %v4191 = vpop.f32.mrb[0].mxu0
      %v4192 = vpop.f32.mrb[0].mxu0
      %v4193 = vadd.f32 %v1439, %v4192
      %v4194 = vpop.f32.mrb[0].mxu0
      %4195 = vmatprep.mubr.bf16.mxu0 %v2982
      %4196 = vmatmul.mubr.bf16.gmra.mrb[0].mxu0 %v2981
      %v4197 = vpop.f32.mrb[0].mxu0
      %v4198 = vadd.f32 %v1444, %v4197
      %v4199 = vpop.f32.mrb[0].mxu0
      %v4200 = vpop.f32.mrb[0].mxu0
      %v4201 = vadd.f32 %v1449, %v4200
      %v4202 = vpop.f32.mrb[0].mxu0
      %4203 = vdwg.mxu0
      %4204 = vmatprep.subr.bf16.mxu0 0
      %4205 = vmatpush1.bf16.msra.mxu0 %v3579
      %4206 = vmatprep.subr.bf16.mxu0 0
      %4207 = vmatpush1.bf16.msra.mxu0 %v3580
      %4208 = vmatprep.subr.bf16.mxu0 0
      %4209 = vmatpush1.bf16.msra.mxu0 %v3581
      %4210 = vmatprep.subr.bf16.mxu0 0
      %4211 = vmatpush1.bf16.msra.mxu0 %v3582
      %4212 = vmatprep.subr.bf16.mxu0 0
      %4213 = vmatpush1.bf16.msra.mxu0 %v3583
      %4214 = vmatprep.subr.bf16.mxu0 0
      %4215 = vmatpush1.bf16.msra.mxu0 %v3584
      %4216 = vmatprep.subr.bf16.mxu0 0
      %4217 = vmatpush1.bf16.msra.mxu0 %v3585
      %4218 = vmatprep.subr.bf16.mxu0 0
      %4219 = vmatpush1.bf16.msra.mxu0 %v3586
      %4220 = vmatprep.subr.bf16.mxu0 0
      %4221 = vmatpush1.bf16.msra.mxu0 %v3587
      %4222 = vmatprep.subr.bf16.mxu0 0
      %4223 = vmatpush1.bf16.msra.mxu0 %v3588
      %4224 = vmatprep.subr.bf16.mxu0 0
      %4225 = vmatpush1.bf16.msra.mxu0 %v3589
      %4226 = vmatprep.subr.bf16.mxu0 0
      %4227 = vmatpush1.bf16.msra.mxu0 %v3590
      %4228 = vmatprep.subr.bf16.mxu0 0
      %4229 = vmatpush1.bf16.msra.mxu0 %v3591
      %4230 = vmatprep.subr.bf16.mxu0 0
      %4231 = vmatpush1.bf16.msra.mxu0 %v3592
      %4232 = vmatprep.subr.bf16.mxu0 0
      %4233 = vmatpush1.bf16.msra.mxu0 %v3593
      %4234 = vmatprep.subr.bf16.mxu0 0
      %4235 = vmatpush1.bf16.msra.mxu0 %v3594
      %4236 = vmatprep.mubr.bf16.mxu0 %v2606
      %4237 = vmatmul.mubr.bf16.gmra.mrb[0].mxu0 %v2605
      %v4238 = vpop.f32.mrb[0].mxu0
      %v4239 = vadd.f32 %v3694, %v4238
      %v4240 = vpop.f32.mrb[0].mxu0
      %v4241 = vpop.f32.mrb[0].mxu0
      %v4242 = vadd.f32 %v3697, %v4241
      %v4243 = vpop.f32.mrb[0].mxu0
      %4244 = vmatprep.mubr.bf16.mxu0 %v2612
      %4245 = vmatmul.mubr.bf16.gmra.mrb[0].mxu0 %v2611
      %v4246 = vpop.f32.mrb[0].mxu0
      %v4247 = vadd.f32 %v3702, %v4246
      %v4248 = vpop.f32.mrb[0].mxu0
      %v4249 = vpop.f32.mrb[0].mxu0
      %v4250 = vadd.f32 %v3705, %v4249
      %v4251 = vpop.f32.mrb[0].mxu0
      %4252 = vmatprep.mubr.bf16.mxu0 %v2618
      %4253 = vmatmul.mubr.bf16.gmra.mrb[0].mxu0 %v2617
      %v4254 = vpop.f32.mrb[0].mxu0
      %v4255 = vadd.f32 %v3710, %v4254
      %v4256 = vpop.f32.mrb[0].mxu0
      %v4257 = vpop.f32.mrb[0].mxu0
      %v4258 = vadd.f32 %v3713, %v4257
      %v4259 = vpop.f32.mrb[0].mxu0
      %4260 = vmatprep.mubr.bf16.mxu0 %v2624
      %4261 = vmatmul.mubr.bf16.gmra.mrb[0].mxu0 %v2623
      %v4262 = vpop.f32.mrb[0].mxu0
      %v4263 = vadd.f32 %v3718, %v4262
      %v4264 = vpop.f32.mrb[0].mxu0
      %v4265 = vpop.f32.mrb[0].mxu0
      %v4266 = vadd.f32 %v3721, %v4265
      %v4267 = vpop.f32.mrb[0].mxu0
      %4268 = vmatprep.mubr.bf16.mxu0 %v2630
      %4269 = vmatmul.mubr.bf16.gmra.mrb[0].mxu0 %v2629
      %v4270 = vpop.f32.mrb[0].mxu0
      %v4271 = vadd.f32 %v3726, %v4270
      %v4272 = vpop.f32.mrb[0].mxu0
      %v4273 = vpop.f32.mrb[0].mxu0
      %v4274 = vadd.f32 %v3729, %v4273
      %v4275 = vpop.f32.mrb[0].mxu0
      %4276 = vmatprep.mubr.bf16.mxu0 %v2636
      %4277 = vmatmul.mubr.bf16.gmra.mrb[0].mxu0 %v2635
      %v4278 = vpop.f32.mrb[0].mxu0
      %v4279 = vadd.f32 %v3734, %v4278
      %v4280 = vpop.f32.mrb[0].mxu0
      %v4281 = vpop.f32.mrb[0].mxu0
      %v4282 = vadd.f32 %v3737, %v4281
      %v4283 = vpop.f32.mrb[0].mxu0
      %4284 = vmatprep.mubr.bf16.mxu0 %v2642
      %4285 = vmatmul.mubr.bf16.gmra.mrb[0].mxu0 %v2641
      %v4286 = vpop.f32.mrb[0].mxu0
      %v4287 = vadd.f32 %v3742, %v4286
      %v4288 = vpop.f32.mrb[0].mxu0
      %v4289 = vpop.f32.mrb[0].mxu0
      %v4290 = vadd.f32 %v3745, %v4289
      %v4291 = vpop.f32.mrb[0].mxu0
      %4292 = vmatprep.mubr.bf16.mxu0 %v2648
      %4293 = vmatmul.mubr.bf16.gmra.mrb[0].mxu0 %v2647
      %v4294 = vpop.f32.mrb[0].mxu0
      %v4295 = vadd.f32 %v3750, %v4294
      %v4296 = vpop.f32.mrb[0].mxu0
      %v4297 = vpop.f32.mrb[0].mxu0
      %v4298 = vadd.f32 %v3753, %v4297
      %v4299 = vpop.f32.mrb[0].mxu0
      %4300 = vmatprep.mubr.bf16.mxu0 %v2654
      %4301 = vmatmul.mubr.bf16.gmra.mrb[0].mxu0 %v2653
      %v4302 = vpop.f32.mrb[0].mxu0
      %v4303 = vadd.f32 %v3758, %v4302
      %v4304 = vpop.f32.mrb[0].mxu0
      %v4305 = vpop.f32.mrb[0].mxu0
      %v4306 = vadd.f32 %v3761, %v4305
      %v4307 = vpop.f32.mrb[0].mxu0
      %4308 = vmatprep.mubr.bf16.mxu0 %v2660
      %4309 = vmatmul.mubr.bf16.gmra.mrb[0].mxu0 %v2659
      %v4310 = vpop.f32.mrb[0].mxu0
      %v4311 = vadd.f32 %v3766, %v4310
      %v4312 = vpop.f32.mrb[0].mxu0
      %v4313 = vpop.f32.mrb[0].mxu0
      %v4314 = vadd.f32 %v3769, %v4313
      %v4315 = vpop.f32.mrb[0].mxu0
      %4316 = vmatprep.mubr.bf16.mxu0 %v2666
      %4317 = vmatmul.mubr.bf16.gmra.mrb[0].mxu0 %v2665
      %v4318 = vpop.f32.mrb[0].mxu0
      %v4319 = vadd.f32 %v3774, %v4318
      %v4320 = vpop.f32.mrb[0].mxu0
      %v4321 = vpop.f32.mrb[0].mxu0
      %v4322 = vadd.f32 %v3777, %v4321
      %v4323 = vpop.f32.mrb[0].mxu0
      %4324 = vmatprep.mubr.bf16.mxu0 %v2672
      %4325 = vmatmul.mubr.bf16.gmra.mrb[0].mxu0 %v2671
      %v4326 = vpop.f32.mrb[0].mxu0
      %v4327 = vadd.f32 %v3782, %v4326
      %v4328 = vpop.f32.mrb[0].mxu0
      %v4329 = vpop.f32.mrb[0].mxu0
      %v4330 = vadd.f32 %v3785, %v4329
      %v4331 = vpop.f32.mrb[0].mxu0
      %4332 = vmatprep.mubr.bf16.mxu0 %v2678
      %4333 = vmatmul.mubr.bf16.gmra.mrb[0].mxu0 %v2677
      %v4334 = vpop.f32.mrb[0].mxu0
      %v4335 = vadd.f32 %v3790, %v4334
      %v4336 = vpop.f32.mrb[0].mxu0
      %v4337 = vpop.f32.mrb[0].mxu0
      %v4338 = vadd.f32 %v3793, %v4337
      %v4339 = vpop.f32.mrb[0].mxu0
      %4340 = vmatprep.mubr.bf16.mxu0 %v2684
      %4341 = vmatmul.mubr.bf16.gmra.mrb[0].mxu0 %v2683
      %v4342 = vpop.f32.mrb[0].mxu0
      %v4343 = vadd.f32 %v3798, %v4342
      %v4344 = vpop.f32.mrb[0].mxu0
      %v4345 = vpop.f32.mrb[0].mxu0
      %v4346 = vadd.f32 %v3801, %v4345
      %v4347 = vpop.f32.mrb[0].mxu0
      %4348 = vmatprep.mubr.bf16.mxu0 %v2690
      %4349 = vmatmul.mubr.bf16.gmra.mrb[0].mxu0 %v2689
      %v4350 = vpop.f32.mrb[0].mxu0
      %v4351 = vadd.f32 %v3806, %v4350
      %v4352 = vpop.f32.mrb[0].mxu0
      %v4353 = vpop.f32.mrb[0].mxu0
      %v4354 = vadd.f32 %v3809, %v4353
      %v4355 = vpop.f32.mrb[0].mxu0
      %4356 = vmatprep.mubr.bf16.mxu0 %v2696
      %4357 = vmatmul.mubr.bf16.gmra.mrb[0].mxu0 %v2695
      %v4358 = vpop.f32.mrb[0].mxu0
      %v4359 = vadd.f32 %v3814, %v4358
      %v4360 = vpop.f32.mrb[0].mxu0
      %v4361 = vpop.f32.mrb[0].mxu0
      %v4362 = vadd.f32 %v3817, %v4361
      %v4363 = vpop.f32.mrb[0].mxu0
      %4364 = vmatprep.mubr.bf16.mxu0 %v2702
      %4365 = vmatmul.mubr.bf16.gmra.mrb[0].mxu0 %v2701
      %v4366 = vpop.f32.mrb[0].mxu0
      %v4367 = vadd.f32 %v3822, %v4366
      %v4368 = vpop.f32.mrb[0].mxu0
      %v4369 = vpop.f32.mrb[0].mxu0
      %v4370 = vadd.f32 %v3825, %v4369
      %v4371 = vpop.f32.mrb[0].mxu0
      %4372 = vmatprep.mubr.bf16.mxu0 %v2708
      %4373 = vmatmul.mubr.bf16.gmra.mrb[0].mxu0 %v2707
      %v4374 = vpop.f32.mrb[0].mxu0
      %v4375 = vadd.f32 %v3830, %v4374
      %v4376 = vpop.f32.mrb[0].mxu0
      %v4377 = vpop.f32.mrb[0].mxu0
      %v4378 = vadd.f32 %v3833, %v4377
      %v4379 = vpop.f32.mrb[0].mxu0
      %4380 = vmatprep.mubr.bf16.mxu0 %v2714
      %4381 = vmatmul.mubr.bf16.gmra.mrb[0].mxu0 %v2713
      %v4382 = vpop.f32.mrb[0].mxu0
      %v4383 = vadd.f32 %v3838, %v4382
      %v4384 = vpop.f32.mrb[0].mxu0
      %v4385 = vpop.f32.mrb[0].mxu0
      %v4386 = vadd.f32 %v3841, %v4385
      %v4387 = vpop.f32.mrb[0].mxu0
      %4388 = vmatprep.mubr.bf16.mxu0 %v2720
      %4389 = vmatmul.mubr.bf16.gmra.mrb[0].mxu0 %v2719
      %v4390 = vpop.f32.mrb[0].mxu0
      %v4391 = vadd.f32 %v3846, %v4390
      %v4392 = vpop.f32.mrb[0].mxu0
      %v4393 = vpop.f32.mrb[0].mxu0
      %v4394 = vadd.f32 %v3849, %v4393
      %v4395 = vpop.f32.mrb[0].mxu0
      %4396 = vmatprep.mubr.bf16.mxu0 %v2726
      %4397 = vmatmul.mubr.bf16.gmra.mrb[0].mxu0 %v2725
      %v4398 = vpop.f32.mrb[0].mxu0
      %v4399 = vadd.f32 %v3854, %v4398
      %v4400 = vpop.f32.mrb[0].mxu0
      %v4401 = vpop.f32.mrb[0].mxu0
      %v4402 = vadd.f32 %v3857, %v4401
      %v4403 = vpop.f32.mrb[0].mxu0
      %4404 = vmatprep.mubr.bf16.mxu0 %v2732
      %4405 = vmatmul.mubr.bf16.gmra.mrb[0].mxu0 %v2731
      %v4406 = vpop.f32.mrb[0].mxu0
      %v4407 = vadd.f32 %v3862, %v4406
      %v4408 = vpop.f32.mrb[0].mxu0
      %v4409 = vpop.f32.mrb[0].mxu0
      %v4410 = vadd.f32 %v3865, %v4409
      %v4411 = vpop.f32.mrb[0].mxu0
      %4412 = vmatprep.mubr.bf16.mxu0 %v2738
      %4413 = vmatmul.mubr.bf16.gmra.mrb[0].mxu0 %v2737
      %v4414 = vpop.f32.mrb[0].mxu0
      %v4415 = vadd.f32 %v3870, %v4414
      %v4416 = vpop.f32.mrb[0].mxu0
      %v4417 = vpop.f32.mrb[0].mxu0
      %v4418 = vadd.f32 %v3873, %v4417
      %v4419 = vpop.f32.mrb[0].mxu0
      %4420 = vmatprep.mubr.bf16.mxu0 %v2744
      %4421 = vmatmul.mubr.bf16.gmra.mrb[0].mxu0 %v2743
      %v4422 = vpop.f32.mrb[0].mxu0
      %v4423 = vadd.f32 %v3878, %v4422
      %v4424 = vpop.f32.mrb[0].mxu0
      %v4425 = vpop.f32.mrb[0].mxu0
      %v4426 = vadd.f32 %v3881, %v4425
      %v4427 = vpop.f32.mrb[0].mxu0
      %4428 = vmatprep.mubr.bf16.mxu0 %v2750
      %4429 = vmatmul.mubr.bf16.gmra.mrb[0].mxu0 %v2749
      %v4430 = vpop.f32.mrb[0].mxu0
      %v4431 = vadd.f32 %v3886, %v4430
      %v4432 = vpop.f32.mrb[0].mxu0
      %v4433 = vpop.f32.mrb[0].mxu0
      %v4434 = vadd.f32 %v3889, %v4433
      %v4435 = vpop.f32.mrb[0].mxu0
      %4436 = vmatprep.mubr.bf16.mxu0 %v2756
      %4437 = vmatmul.mubr.bf16.gmra.mrb[0].mxu0 %v2755
      %v4438 = vpop.f32.mrb[0].mxu0
      %v4439 = vadd.f32 %v3894, %v4438
      %v4440 = vpop.f32.mrb[0].mxu0
      %v4441 = vpop.f32.mrb[0].mxu0
      %v4442 = vadd.f32 %v3897, %v4441
      %v4443 = vpop.f32.mrb[0].mxu0
      %4444 = vmatprep.mubr.bf16.mxu0 %v2762
      %4445 = vmatmul.mubr.bf16.gmra.mrb[0].mxu0 %v2761
      %v4446 = vpop.f32.mrb[0].mxu0
      %v4447 = vadd.f32 %v3902, %v4446
      %v4448 = vpop.f32.mrb[0].mxu0
      %v4449 = vpop.f32.mrb[0].mxu0
      %v4450 = vadd.f32 %v3905, %v4449
      %v4451 = vpop.f32.mrb[0].mxu0
      %4452 = vmatprep.mubr.bf16.mxu0 %v2768
      %4453 = vmatmul.mubr.bf16.gmra.mrb[0].mxu0 %v2767
      %v4454 = vpop.f32.mrb[0].mxu0
      %v4455 = vadd.f32 %v3910, %v4454
      %v4456 = vpop.f32.mrb[0].mxu0
      %v4457 = vpop.f32.mrb[0].mxu0
      %v4458 = vadd.f32 %v3913, %v4457
      %v4459 = vpop.f32.mrb[0].mxu0
      %4460 = vmatprep.mubr.bf16.mxu0 %v2774
      %4461 = vmatmul.mubr.bf16.gmra.mrb[0].mxu0 %v2773
      %v4462 = vpop.f32.mrb[0].mxu0
      %v4463 = vadd.f32 %v3918, %v4462
      %v4464 = vpop.f32.mrb[0].mxu0
      %v4465 = vpop.f32.mrb[0].mxu0
      %v4466 = vadd.f32 %v3921, %v4465
      %v4467 = vpop.f32.mrb[0].mxu0
      %4468 = vmatprep.mubr.bf16.mxu0 %v2780
      %4469 = vmatmul.mubr.bf16.gmra.mrb[0].mxu0 %v2779
      %v4470 = vpop.f32.mrb[0].mxu0
      %v4471 = vadd.f32 %v3926, %v4470
      %v4472 = vpop.f32.mrb[0].mxu0
      %v4473 = vpop.f32.mrb[0].mxu0
      %v4474 = vadd.f32 %v3929, %v4473
      %v4475 = vpop.f32.mrb[0].mxu0
      %4476 = vmatprep.mubr.bf16.mxu0 %v2786
      %4477 = vmatmul.mubr.bf16.gmra.mrb[0].mxu0 %v2785
      %v4478 = vpop.f32.mrb[0].mxu0
      %v4479 = vadd.f32 %v3934, %v4478
      %v4480 = vpop.f32.mrb[0].mxu0
      %v4481 = vpop.f32.mrb[0].mxu0
      %v4482 = vadd.f32 %v3937, %v4481
      %v4483 = vpop.f32.mrb[0].mxu0
      %4484 = vmatprep.mubr.bf16.mxu0 %v2792
      %4485 = vmatmul.mubr.bf16.gmra.mrb[0].mxu0 %v2791
      %v4486 = vpop.f32.mrb[0].mxu0
      %v4487 = vadd.f32 %v3942, %v4486
      %v4488 = vpop.f32.mrb[0].mxu0
      %v4489 = vpop.f32.mrb[0].mxu0
      %v4490 = vadd.f32 %v3945, %v4489
      %v4491 = vpop.f32.mrb[0].mxu0
      %4492 = vmatprep.mubr.bf16.mxu0 %v2798
      %4493 = vmatmul.mubr.bf16.gmra.mrb[0].mxu0 %v2797
      %v4494 = vpop.f32.mrb[0].mxu0
      %v4495 = vadd.f32 %v3950, %v4494
      %v4496 = vpop.f32.mrb[0].mxu0
      %v4497 = vpop.f32.mrb[0].mxu0
      %v4498 = vadd.f32 %v3953, %v4497
      %v4499 = vpop.f32.mrb[0].mxu0
      %4500 = vmatprep.mubr.bf16.mxu0 %v2804
      %4501 = vmatmul.mubr.bf16.gmra.mrb[0].mxu0 %v2803
      %v4502 = vpop.f32.mrb[0].mxu0
      %v4503 = vadd.f32 %v3958, %v4502
      %v4504 = vpop.f32.mrb[0].mxu0
      %v4505 = vpop.f32.mrb[0].mxu0
      %v4506 = vadd.f32 %v3961, %v4505
      %v4507 = vpop.f32.mrb[0].mxu0
      %4508 = vmatprep.mubr.bf16.mxu0 %v2810
      %4509 = vmatmul.mubr.bf16.gmra.mrb[0].mxu0 %v2809
      %v4510 = vpop.f32.mrb[0].mxu0
      %v4511 = vadd.f32 %v3966, %v4510
      %v4512 = vpop.f32.mrb[0].mxu0
      %v4513 = vpop.f32.mrb[0].mxu0
      %v4514 = vadd.f32 %v3969, %v4513
      %v4515 = vpop.f32.mrb[0].mxu0
      %4516 = vmatprep.mubr.bf16.mxu0 %v2816
      %4517 = vmatmul.mubr.bf16.gmra.mrb[0].mxu0 %v2815
      %v4518 = vpop.f32.mrb[0].mxu0
      %v4519 = vadd.f32 %v3974, %v4518
      %v4520 = vpop.f32.mrb[0].mxu0
      %v4521 = vpop.f32.mrb[0].mxu0
      %v4522 = vadd.f32 %v3977, %v4521
      %v4523 = vpop.f32.mrb[0].mxu0
      %4524 = vmatprep.mubr.bf16.mxu0 %v2822
      %4525 = vmatmul.mubr.bf16.gmra.mrb[0].mxu0 %v2821
      %v4526 = vpop.f32.mrb[0].mxu0
      %v4527 = vadd.f32 %v3982, %v4526
      %v4528 = vpop.f32.mrb[0].mxu0
      %v4529 = vpop.f32.mrb[0].mxu0
      %v4530 = vadd.f32 %v3985, %v4529
      %v4531 = vpop.f32.mrb[0].mxu0
      %4532 = vmatprep.mubr.bf16.mxu0 %v2828
      %4533 = vmatmul.mubr.bf16.gmra.mrb[0].mxu0 %v2827
      %v4534 = vpop.f32.mrb[0].mxu0
      %v4535 = vadd.f32 %v3990, %v4534
      %v4536 = vpop.f32.mrb[0].mxu0
      %v4537 = vpop.f32.mrb[0].mxu0
      %v4538 = vadd.f32 %v3993, %v4537
      %v4539 = vpop.f32.mrb[0].mxu0
      %4540 = vmatprep.mubr.bf16.mxu0 %v2834
      %4541 = vmatmul.mubr.bf16.gmra.mrb[0].mxu0 %v2833
      %v4542 = vpop.f32.mrb[0].mxu0
      %v4543 = vadd.f32 %v3998, %v4542
      %v4544 = vpop.f32.mrb[0].mxu0
      %v4545 = vpop.f32.mrb[0].mxu0
      %v4546 = vadd.f32 %v4001, %v4545
      %v4547 = vpop.f32.mrb[0].mxu0
      %4548 = vmatprep.mubr.bf16.mxu0 %v2840
      %4549 = vmatmul.mubr.bf16.gmra.mrb[0].mxu0 %v2839
      %v4550 = vpop.f32.mrb[0].mxu0
      %v4551 = vadd.f32 %v4006, %v4550
      %v4552 = vpop.f32.mrb[0].mxu0
      %v4553 = vpop.f32.mrb[0].mxu0
      %v4554 = vadd.f32 %v4009, %v4553
      %v4555 = vpop.f32.mrb[0].mxu0
      %4556 = vmatprep.mubr.bf16.mxu0 %v2846
      %4557 = vmatmul.mubr.bf16.gmra.mrb[0].mxu0 %v2845
      %v4558 = vpop.f32.mrb[0].mxu0
      %v4559 = vadd.f32 %v4014, %v4558
      %v4560 = vpop.f32.mrb[0].mxu0
      %v4561 = vpop.f32.mrb[0].mxu0
      %v4562 = vadd.f32 %v4017, %v4561
      %v4563 = vpop.f32.mrb[0].mxu0
      %4564 = vmatprep.mubr.bf16.mxu0 %v2852
      %4565 = vmatmul.mubr.bf16.gmra.mrb[0].mxu0 %v2851
      %v4566 = vpop.f32.mrb[0].mxu0
      %v4567 = vadd.f32 %v4022, %v4566
      %v4568 = vpop.f32.mrb[0].mxu0
      %v4569 = vpop.f32.mrb[0].mxu0
      %v4570 = vadd.f32 %v4025, %v4569
      %v4571 = vpop.f32.mrb[0].mxu0
      %4572 = vmatprep.mubr.bf16.mxu0 %v2858
      %4573 = vmatmul.mubr.bf16.gmra.mrb[0].mxu0 %v2857
      %v4574 = vpop.f32.mrb[0].mxu0
      %v4575 = vadd.f32 %v4030, %v4574
      %v4576 = vpop.f32.mrb[0].mxu0
      %v4577 = vpop.f32.mrb[0].mxu0
      %v4578 = vadd.f32 %v4033, %v4577
      %v4579 = vpop.f32.mrb[0].mxu0
      %4580 = vmatprep.mubr.bf16.mxu0 %v2864
      %4581 = vmatmul.mubr.bf16.gmra.mrb[0].mxu0 %v2863
      %v4582 = vpop.f32.mrb[0].mxu0
      %v4583 = vadd.f32 %v4038, %v4582
      %v4584 = vpop.f32.mrb[0].mxu0
      %v4585 = vpop.f32.mrb[0].mxu0
      %v4586 = vadd.f32 %v4041, %v4585
      %v4587 = vpop.f32.mrb[0].mxu0
      %4588 = vmatprep.mubr.bf16.mxu0 %v2870
      %4589 = vmatmul.mubr.bf16.gmra.mrb[0].mxu0 %v2869
      %v4590 = vpop.f32.mrb[0].mxu0
      %v4591 = vadd.f32 %v4046, %v4590
      %v4592 = vpop.f32.mrb[0].mxu0
      %v4593 = vpop.f32.mrb[0].mxu0
      %v4594 = vadd.f32 %v4049, %v4593
      %v4595 = vpop.f32.mrb[0].mxu0
      %4596 = vmatprep.mubr.bf16.mxu0 %v2876
      %4597 = vmatmul.mubr.bf16.gmra.mrb[0].mxu0 %v2875
      %v4598 = vpop.f32.mrb[0].mxu0
      %v4599 = vadd.f32 %v4054, %v4598
      %v4600 = vpop.f32.mrb[0].mxu0
      %v4601 = vpop.f32.mrb[0].mxu0
      %v4602 = vadd.f32 %v4057, %v4601
      %v4603 = vpop.f32.mrb[0].mxu0
      %4604 = vmatprep.mubr.bf16.mxu0 %v2882
      %4605 = vmatmul.mubr.bf16.gmra.mrb[0].mxu0 %v2881
      %v4606 = vpop.f32.mrb[0].mxu0
      %v4607 = vadd.f32 %v4062, %v4606
      %v4608 = vpop.f32.mrb[0].mxu0
      %v4609 = vpop.f32.mrb[0].mxu0
      %v4610 = vadd.f32 %v4065, %v4609
      %v4611 = vpop.f32.mrb[0].mxu0
      %4612 = vmatprep.mubr.bf16.mxu0 %v2888
      %4613 = vmatmul.mubr.bf16.gmra.mrb[0].mxu0 %v2887
      %v4614 = vpop.f32.mrb[0].mxu0
      %v4615 = vadd.f32 %v4070, %v4614
      %v4616 = vpop.f32.mrb[0].mxu0
      %v4617 = vpop.f32.mrb[0].mxu0
      %v4618 = vadd.f32 %v4073, %v4617
      %v4619 = vpop.f32.mrb[0].mxu0
      %4620 = vmatprep.mubr.bf16.mxu0 %v2894
      %4621 = vmatmul.mubr.bf16.gmra.mrb[0].mxu0 %v2893
      %v4622 = vpop.f32.mrb[0].mxu0
      %v4623 = vadd.f32 %v4078, %v4622
      %v4624 = vpop.f32.mrb[0].mxu0
      %v4625 = vpop.f32.mrb[0].mxu0
      %v4626 = vadd.f32 %v4081, %v4625
      %v4627 = vpop.f32.mrb[0].mxu0
      %4628 = vmatprep.mubr.bf16.mxu0 %v2900
      %4629 = vmatmul.mubr.bf16.gmra.mrb[0].mxu0 %v2899
      %v4630 = vpop.f32.mrb[0].mxu0
      %v4631 = vadd.f32 %v4086, %v4630
      %v4632 = vpop.f32.mrb[0].mxu0
      %v4633 = vpop.f32.mrb[0].mxu0
      %v4634 = vadd.f32 %v4089, %v4633
      %v4635 = vpop.f32.mrb[0].mxu0
      %4636 = vmatprep.mubr.bf16.mxu0 %v2906
      %4637 = vmatmul.mubr.bf16.gmra.mrb[0].mxu0 %v2905
      %v4638 = vpop.f32.mrb[0].mxu0
      %v4639 = vadd.f32 %v4094, %v4638
      %v4640 = vpop.f32.mrb[0].mxu0
      %v4641 = vpop.f32.mrb[0].mxu0
      %v4642 = vadd.f32 %v4097, %v4641
      %v4643 = vpop.f32.mrb[0].mxu0
      %4644 = vmatprep.mubr.bf16.mxu0 %v2912
      %4645 = vmatmul.mubr.bf16.gmra.mrb[0].mxu0 %v2911
      %v4646 = vpop.f32.mrb[0].mxu0
      %v4647 = vadd.f32 %v4102, %v4646
      %v4648 = vpop.f32.mrb[0].mxu0
      %v4649 = vpop.f32.mrb[0].mxu0
      %v4650 = vadd.f32 %v4105, %v4649
      %v4651 = vpop.f32.mrb[0].mxu0
      %4652 = vmatprep.mubr.bf16.mxu0 %v2918
      %4653 = vmatmul.mubr.bf16.gmra.mrb[0].mxu0 %v2917
      %v4654 = vpop.f32.mrb[0].mxu0
      %v4655 = vadd.f32 %v4110, %v4654
      %v4656 = vpop.f32.mrb[0].mxu0
      %v4657 = vpop.f32.mrb[0].mxu0
      %v4658 = vadd.f32 %v4113, %v4657
      %v4659 = vpop.f32.mrb[0].mxu0
      %4660 = vmatprep.mubr.bf16.mxu0 %v2924
      %4661 = vmatmul.mubr.bf16.gmra.mrb[0].mxu0 %v2923
      %v4662 = vpop.f32.mrb[0].mxu0
      %v4663 = vadd.f32 %v4118, %v4662
      %v4664 = vpop.f32.mrb[0].mxu0
      %v4665 = vpop.f32.mrb[0].mxu0
      %v4666 = vadd.f32 %v4121, %v4665
      %v4667 = vpop.f32.mrb[0].mxu0
      %4668 = vmatprep.mubr.bf16.mxu0 %v2930
      %4669 = vmatmul.mubr.bf16.gmra.mrb[0].mxu0 %v2929
      %v4670 = vpop.f32.mrb[0].mxu0
      %v4671 = vadd.f32 %v4126, %v4670
      %v4672 = vpop.f32.mrb[0].mxu0
      %v4673 = vpop.f32.mrb[0].mxu0
      %v4674 = vadd.f32 %v4129, %v4673
      %v4675 = vpop.f32.mrb[0].mxu0
      %4676 = vmatprep.mubr.bf16.mxu0 %v2936
      %4677 = vmatmul.mubr.bf16.gmra.mrb[0].mxu0 %v2935
      %v4678 = vpop.f32.mrb[0].mxu0
      %v4679 = vadd.f32 %v4134, %v4678
      %v4680 = vpop.f32.mrb[0].mxu0
      %v4681 = vpop.f32.mrb[0].mxu0
      %v4682 = vadd.f32 %v4137, %v4681
      %v4683 = vpop.f32.mrb[0].mxu0
      %4684 = vmatprep.mubr.bf16.mxu0 %v2942
      %4685 = vmatmul.mubr.bf16.gmra.mrb[0].mxu0 %v2941
      %v4686 = vpop.f32.mrb[0].mxu0
      %v4687 = vadd.f32 %v4142, %v4686
      %v4688 = vpop.f32.mrb[0].mxu0
      %v4689 = vpop.f32.mrb[0].mxu0
      %v4690 = vadd.f32 %v4145, %v4689
      %v4691 = vpop.f32.mrb[0].mxu0
      %4692 = vmatprep.mubr.bf16.mxu0 %v2948
      %4693 = vmatmul.mubr.bf16.gmra.mrb[0].mxu0 %v2947
      %v4694 = vpop.f32.mrb[0].mxu0
      %v4695 = vadd.f32 %v4150, %v4694
      %v4696 = vpop.f32.mrb[0].mxu0
      %v4697 = vpop.f32.mrb[0].mxu0
      %v4698 = vadd.f32 %v4153, %v4697
      %v4699 = vpop.f32.mrb[0].mxu0
      %4700 = vmatprep.mubr.bf16.mxu0 %v2954
      %4701 = vmatmul.mubr.bf16.gmra.mrb[0].mxu0 %v2953
      %v4702 = vpop.f32.mrb[0].mxu0
      %v4703 = vadd.f32 %v4158, %v4702
      %v4704 = vpop.f32.mrb[0].mxu0
      %v4705 = vpop.f32.mrb[0].mxu0
      %v4706 = vadd.f32 %v4161, %v4705
      %v4707 = vpop.f32.mrb[0].mxu0
      %4708 = vmatprep.mubr.bf16.mxu0 %v2960
      %4709 = vmatmul.mubr.bf16.gmra.mrb[0].mxu0 %v2959
      %v4710 = vpop.f32.mrb[0].mxu0
      %v4711 = vadd.f32 %v4166, %v4710
      %v4712 = vpop.f32.mrb[0].mxu0
      %v4713 = vpop.f32.mrb[0].mxu0
      %v4714 = vadd.f32 %v4169, %v4713
      %v4715 = vpop.f32.mrb[0].mxu0
      %4716 = vmatprep.mubr.bf16.mxu0 %v2966
      %4717 = vmatmul.mubr.bf16.gmra.mrb[0].mxu0 %v2965
      %v4718 = vpop.f32.mrb[0].mxu0
      %v4719 = vadd.f32 %v4174, %v4718
      %v4720 = vpop.f32.mrb[0].mxu0
      %v4721 = vpop.f32.mrb[0].mxu0
      %v4722 = vadd.f32 %v4177, %v4721
      %v4723 = vpop.f32.mrb[0].mxu0
      %4724 = vmatprep.mubr.bf16.mxu0 %v2972
      %4725 = vmatmul.mubr.bf16.gmra.mrb[0].mxu0 %v2971
      %v4726 = vpop.f32.mrb[0].mxu0
      %v4727 = vadd.f32 %v4182, %v4726
      %v4728 = vpop.f32.mrb[0].mxu0
      %v4729 = vpop.f32.mrb[0].mxu0
      %v4730 = vadd.f32 %v4185, %v4729
      %v4731 = vpop.f32.mrb[0].mxu0
      %4732 = vmatprep.mubr.bf16.mxu0 %v2978
      %4733 = vmatmul.mubr.bf16.gmra.mrb[0].mxu0 %v2977
      %v4734 = vpop.f32.mrb[0].mxu0
      %v4735 = vadd.f32 %v4190, %v4734
      %v4736 = vpop.f32.mrb[0].mxu0
      %v4737 = vpop.f32.mrb[0].mxu0
      %v4738 = vadd.f32 %v4193, %v4737
      %v4739 = vpop.f32.mrb[0].mxu0
      %4740 = vmatprep.mubr.bf16.mxu0 %v2984
      %4741 = vmatmul.mubr.bf16.gmra.mrb[0].mxu0 %v2983
      %v4742 = vpop.f32.mrb[0].mxu0
      %v4743 = vadd.f32 %v4198, %v4742
      %v4744 = vpop.f32.mrb[0].mxu0
      %v4745 = vpop.f32.mrb[0].mxu0
      %v4746 = vadd.f32 %v4201, %v4745
      %v4747 = vpop.f32.mrb[0].mxu0
      %4748 = vdwg.mxu0
      %4749 = vmatprep.subr.bf16.mxu0 0
      %4750 = vmatpush1.bf16.msra.mxu0 %v3595
      %4751 = vmatprep.subr.bf16.mxu0 0
      %4752 = vmatpush1.bf16.msra.mxu0 %v3596
      %4753 = vmatprep.subr.bf16.mxu0 0
      %4754 = vmatpush1.bf16.msra.mxu0 %v3597
      %4755 = vmatprep.subr.bf16.mxu0 0
      %4756 = vmatpush1.bf16.msra.mxu0 %v3598
      %4757 = vmatprep.subr.bf16.mxu0 0
      %4758 = vmatpush1.bf16.msra.mxu0 %v3599
      %4759 = vmatprep.subr.bf16.mxu0 0
      %4760 = vmatpush1.bf16.msra.mxu0 %v3600
      %4761 = vmatprep.subr.bf16.mxu0 0
      %4762 = vmatpush1.bf16.msra.mxu0 %v3601
      %4763 = vmatprep.subr.bf16.mxu0 0
      %4764 = vmatpush1.bf16.msra.mxu0 %v3602
      %4765 = vmatprep.subr.bf16.mxu0 0
      %4766 = vmatpush1.bf16.msra.mxu0 %v3603
      %4767 = vmatprep.subr.bf16.mxu0 0
      %4768 = vmatpush1.bf16.msra.mxu0 %v3604
      %4769 = vmatprep.subr.bf16.mxu0 0
      %4770 = vmatpush1.bf16.msra.mxu0 %v3605
      %4771 = vmatprep.subr.bf16.mxu0 0
      %4772 = vmatpush1.bf16.msra.mxu0 %v3606
      %4773 = vmatprep.subr.bf16.mxu0 0
      %4774 = vmatpush1.bf16.msra.mxu0 %v3607
      %4775 = vmatprep.subr.bf16.mxu0 0
      %4776 = vmatpush1.bf16.msra.mxu0 %v3608
      %4777 = vmatprep.subr.bf16.mxu0 0
      %4778 = vmatpush1.bf16.msra.mxu0 %v3609
      %4779 = vmatprep.subr.bf16.mxu0 0
      %4780 = vmatpush1.bf16.msra.mxu0 %v3610
      %4781 = vmatprep.mubr.bf16.mxu0 %v2608
      %4782 = vmatmul.mubr.bf16.gmra.mrb[0].mxu0 %v2607
      %v4783 = vpop.f32.mrb[0].mxu0
      %v4784 = vadd.f32 %v4239, %v4783
      %v4785 = vpop.f32.mrb[0].mxu0
      %v4786 = vpop.f32.mrb[0].mxu0
      %v4787 = vadd.f32 %v4242, %v4786
      %v4788 = vpop.f32.mrb[0].mxu0
      %4789 = vmatprep.mubr.bf16.mxu0 %v2614
      %4790 = vmatmul.mubr.bf16.gmra.mrb[0].mxu0 %v2613
      %v4791 = vpop.f32.mrb[0].mxu0
      %v4792 = vadd.f32 %v4247, %v4791
      %v4793 = vpop.f32.mrb[0].mxu0
      %v4794 = vpop.f32.mrb[0].mxu0
      %v4795 = vadd.f32 %v4250, %v4794
      %v4796 = vpop.f32.mrb[0].mxu0
      %4797 = vmatprep.mubr.bf16.mxu0 %v2620
      %4798 = vmatmul.mubr.bf16.gmra.mrb[0].mxu0 %v2619
      %v4799 = vpop.f32.mrb[0].mxu0
      %v4800 = vadd.f32 %v4255, %v4799
      %v4801 = vpop.f32.mrb[0].mxu0
      %v4802 = vpop.f32.mrb[0].mxu0
      %v4803 = vadd.f32 %v4258, %v4802
      %v4804 = vpop.f32.mrb[0].mxu0
      %4805 = vmatprep.mubr.bf16.mxu0 %v2626
      %4806 = vmatmul.mubr.bf16.gmra.mrb[0].mxu0 %v2625
      %v4807 = vpop.f32.mrb[0].mxu0
      %v4808 = vadd.f32 %v4263, %v4807
      %v4809 = vpop.f32.mrb[0].mxu0
      %v4810 = vpop.f32.mrb[0].mxu0
      %v4811 = vadd.f32 %v4266, %v4810
      %v4812 = vpop.f32.mrb[0].mxu0
      %4813 = vmatprep.mubr.bf16.mxu0 %v2632
      %4814 = vmatmul.mubr.bf16.gmra.mrb[0].mxu0 %v2631
      %v4815 = vpop.f32.mrb[0].mxu0
      %v4816 = vadd.f32 %v4271, %v4815
      %v4817 = vpop.f32.mrb[0].mxu0
      %v4818 = vpop.f32.mrb[0].mxu0
      %v4819 = vadd.f32 %v4274, %v4818
      %v4820 = vpop.f32.mrb[0].mxu0
      %4821 = vmatprep.mubr.bf16.mxu0 %v2638
      %4822 = vmatmul.mubr.bf16.gmra.mrb[0].mxu0 %v2637
      %v4823 = vpop.f32.mrb[0].mxu0
      %v4824 = vadd.f32 %v4279, %v4823
      %v4825 = vpop.f32.mrb[0].mxu0
      %v4826 = vpop.f32.mrb[0].mxu0
      %v4827 = vadd.f32 %v4282, %v4826
      %v4828 = vpop.f32.mrb[0].mxu0
      %4829 = vmatprep.mubr.bf16.mxu0 %v2644
      %4830 = vmatmul.mubr.bf16.gmra.mrb[0].mxu0 %v2643
      %v4831 = vpop.f32.mrb[0].mxu0
      %v4832 = vadd.f32 %v4287, %v4831
      %v4833 = vpop.f32.mrb[0].mxu0
      %v4834 = vpop.f32.mrb[0].mxu0
      %v4835 = vadd.f32 %v4290, %v4834
      %v4836 = vpop.f32.mrb[0].mxu0
      %4837 = vmatprep.mubr.bf16.mxu0 %v2650
      %4838 = vmatmul.mubr.bf16.gmra.mrb[0].mxu0 %v2649
      %v4839 = vpop.f32.mrb[0].mxu0
      %v4840 = vadd.f32 %v4295, %v4839
      %v4841 = vpop.f32.mrb[0].mxu0
      %v4842 = vpop.f32.mrb[0].mxu0
      %v4843 = vadd.f32 %v4298, %v4842
      %v4844 = vpop.f32.mrb[0].mxu0
      %4845 = vmatprep.mubr.bf16.mxu0 %v2656
      %4846 = vmatmul.mubr.bf16.gmra.mrb[0].mxu0 %v2655
      %v4847 = vpop.f32.mrb[0].mxu0
      %v4848 = vadd.f32 %v4303, %v4847
      %v4849 = vpop.f32.mrb[0].mxu0
      %v4850 = vpop.f32.mrb[0].mxu0
      %v4851 = vadd.f32 %v4306, %v4850
      %v4852 = vpop.f32.mrb[0].mxu0
      %4853 = vmatprep.mubr.bf16.mxu0 %v2662
      %4854 = vmatmul.mubr.bf16.gmra.mrb[0].mxu0 %v2661
      %v4855 = vpop.f32.mrb[0].mxu0
      %v4856 = vadd.f32 %v4311, %v4855
      %v4857 = vpop.f32.mrb[0].mxu0
      %v4858 = vpop.f32.mrb[0].mxu0
      %v4859 = vadd.f32 %v4314, %v4858
      %v4860 = vpop.f32.mrb[0].mxu0
      %4861 = vmatprep.mubr.bf16.mxu0 %v2668
      %4862 = vmatmul.mubr.bf16.gmra.mrb[0].mxu0 %v2667
      %v4863 = vpop.f32.mrb[0].mxu0
      %v4864 = vadd.f32 %v4319, %v4863
      %v4865 = vpop.f32.mrb[0].mxu0
      %v4866 = vpop.f32.mrb[0].mxu0
      %v4867 = vadd.f32 %v4322, %v4866
      %v4868 = vpop.f32.mrb[0].mxu0
      %4869 = vmatprep.mubr.bf16.mxu0 %v2674
      %4870 = vmatmul.mubr.bf16.gmra.mrb[0].mxu0 %v2673
      %v4871 = vpop.f32.mrb[0].mxu0
      %v4872 = vadd.f32 %v4327, %v4871
      %v4873 = vpop.f32.mrb[0].mxu0
      %v4874 = vpop.f32.mrb[0].mxu0
      %v4875 = vadd.f32 %v4330, %v4874
      %v4876 = vpop.f32.mrb[0].mxu0
      %4877 = vmatprep.mubr.bf16.mxu0 %v2680
      %4878 = vmatmul.mubr.bf16.gmra.mrb[0].mxu0 %v2679
      %v4879 = vpop.f32.mrb[0].mxu0
      %v4880 = vadd.f32 %v4335, %v4879
      %v4881 = vpop.f32.mrb[0].mxu0
      %v4882 = vpop.f32.mrb[0].mxu0
      %v4883 = vadd.f32 %v4338, %v4882
      %v4884 = vpop.f32.mrb[0].mxu0
      %4885 = vmatprep.mubr.bf16.mxu0 %v2686
      %4886 = vmatmul.mubr.bf16.gmra.mrb[0].mxu0 %v2685
      %v4887 = vpop.f32.mrb[0].mxu0
      %v4888 = vadd.f32 %v4343, %v4887
      %v4889 = vpop.f32.mrb[0].mxu0
      %v4890 = vpop.f32.mrb[0].mxu0
      %v4891 = vadd.f32 %v4346, %v4890
      %v4892 = vpop.f32.mrb[0].mxu0
      %4893 = vmatprep.mubr.bf16.mxu0 %v2692
      %4894 = vmatmul.mubr.bf16.gmra.mrb[0].mxu0 %v2691
      %v4895 = vpop.f32.mrb[0].mxu0
      %v4896 = vadd.f32 %v4351, %v4895
      %v4897 = vpop.f32.mrb[0].mxu0
      %v4898 = vpop.f32.mrb[0].mxu0
      %v4899 = vadd.f32 %v4354, %v4898
      %v4900 = vpop.f32.mrb[0].mxu0
      %4901 = vmatprep.mubr.bf16.mxu0 %v2698
      %4902 = vmatmul.mubr.bf16.gmra.mrb[0].mxu0 %v2697
      %v4903 = vpop.f32.mrb[0].mxu0
      %v4904 = vadd.f32 %v4359, %v4903
      %v4905 = vpop.f32.mrb[0].mxu0
      %v4906 = vpop.f32.mrb[0].mxu0
      %v4907 = vadd.f32 %v4362, %v4906
      %v4908 = vpop.f32.mrb[0].mxu0
      %4909 = vmatprep.mubr.bf16.mxu0 %v2704
      %4910 = vmatmul.mubr.bf16.gmra.mrb[0].mxu0 %v2703
      %v4911 = vpop.f32.mrb[0].mxu0
      %v4912 = vadd.f32 %v4367, %v4911
      %v4913 = vpop.f32.mrb[0].mxu0
      %v4914 = vpop.f32.mrb[0].mxu0
      %v4915 = vadd.f32 %v4370, %v4914
      %v4916 = vpop.f32.mrb[0].mxu0
      %4917 = vmatprep.mubr.bf16.mxu0 %v2710
      %4918 = vmatmul.mubr.bf16.gmra.mrb[0].mxu0 %v2709
      %v4919 = vpop.f32.mrb[0].mxu0
      %v4920 = vadd.f32 %v4375, %v4919
      %v4921 = vpop.f32.mrb[0].mxu0
      %v4922 = vpop.f32.mrb[0].mxu0
      %v4923 = vadd.f32 %v4378, %v4922
      %v4924 = vpop.f32.mrb[0].mxu0
      %4925 = vmatprep.mubr.bf16.mxu0 %v2716
      %4926 = vmatmul.mubr.bf16.gmra.mrb[0].mxu0 %v2715
      %v4927 = vpop.f32.mrb[0].mxu0
      %v4928 = vadd.f32 %v4383, %v4927
      %v4929 = vpop.f32.mrb[0].mxu0
      %v4930 = vpop.f32.mrb[0].mxu0
      %v4931 = vadd.f32 %v4386, %v4930
      %v4932 = vpop.f32.mrb[0].mxu0
      %4933 = vmatprep.mubr.bf16.mxu0 %v2722
      %4934 = vmatmul.mubr.bf16.gmra.mrb[0].mxu0 %v2721
      %v4935 = vpop.f32.mrb[0].mxu0
      %v4936 = vadd.f32 %v4391, %v4935
      %v4937 = vpop.f32.mrb[0].mxu0
      %v4938 = vpop.f32.mrb[0].mxu0
      %v4939 = vadd.f32 %v4394, %v4938
      %v4940 = vpop.f32.mrb[0].mxu0
      %4941 = vmatprep.mubr.bf16.mxu0 %v2728
      %4942 = vmatmul.mubr.bf16.gmra.mrb[0].mxu0 %v2727
      %v4943 = vpop.f32.mrb[0].mxu0
      %v4944 = vadd.f32 %v4399, %v4943
      %v4945 = vpop.f32.mrb[0].mxu0
      %v4946 = vpop.f32.mrb[0].mxu0
      %v4947 = vadd.f32 %v4402, %v4946
      %v4948 = vpop.f32.mrb[0].mxu0
      %4949 = vmatprep.mubr.bf16.mxu0 %v2734
      %4950 = vmatmul.mubr.bf16.gmra.mrb[0].mxu0 %v2733
      %v4951 = vpop.f32.mrb[0].mxu0
      %v4952 = vadd.f32 %v4407, %v4951
      %v4953 = vpop.f32.mrb[0].mxu0
      %v4954 = vpop.f32.mrb[0].mxu0
      %v4955 = vadd.f32 %v4410, %v4954
      %v4956 = vpop.f32.mrb[0].mxu0
      %4957 = vmatprep.mubr.bf16.mxu0 %v2740
      %4958 = vmatmul.mubr.bf16.gmra.mrb[0].mxu0 %v2739
      %v4959 = vpop.f32.mrb[0].mxu0
      %v4960 = vadd.f32 %v4415, %v4959
      %v4961 = vpop.f32.mrb[0].mxu0
      %v4962 = vpop.f32.mrb[0].mxu0
      %v4963 = vadd.f32 %v4418, %v4962
      %v4964 = vpop.f32.mrb[0].mxu0
      %4965 = vmatprep.mubr.bf16.mxu0 %v2746
      %4966 = vmatmul.mubr.bf16.gmra.mrb[0].mxu0 %v2745
      %v4967 = vpop.f32.mrb[0].mxu0
      %v4968 = vadd.f32 %v4423, %v4967
      %v4969 = vpop.f32.mrb[0].mxu0
      %v4970 = vpop.f32.mrb[0].mxu0
      %v4971 = vadd.f32 %v4426, %v4970
      %v4972 = vpop.f32.mrb[0].mxu0
      %4973 = vmatprep.mubr.bf16.mxu0 %v2752
      %4974 = vmatmul.mubr.bf16.gmra.mrb[0].mxu0 %v2751
      %v4975 = vpop.f32.mrb[0].mxu0
      %v4976 = vadd.f32 %v4431, %v4975
      %v4977 = vpop.f32.mrb[0].mxu0
      %v4978 = vpop.f32.mrb[0].mxu0
      %v4979 = vadd.f32 %v4434, %v4978
      %v4980 = vpop.f32.mrb[0].mxu0
      %4981 = vmatprep.mubr.bf16.mxu0 %v2758
      %4982 = vmatmul.mubr.bf16.gmra.mrb[0].mxu0 %v2757
      %v4983 = vpop.f32.mrb[0].mxu0
      %v4984 = vadd.f32 %v4439, %v4983
      %v4985 = vpop.f32.mrb[0].mxu0
      %v4986 = vpop.f32.mrb[0].mxu0
      %v4987 = vadd.f32 %v4442, %v4986
      %v4988 = vpop.f32.mrb[0].mxu0
      %4989 = vmatprep.mubr.bf16.mxu0 %v2764
      %4990 = vmatmul.mubr.bf16.gmra.mrb[0].mxu0 %v2763
      %v4991 = vpop.f32.mrb[0].mxu0
      %v4992 = vadd.f32 %v4447, %v4991
      %v4993 = vpop.f32.mrb[0].mxu0
      %v4994 = vpop.f32.mrb[0].mxu0
      %v4995 = vadd.f32 %v4450, %v4994
      %v4996 = vpop.f32.mrb[0].mxu0
      %4997 = vmatprep.mubr.bf16.mxu0 %v2770
      %4998 = vmatmul.mubr.bf16.gmra.mrb[0].mxu0 %v2769
      %v4999 = vpop.f32.mrb[0].mxu0
      %v5000 = vadd.f32 %v4455, %v4999
      %v5001 = vpop.f32.mrb[0].mxu0
      %v5002 = vpop.f32.mrb[0].mxu0
      %v5003 = vadd.f32 %v4458, %v5002
      %v5004 = vpop.f32.mrb[0].mxu0
      %5005 = vmatprep.mubr.bf16.mxu0 %v2776
      %5006 = vmatmul.mubr.bf16.gmra.mrb[0].mxu0 %v2775
      %v5007 = vpop.f32.mrb[0].mxu0
      %v5008 = vadd.f32 %v4463, %v5007
      %v5009 = vpop.f32.mrb[0].mxu0
      %v5010 = vpop.f32.mrb[0].mxu0
      %v5011 = vadd.f32 %v4466, %v5010
      %v5012 = vpop.f32.mrb[0].mxu0
      %5013 = vmatprep.mubr.bf16.mxu0 %v2782
      %5014 = vmatmul.mubr.bf16.gmra.mrb[0].mxu0 %v2781
      %v5015 = vpop.f32.mrb[0].mxu0
      %v5016 = vadd.f32 %v4471, %v5015
      %v5017 = vpop.f32.mrb[0].mxu0
      %v5018 = vpop.f32.mrb[0].mxu0
      %v5019 = vadd.f32 %v4474, %v5018
      %v5020 = vpop.f32.mrb[0].mxu0
      %5021 = vmatprep.mubr.bf16.mxu0 %v2788
      %5022 = vmatmul.mubr.bf16.gmra.mrb[0].mxu0 %v2787
      %v5023 = vpop.f32.mrb[0].mxu0
      %v5024 = vadd.f32 %v4479, %v5023
      %v5025 = vpop.f32.mrb[0].mxu0
      %v5026 = vpop.f32.mrb[0].mxu0
      %v5027 = vadd.f32 %v4482, %v5026
      %v5028 = vpop.f32.mrb[0].mxu0
      %5029 = vmatprep.mubr.bf16.mxu0 %v2794
      %5030 = vmatmul.mubr.bf16.gmra.mrb[0].mxu0 %v2793
      %v5031 = vpop.f32.mrb[0].mxu0
      %v5032 = vadd.f32 %v4487, %v5031
      %v5033 = vpop.f32.mrb[0].mxu0
      %v5034 = vpop.f32.mrb[0].mxu0
      %v5035 = vadd.f32 %v4490, %v5034
      %v5036 = vpop.f32.mrb[0].mxu0
      %5037 = vmatprep.mubr.bf16.mxu0 %v2800
      %5038 = vmatmul.mubr.bf16.gmra.mrb[0].mxu0 %v2799
      %v5039 = vpop.f32.mrb[0].mxu0
      %v5040 = vadd.f32 %v4495, %v5039
      %v5041 = vpop.f32.mrb[0].mxu0
      %v5042 = vpop.f32.mrb[0].mxu0
      %v5043 = vadd.f32 %v4498, %v5042
      %v5044 = vpop.f32.mrb[0].mxu0
      %5045 = vmatprep.mubr.bf16.mxu0 %v2806
      %5046 = vmatmul.mubr.bf16.gmra.mrb[0].mxu0 %v2805
      %v5047 = vpop.f32.mrb[0].mxu0
      %v5048 = vadd.f32 %v4503, %v5047
      %v5049 = vpop.f32.mrb[0].mxu0
      %v5050 = vpop.f32.mrb[0].mxu0
      %v5051 = vadd.f32 %v4506, %v5050
      %v5052 = vpop.f32.mrb[0].mxu0
      %5053 = vmatprep.mubr.bf16.mxu0 %v2812
      %5054 = vmatmul.mubr.bf16.gmra.mrb[0].mxu0 %v2811
      %v5055 = vpop.f32.mrb[0].mxu0
      %v5056 = vadd.f32 %v4511, %v5055
      %v5057 = vpop.f32.mrb[0].mxu0
      %v5058 = vpop.f32.mrb[0].mxu0
      %v5059 = vadd.f32 %v4514, %v5058
      %v5060 = vpop.f32.mrb[0].mxu0
      %5061 = vmatprep.mubr.bf16.mxu0 %v2818
      %5062 = vmatmul.mubr.bf16.gmra.mrb[0].mxu0 %v2817
      %v5063 = vpop.f32.mrb[0].mxu0
      %v5064 = vadd.f32 %v4519, %v5063
      %v5065 = vpop.f32.mrb[0].mxu0
      %v5066 = vpop.f32.mrb[0].mxu0
      %v5067 = vadd.f32 %v4522, %v5066
      %v5068 = vpop.f32.mrb[0].mxu0
      %5069 = vmatprep.mubr.bf16.mxu0 %v2824
      %5070 = vmatmul.mubr.bf16.gmra.mrb[0].mxu0 %v2823
      %v5071 = vpop.f32.mrb[0].mxu0
      %v5072 = vadd.f32 %v4527, %v5071
      %v5073 = vpop.f32.mrb[0].mxu0
      %v5074 = vpop.f32.mrb[0].mxu0
      %v5075 = vadd.f32 %v4530, %v5074
      %v5076 = vpop.f32.mrb[0].mxu0
      %5077 = vmatprep.mubr.bf16.mxu0 %v2830
      %5078 = vmatmul.mubr.bf16.gmra.mrb[0].mxu0 %v2829
      %v5079 = vpop.f32.mrb[0].mxu0
      %v5080 = vadd.f32 %v4535, %v5079
      %v5081 = vpop.f32.mrb[0].mxu0
      %v5082 = vpop.f32.mrb[0].mxu0
      %v5083 = vadd.f32 %v4538, %v5082
      %v5084 = vpop.f32.mrb[0].mxu0
      %5085 = vmatprep.mubr.bf16.mxu0 %v2836
      %5086 = vmatmul.mubr.bf16.gmra.mrb[0].mxu0 %v2835
      %v5087 = vpop.f32.mrb[0].mxu0
      %v5088 = vadd.f32 %v4543, %v5087
      %v5089 = vpop.f32.mrb[0].mxu0
      %v5090 = vpop.f32.mrb[0].mxu0
      %v5091 = vadd.f32 %v4546, %v5090
      %v5092 = vpop.f32.mrb[0].mxu0
      %5093 = vmatprep.mubr.bf16.mxu0 %v2842
      %5094 = vmatmul.mubr.bf16.gmra.mrb[0].mxu0 %v2841
      %v5095 = vpop.f32.mrb[0].mxu0
      %v5096 = vadd.f32 %v4551, %v5095
      %v5097 = vpop.f32.mrb[0].mxu0
      %v5098 = vpop.f32.mrb[0].mxu0
      %v5099 = vadd.f32 %v4554, %v5098
      %v5100 = vpop.f32.mrb[0].mxu0
      %5101 = vmatprep.mubr.bf16.mxu0 %v2848
      %5102 = vmatmul.mubr.bf16.gmra.mrb[0].mxu0 %v2847
      %v5103 = vpop.f32.mrb[0].mxu0
      %v5104 = vadd.f32 %v4559, %v5103
      %v5105 = vpop.f32.mrb[0].mxu0
      %v5106 = vpop.f32.mrb[0].mxu0
      %v5107 = vadd.f32 %v4562, %v5106
      %v5108 = vpop.f32.mrb[0].mxu0
      %5109 = vmatprep.mubr.bf16.mxu0 %v2854
      %5110 = vmatmul.mubr.bf16.gmra.mrb[0].mxu0 %v2853
      %v5111 = vpop.f32.mrb[0].mxu0
      %v5112 = vadd.f32 %v4567, %v5111
      %v5113 = vpop.f32.mrb[0].mxu0
      %v5114 = vpop.f32.mrb[0].mxu0
      %v5115 = vadd.f32 %v4570, %v5114
      %v5116 = vpop.f32.mrb[0].mxu0
      %5117 = vmatprep.mubr.bf16.mxu0 %v2860
      %5118 = vmatmul.mubr.bf16.gmra.mrb[0].mxu0 %v2859
      %v5119 = vpop.f32.mrb[0].mxu0
      %v5120 = vadd.f32 %v4575, %v5119
      %v5121 = vpop.f32.mrb[0].mxu0
      %v5122 = vpop.f32.mrb[0].mxu0
      %v5123 = vadd.f32 %v4578, %v5122
      %v5124 = vpop.f32.mrb[0].mxu0
      %5125 = vmatprep.mubr.bf16.mxu0 %v2866
      %5126 = vmatmul.mubr.bf16.gmra.mrb[0].mxu0 %v2865
      %v5127 = vpop.f32.mrb[0].mxu0
      %v5128 = vadd.f32 %v4583, %v5127
      %v5129 = vpop.f32.mrb[0].mxu0
      %v5130 = vpop.f32.mrb[0].mxu0
      %v5131 = vadd.f32 %v4586, %v5130
      %v5132 = vpop.f32.mrb[0].mxu0
      %5133 = vmatprep.mubr.bf16.mxu0 %v2872
      %5134 = vmatmul.mubr.bf16.gmra.mrb[0].mxu0 %v2871
      %v5135 = vpop.f32.mrb[0].mxu0
      %v5136 = vadd.f32 %v4591, %v5135
      %v5137 = vpop.f32.mrb[0].mxu0
      %v5138 = vpop.f32.mrb[0].mxu0
      %v5139 = vadd.f32 %v4594, %v5138
      %v5140 = vpop.f32.mrb[0].mxu0
      %5141 = vmatprep.mubr.bf16.mxu0 %v2878
      %5142 = vmatmul.mubr.bf16.gmra.mrb[0].mxu0 %v2877
      %v5143 = vpop.f32.mrb[0].mxu0
      %v5144 = vadd.f32 %v4599, %v5143
      %v5145 = vpop.f32.mrb[0].mxu0
      %v5146 = vpop.f32.mrb[0].mxu0
      %v5147 = vadd.f32 %v4602, %v5146
      %v5148 = vpop.f32.mrb[0].mxu0
      %5149 = vmatprep.mubr.bf16.mxu0 %v2884
      %5150 = vmatmul.mubr.bf16.gmra.mrb[0].mxu0 %v2883
      %v5151 = vpop.f32.mrb[0].mxu0
      %v5152 = vadd.f32 %v4607, %v5151
      %v5153 = vpop.f32.mrb[0].mxu0
      %v5154 = vpop.f32.mrb[0].mxu0
      %v5155 = vadd.f32 %v4610, %v5154
      %v5156 = vpop.f32.mrb[0].mxu0
      %5157 = vmatprep.mubr.bf16.mxu0 %v2890
      %5158 = vmatmul.mubr.bf16.gmra.mrb[0].mxu0 %v2889
      %v5159 = vpop.f32.mrb[0].mxu0
      %v5160 = vadd.f32 %v4615, %v5159
      %v5161 = vpop.f32.mrb[0].mxu0
      %v5162 = vpop.f32.mrb[0].mxu0
      %v5163 = vadd.f32 %v4618, %v5162
      %v5164 = vpop.f32.mrb[0].mxu0
      %5165 = vmatprep.mubr.bf16.mxu0 %v2896
      %5166 = vmatmul.mubr.bf16.gmra.mrb[0].mxu0 %v2895
      %v5167 = vpop.f32.mrb[0].mxu0
      %v5168 = vadd.f32 %v4623, %v5167
      %v5169 = vpop.f32.mrb[0].mxu0
      %v5170 = vpop.f32.mrb[0].mxu0
      %v5171 = vadd.f32 %v4626, %v5170
      %v5172 = vpop.f32.mrb[0].mxu0
      %5173 = vmatprep.mubr.bf16.mxu0 %v2902
      %5174 = vmatmul.mubr.bf16.gmra.mrb[0].mxu0 %v2901
      %v5175 = vpop.f32.mrb[0].mxu0
      %v5176 = vadd.f32 %v4631, %v5175
      %v5177 = vpop.f32.mrb[0].mxu0
      %v5178 = vpop.f32.mrb[0].mxu0
      %v5179 = vadd.f32 %v4634, %v5178
      %v5180 = vpop.f32.mrb[0].mxu0
      %5181 = vmatprep.mubr.bf16.mxu0 %v2908
      %5182 = vmatmul.mubr.bf16.gmra.mrb[0].mxu0 %v2907
      %v5183 = vpop.f32.mrb[0].mxu0
      %v5184 = vadd.f32 %v4639, %v5183
      %v5185 = vpop.f32.mrb[0].mxu0
      %v5186 = vpop.f32.mrb[0].mxu0
      %v5187 = vadd.f32 %v4642, %v5186
      %v5188 = vpop.f32.mrb[0].mxu0
      %5189 = vmatprep.mubr.bf16.mxu0 %v2914
      %5190 = vmatmul.mubr.bf16.gmra.mrb[0].mxu0 %v2913
      %v5191 = vpop.f32.mrb[0].mxu0
      %v5192 = vadd.f32 %v4647, %v5191
      %v5193 = vpop.f32.mrb[0].mxu0
      %v5194 = vpop.f32.mrb[0].mxu0
      %v5195 = vadd.f32 %v4650, %v5194
      %v5196 = vpop.f32.mrb[0].mxu0
      %5197 = vmatprep.mubr.bf16.mxu0 %v2920
      %5198 = vmatmul.mubr.bf16.gmra.mrb[0].mxu0 %v2919
      %v5199 = vpop.f32.mrb[0].mxu0
      %v5200 = vadd.f32 %v4655, %v5199
      %v5201 = vpop.f32.mrb[0].mxu0
      %v5202 = vpop.f32.mrb[0].mxu0
      %v5203 = vadd.f32 %v4658, %v5202
      %v5204 = vpop.f32.mrb[0].mxu0
      %5205 = vmatprep.mubr.bf16.mxu0 %v2926
      %5206 = vmatmul.mubr.bf16.gmra.mrb[0].mxu0 %v2925
      %v5207 = vpop.f32.mrb[0].mxu0
      %v5208 = vadd.f32 %v4663, %v5207
      %v5209 = vpop.f32.mrb[0].mxu0
      %v5210 = vpop.f32.mrb[0].mxu0
      %v5211 = vadd.f32 %v4666, %v5210
      %v5212 = vpop.f32.mrb[0].mxu0
      %5213 = vmatprep.mubr.bf16.mxu0 %v2932
      %5214 = vmatmul.mubr.bf16.gmra.mrb[0].mxu0 %v2931
      %v5215 = vpop.f32.mrb[0].mxu0
      %v5216 = vadd.f32 %v4671, %v5215
      %v5217 = vpop.f32.mrb[0].mxu0
      %v5218 = vpop.f32.mrb[0].mxu0
      %v5219 = vadd.f32 %v4674, %v5218
      %v5220 = vpop.f32.mrb[0].mxu0
      %5221 = vmatprep.mubr.bf16.mxu0 %v2938
      %5222 = vmatmul.mubr.bf16.gmra.mrb[0].mxu0 %v2937
      %v5223 = vpop.f32.mrb[0].mxu0
      %v5224 = vadd.f32 %v4679, %v5223
      %v5225 = vpop.f32.mrb[0].mxu0
      %v5226 = vpop.f32.mrb[0].mxu0
      %v5227 = vadd.f32 %v4682, %v5226
      %v5228 = vpop.f32.mrb[0].mxu0
      %5229 = vmatprep.mubr.bf16.mxu0 %v2944
      %5230 = vmatmul.mubr.bf16.gmra.mrb[0].mxu0 %v2943
      %v5231 = vpop.f32.mrb[0].mxu0
      %v5232 = vadd.f32 %v4687, %v5231
      %v5233 = vpop.f32.mrb[0].mxu0
      %v5234 = vpop.f32.mrb[0].mxu0
      %v5235 = vadd.f32 %v4690, %v5234
      %v5236 = vpop.f32.mrb[0].mxu0
      %5237 = vmatprep.mubr.bf16.mxu0 %v2950
      %5238 = vmatmul.mubr.bf16.gmra.mrb[0].mxu0 %v2949
      %v5239 = vpop.f32.mrb[0].mxu0
      %v5240 = vadd.f32 %v4695, %v5239
      %v5241 = vpop.f32.mrb[0].mxu0
      %v5242 = vpop.f32.mrb[0].mxu0
      %v5243 = vadd.f32 %v4698, %v5242
      %v5244 = vpop.f32.mrb[0].mxu0
      %5245 = vmatprep.mubr.bf16.mxu0 %v2956
      %5246 = vmatmul.mubr.bf16.gmra.mrb[0].mxu0 %v2955
      %v5247 = vpop.f32.mrb[0].mxu0
      %v5248 = vadd.f32 %v4703, %v5247
      %v5249 = vpop.f32.mrb[0].mxu0
      %v5250 = vpop.f32.mrb[0].mxu0
      %v5251 = vadd.f32 %v4706, %v5250
      %v5252 = vpop.f32.mrb[0].mxu0
      %5253 = vmatprep.mubr.bf16.mxu0 %v2962
      %5254 = vmatmul.mubr.bf16.gmra.mrb[0].mxu0 %v2961
      %v5255 = vpop.f32.mrb[0].mxu0
      %v5256 = vadd.f32 %v4711, %v5255
      %v5257 = vpop.f32.mrb[0].mxu0
      %v5258 = vpop.f32.mrb[0].mxu0
      %v5259 = vadd.f32 %v4714, %v5258
      %v5260 = vpop.f32.mrb[0].mxu0
      %5261 = vmatprep.mubr.bf16.mxu0 %v2968
      %5262 = vmatmul.mubr.bf16.gmra.mrb[0].mxu0 %v2967
      %v5263 = vpop.f32.mrb[0].mxu0
      %v5264 = vadd.f32 %v4719, %v5263
      %v5265 = vpop.f32.mrb[0].mxu0
      %v5266 = vpop.f32.mrb[0].mxu0
      %v5267 = vadd.f32 %v4722, %v5266
      %v5268 = vpop.f32.mrb[0].mxu0
      %5269 = vmatprep.mubr.bf16.mxu0 %v2974
      %5270 = vmatmul.mubr.bf16.gmra.mrb[0].mxu0 %v2973
      %v5271 = vpop.f32.mrb[0].mxu0
      %v5272 = vadd.f32 %v4727, %v5271
      %v5273 = vpop.f32.mrb[0].mxu0
      %v5274 = vpop.f32.mrb[0].mxu0
      %v5275 = vadd.f32 %v4730, %v5274
      %v5276 = vpop.f32.mrb[0].mxu0
      %5277 = vmatprep.mubr.bf16.mxu0 %v2980
      %5278 = vmatmul.mubr.bf16.gmra.mrb[0].mxu0 %v2979
      %v5279 = vpop.f32.mrb[0].mxu0
      %v5280 = vadd.f32 %v4735, %v5279
      %v5281 = vpop.f32.mrb[0].mxu0
      %v5282 = vpop.f32.mrb[0].mxu0
      %v5283 = vadd.f32 %v4738, %v5282
      %v5284 = vpop.f32.mrb[0].mxu0
      %5285 = vmatprep.mubr.bf16.mxu0 %v2986
      %5286 = vmatmul.mubr.bf16.gmra.mrb[0].mxu0 %v2985
      %v5287 = vpop.f32.mrb[0].mxu0
      %v5288 = vadd.f32 %v4743, %v5287
      %v5289 = vpop.f32.mrb[0].mxu0
      %v5290 = vpop.f32.mrb[0].mxu0
      %v5291 = vadd.f32 %v4746, %v5290
      %v5292 = vpop.f32.mrb[0].mxu0
      %5293 = vdwg.mxu0
      %vm5294 = vcmask 31744
      %5295 = vst.msk [vmem:[%s201] sm:$0xff] %vm5294, %v4784
      %5296 = vst.msk [vmem:[%s201 + $0x8] sm:$0xff] %vm5294, %v4787
      %5297 = vst.msk [vmem:[%s201 + $0x10] sm:$0xff] %vm5294, %v4792
      %5298 = vst.msk [vmem:[%s201 + $0x18] sm:$0xff] %vm5294, %v4795
      %5299 = vst.msk [vmem:[%s201 + $0x20] sm:$0xff] %vm5294, %v4800
      %5300 = vst.msk [vmem:[%s201 + $0x28] sm:$0xff] %vm5294, %v4803
      %5301 = vst.msk [vmem:[%s201 + $0x30] sm:$0xff] %vm5294, %v4808
      %5302 = vst.msk [vmem:[%s201 + $0x38] sm:$0xff] %vm5294, %v4811
      %5303 = vst.msk [vmem:[%s201 + $0x40] sm:$0xff] %vm5294, %v4816
      %5304 = vst.msk [vmem:[%s201 + $0x48] sm:$0xff] %vm5294, %v4819
      %5305 = vst.msk [vmem:[%s201 + $0x50] sm:$0xff] %vm5294, %v4824
      %5306 = vst.msk [vmem:[%s201 + $0x58] sm:$0xff] %vm5294, %v4827
      %5307 = vst.msk [vmem:[%s201 + $0x60] sm:$0xff] %vm5294, %v4832
      %5308 = vst.msk [vmem:[%s201 + $0x68] sm:$0xff] %vm5294, %v4835
      %5309 = vst.msk [vmem:[%s201 + $0x70] sm:$0xff] %vm5294, %v4840
      %5310 = vst.msk [vmem:[%s201 + $0x78] sm:$0xff] %vm5294, %v4843
      %5311 = vst.msk [vmem:[%s201 + $0x80] sm:$0xff] %vm5294, %v4848
      %5312 = vst.msk [vmem:[%s201 + $0x88] sm:$0xff] %vm5294, %v4851
      %5313 = vst.msk [vmem:[%s201 + $0x90] sm:$0xff] %vm5294, %v4856
      %5314 = vst.msk [vmem:[%s201 + $0x98] sm:$0xff] %vm5294, %v4859
      %5315 = vst.msk [vmem:[%s201 + $0xa0] sm:$0xff] %vm5294, %v4864
      %5316 = vst.msk [vmem:[%s201 + $0xa8] sm:$0xff] %vm5294, %v4867
      %5317 = vst.msk [vmem:[%s201 + $0xb0] sm:$0xff] %vm5294, %v4872
      %5318 = vst.msk [vmem:[%s201 + $0xb8] sm:$0xff] %vm5294, %v4875
      %5319 = vst.msk [vmem:[%s201 + $0xc0] sm:$0xff] %vm5294, %v4880
      %5320 = vst.msk [vmem:[%s201 + $0xc8] sm:$0xff] %vm5294, %v4883
      %5321 = vst.msk [vmem:[%s201 + $0xd0] sm:$0xff] %vm5294, %v4888
      %5322 = vst.msk [vmem:[%s201 + $0xd8] sm:$0xff] %vm5294, %v4891
      %5323 = vst.msk [vmem:[%s201 + $0xe0] sm:$0xff] %vm5294, %v4896
      %5324 = vst.msk [vmem:[%s201 + $0xe8] sm:$0xff] %vm5294, %v4899
      %5325 = vst.msk [vmem:[%s201 + $0xf0] sm:$0xff] %vm5294, %v4904
      %5326 = vst.msk [vmem:[%s201 + $0xf8] sm:$0xff] %vm5294, %v4907
      %5327 = vst.msk [vmem:[%s201 + $0x100] sm:$0xff] %vm5294, %v4912
      %5328 = vst.msk [vmem:[%s201 + $0x108] sm:$0xff] %vm5294, %v4915
      %5329 = vst.msk [vmem:[%s201 + $0x110] sm:$0xff] %vm5294, %v4920
      %5330 = vst.msk [vmem:[%s201 + $0x118] sm:$0xff] %vm5294, %v4923
      %5331 = vst.msk [vmem:[%s201 + $0x120] sm:$0xff] %vm5294, %v4928
      %5332 = vst.msk [vmem:[%s201 + $0x128] sm:$0xff] %vm5294, %v4931
      %5333 = vst.msk [vmem:[%s201 + $0x130] sm:$0xff] %vm5294, %v4936
      %5334 = vst.msk [vmem:[%s201 + $0x138] sm:$0xff] %vm5294, %v4939
      %5335 = vst.msk [vmem:[%s201 + $0x140] sm:$0xff] %vm5294, %v4944
      %5336 = vst.msk [vmem:[%s201 + $0x148] sm:$0xff] %vm5294, %v4947
      %5337 = vst.msk [vmem:[%s201 + $0x150] sm:$0xff] %vm5294, %v4952
      %5338 = vst.msk [vmem:[%s201 + $0x158] sm:$0xff] %vm5294, %v4955
      %5339 = vst.msk [vmem:[%s201 + $0x160] sm:$0xff] %vm5294, %v4960
      %5340 = vst.msk [vmem:[%s201 + $0x168] sm:$0xff] %vm5294, %v4963
      %5341 = vst.msk [vmem:[%s201 + $0x170] sm:$0xff] %vm5294, %v4968
      %5342 = vst.msk [vmem:[%s201 + $0x178] sm:$0xff] %vm5294, %v4971
      %5343 = vst.msk [vmem:[%s201 + $0x180] sm:$0xff] %vm5294, %v4976
      %5344 = vst.msk [vmem:[%s201 + $0x188] sm:$0xff] %vm5294, %v4979
      %5345 = vst.msk [vmem:[%s201 + $0x190] sm:$0xff] %vm5294, %v4984
      %5346 = vst.msk [vmem:[%s201 + $0x198] sm:$0xff] %vm5294, %v4987
      %5347 = vst.msk [vmem:[%s201 + $0x1a0] sm:$0xff] %vm5294, %v4992
      %5348 = vst.msk [vmem:[%s201 + $0x1a8] sm:$0xff] %vm5294, %v4995
      %5349 = vst.msk [vmem:[%s201 + $0x1b0] sm:$0xff] %vm5294, %v5000
      %5350 = vst.msk [vmem:[%s201 + $0x1b8] sm:$0xff] %vm5294, %v5003
      %5351 = vst.msk [vmem:[%s201 + $0x1c0] sm:$0xff] %vm5294, %v5008
      %5352 = vst.msk [vmem:[%s201 + $0x1c8] sm:$0xff] %vm5294, %v5011
      %5353 = vst.msk [vmem:[%s201 + $0x1d0] sm:$0xff] %vm5294, %v5016
      %5354 = vst.msk [vmem:[%s201 + $0x1d8] sm:$0xff] %vm5294, %v5019
      %5355 = vst.msk [vmem:[%s201 + $0x1e0] sm:$0xff] %vm5294, %v5024
      %5356 = vst.msk [vmem:[%s201 + $0x1e8] sm:$0xff] %vm5294, %v5027
      %5357 = vst.msk [vmem:[%s201 + $0x1f0] sm:$0xff] %vm5294, %v5032
      %5358 = vst.msk [vmem:[%s201 + $0x1f8] sm:$0xff] %vm5294, %v5035
      %5359 = vst.msk [vmem:[%s201 + $0x200] sm:$0xff] %vm5294, %v5040
      %5360 = vst.msk [vmem:[%s201 + $0x208] sm:$0xff] %vm5294, %v5043
      %5361 = vst.msk [vmem:[%s201 + $0x210] sm:$0xff] %vm5294, %v5048
      %5362 = vst.msk [vmem:[%s201 + $0x218] sm:$0xff] %vm5294, %v5051
      %5363 = vst.msk [vmem:[%s201 + $0x220] sm:$0xff] %vm5294, %v5056
      %5364 = vst.msk [vmem:[%s201 + $0x228] sm:$0xff] %vm5294, %v5059
      %5365 = vst.msk [vmem:[%s201 + $0x230] sm:$0xff] %vm5294, %v5064
      %5366 = vst.msk [vmem:[%s201 + $0x238] sm:$0xff] %vm5294, %v5067
      %5367 = vst.msk [vmem:[%s201 + $0x240] sm:$0xff] %vm5294, %v5072
      %5368 = vst.msk [vmem:[%s201 + $0x248] sm:$0xff] %vm5294, %v5075
      %5369 = vst.msk [vmem:[%s201 + $0x250] sm:$0xff] %vm5294, %v5080
      %5370 = vst.msk [vmem:[%s201 + $0x258] sm:$0xff] %vm5294, %v5083
      %5371 = vst.msk [vmem:[%s201 + $0x260] sm:$0xff] %vm5294, %v5088
      %5372 = vst.msk [vmem:[%s201 + $0x268] sm:$0xff] %vm5294, %v5091
      %5373 = vst.msk [vmem:[%s201 + $0x270] sm:$0xff] %vm5294, %v5096
      %5374 = vst.msk [vmem:[%s201 + $0x278] sm:$0xff] %vm5294, %v5099
      %5375 = vst.msk [vmem:[%s201 + $0x280] sm:$0xff] %vm5294, %v5104
      %5376 = vst.msk [vmem:[%s201 + $0x288] sm:$0xff] %vm5294, %v5107
      %5377 = vst.msk [vmem:[%s201 + $0x290] sm:$0xff] %vm5294, %v5112
      %5378 = vst.msk [vmem:[%s201 + $0x298] sm:$0xff] %vm5294, %v5115
      %5379 = vst.msk [vmem:[%s201 + $0x2a0] sm:$0xff] %vm5294, %v5120
      %5380 = vst.msk [vmem:[%s201 + $0x2a8] sm:$0xff] %vm5294, %v5123
      %5381 = vst.msk [vmem:[%s201 + $0x2b0] sm:$0xff] %vm5294, %v5128
      %5382 = vst.msk [vmem:[%s201 + $0x2b8] sm:$0xff] %vm5294, %v5131
      %5383 = vst.msk [vmem:[%s201 + $0x2c0] sm:$0xff] %vm5294, %v5136
      %5384 = vst.msk [vmem:[%s201 + $0x2c8] sm:$0xff] %vm5294, %v5139
      %5385 = vst.msk [vmem:[%s201 + $0x2d0] sm:$0xff] %vm5294, %v5144
      %5386 = vst.msk [vmem:[%s201 + $0x2d8] sm:$0xff] %vm5294, %v5147
      %5387 = vst.msk [vmem:[%s201 + $0x2e0] sm:$0xff] %vm5294, %v5152
      %5388 = vst.msk [vmem:[%s201 + $0x2e8] sm:$0xff] %vm5294, %v5155
      %5389 = vst.msk [vmem:[%s201 + $0x2f0] sm:$0xff] %vm5294, %v5160
      %5390 = vst.msk [vmem:[%s201 + $0x2f8] sm:$0xff] %vm5294, %v5163
      %5391 = vst.msk [vmem:[%s201 + $0x300] sm:$0xff] %vm5294, %v5168
      %5392 = vst.msk [vmem:[%s201 + $0x308] sm:$0xff] %vm5294, %v5171
      %5393 = vst.msk [vmem:[%s201 + $0x310] sm:$0xff] %vm5294, %v5176
      %5394 = vst.msk [vmem:[%s201 + $0x318] sm:$0xff] %vm5294, %v5179
      %5395 = vst.msk [vmem:[%s201 + $0x320] sm:$0xff] %vm5294, %v5184
      %5396 = vst.msk [vmem:[%s201 + $0x328] sm:$0xff] %vm5294, %v5187
      %5397 = vst.msk [vmem:[%s201 + $0x330] sm:$0xff] %vm5294, %v5192
      %5398 = vst.msk [vmem:[%s201 + $0x338] sm:$0xff] %vm5294, %v5195
      %5399 = vst.msk [vmem:[%s201 + $0x340] sm:$0xff] %vm5294, %v5200
      %5400 = vst.msk [vmem:[%s201 + $0x348] sm:$0xff] %vm5294, %v5203
      %5401 = vst.msk [vmem:[%s201 + $0x350] sm:$0xff] %vm5294, %v5208
      %5402 = vst.msk [vmem:[%s201 + $0x358] sm:$0xff] %vm5294, %v5211
      %5403 = vst.msk [vmem:[%s201 + $0x360] sm:$0xff] %vm5294, %v5216
      %5404 = vst.msk [vmem:[%s201 + $0x368] sm:$0xff] %vm5294, %v5219
      %5405 = vst.msk [vmem:[%s201 + $0x370] sm:$0xff] %vm5294, %v5224
      %5406 = vst.msk [vmem:[%s201 + $0x378] sm:$0xff] %vm5294, %v5227
      %5407 = vst.msk [vmem:[%s201 + $0x380] sm:$0xff] %vm5294, %v5232
      %5408 = vst.msk [vmem:[%s201 + $0x388] sm:$0xff] %vm5294, %v5235
      %5409 = vst.msk [vmem:[%s201 + $0x390] sm:$0xff] %vm5294, %v5240
      %5410 = vst.msk [vmem:[%s201 + $0x398] sm:$0xff] %vm5294, %v5243
      %5411 = vst.msk [vmem:[%s201 + $0x3a0] sm:$0xff] %vm5294, %v5248
      %5412 = vst.msk [vmem:[%s201 + $0x3a8] sm:$0xff] %vm5294, %v5251
      %5413 = vst.msk [vmem:[%s201 + $0x3b0] sm:$0xff] %vm5294, %v5256
      %5414 = vst.msk [vmem:[%s201 + $0x3b8] sm:$0xff] %vm5294, %v5259
      %5415 = vst.msk [vmem:[%s201 + $0x3c0] sm:$0xff] %vm5294, %v5264
      %5416 = vst.msk [vmem:[%s201 + $0x3c8] sm:$0xff] %vm5294, %v5267
      %5417 = vst.msk [vmem:[%s201 + $0x3d0] sm:$0xff] %vm5294, %v5272
      %5418 = vst.msk [vmem:[%s201 + $0x3d8] sm:$0xff] %vm5294, %v5275
      %5419 = vst.msk [vmem:[%s201 + $0x3e0] sm:$0xff] %vm5294, %v5280
      %5420 = vst.msk [vmem:[%s201 + $0x3e8] sm:$0xff] %vm5294, %v5283
      %5421 = vst.msk [vmem:[%s201 + $0x3f0] sm:$0xff] %vm5294, %v5288
      %5422 = vst.msk [vmem:[%s201 + $0x3f8] sm:$0xff] %vm5294, %v5291
      %p5423 = scmp.lt.s32.totalorder %s18, 1
      %s5424 = scalar_select %p5423, %s18, 1
      %p5425 = scmp.lt.s32.totalorder %s19, 0
      %s5426 = scalar_select %p5425, %s19, 0
      %s5427 = smul.addr %s5424, 128
      %s5428 = sadd.s32 %s5426, %s5427
      %s5429 = smul.addr %s5428, 8
      %s5430 = scalar_lea.vmem %s3, %s5429
      // Predicated region
      $region33: #{vit_l16_encoder_forward.1} parent=31 // pred_check
        %p5431 = pneg %p116
      $region34: #{vit_l16_encoder_forward.1} parent=31 // pred_check_branch
        %5433 = sbr.rel (%p5431) target = $region36
      $region35: #{vit_l16_encoder_forward.1} parent=31 // pred_region
        _
      $region36: #{vit_l16_encoder_forward.1} parent=31 // pred_fallthru
        _
    $region32: #{vit_l16_encoder_forward.1} parent=5 // pred_fallthru
      _
    %p5434 = scmp.le.s32.totalorder 2, %s9
    // Predicated region
    $region37: #{vit_l16_encoder_forward.1} parent=5 // pred_check
      %p5435 = pneg %p5434
    $region38: #{vit_l16_encoder_forward.1} parent=5 // pred_check_branch
      %5437 = sbr.rel (%p5435) target = $region40
    $region39: #{vit_l16_encoder_forward.1} parent=5 // pred_region
      %s5438 = ssub.s32 %s9, 2
      // Predicated region
      $region41: #{vit_l16_encoder_forward.1} parent=39 // pred_check
        %p5439 = pneg %p122
      $region42: #{vit_l16_encoder_forward.1} parent=39 // pred_check_branch
        %5441 = sbr.rel (%p5439) target = $region44
      $region43: #{vit_l16_encoder_forward.1} parent=39 // pred_region
        %p5442 = scmp.lt.s32.totalorder %s20, 1
        %s5443 = scalar_select %p5442, %s20, 1
        %p5444 = scmp.lt.s32.totalorder %s21, 0
        %s5445 = scalar_select %p5444, %s21, 0
        %s5446 = smul.addr %s5443, 128
        %s5447 = sadd.s32 %s5445, %s5446
        %s5448 = smul.addr %s5447, 8
        %s5449 = scalar_lea.vmem %s3, %s5448
      $region44: #{vit_l16_encoder_forward.1} parent=39 // pred_fallthru
        _
    $region40: #{vit_l16_encoder_forward.1} parent=5 // pred_fallthru
      _
  $region6: #{vit_l16_encoder_forward.1} parent=0 // loop_footer
    %s13 = sadd.s32 1, %s9
  $region7: #{vit_l16_encoder_forward.1} parent=0 // loop_footer_branch
    %8 = sbr.rel target = $region3
  $region8: #{vit_l16_encoder_forward.1} parent=0 // loop_exit
    _

</llo_original>
